<compile_context>
chip_gen: v7x
topology: tpu7x:2x2x1
jax: 0.10.0
libtpu: 0.0.40
codegen_flags: <defaults>
</compile_context>

<pallas_src>
import functools

import jax
import jax.numpy as jnp
from jax.experimental import pallas as pl
from jax.experimental.pallas import tpu as pltpu

ALPHA = 0.2        # leaky-relu slope
BN_EPS = 1e-5
IMAGE_SIZE = 32    # fixed by the module (label embedding reshapes to 32x32)


# ------------------------------ Pallas kernels -------------------------------

def _mm_bias_leaky_kernel(p_ref, w_ref, b_ref, o_ref):
    """bf16 matmul (f32 acc) + bias + LeakyReLU; one lane-dense M tile per step."""
    y = jnp.dot(p_ref[...], w_ref[...], preferred_element_type=jnp.float32)
    y = y + b_ref[...]
    o_ref[...] = jnp.where(y > 0, y, ALPHA * y).astype(o_ref.dtype)


def _conv_bn_leaky_kernel(p_ref, w_ref, g_ref, b_ref, o_ref,
                          y_ref, sum_ref, ssq_ref, *, tm, inv_m):
    """Fused conv (im2col matmul) + training-mode BatchNorm + LeakyReLU.

    The grid walks M tiles ('arbitrary').  Pre-BN f32 y lives in a VMEM scratch
    (never hits HBM); per-channel sum/sumsq accumulate in (1, N) scratches; the
    last step normalizes out of VMEM and writes the bf16 activation once into a
    resident output block.
    """
    i = pl.program_id(0)
    n = pl.num_programs(0)

    y = jnp.dot(p_ref[...], w_ref[...], preferred_element_type=jnp.float32)
    r0 = pl.multiple_of(i * tm, 8)
    y_ref[pl.ds(r0, tm), :] = y

    @pl.when(i == 0)
    def _():
        sum_ref[...] = jnp.zeros_like(sum_ref)
        ssq_ref[...] = jnp.zeros_like(ssq_ref)

    sum_ref[...] += jnp.sum(y, axis=0, keepdims=True)
    ssq_ref[...] += jnp.sum(y * y, axis=0, keepdims=True)

    @pl.when(i == n - 1)
    def _():
        mean = sum_ref[...] * inv_m
        var = jnp.maximum(ssq_ref[...] * inv_m - mean * mean, 0.0)
        scale = jax.lax.rsqrt(var + BN_EPS) * g_ref[...]
        shift = b_ref[...] - mean * scale

        def body(t, carry):
            rt = pl.multiple_of(t * tm, 8)
            z = y_ref[pl.ds(rt, tm), :] * scale + shift
            z = jnp.where(z > 0, z, ALPHA * z)
            o_ref[pl.ds(rt, tm), :] = z.astype(o_ref.dtype)
            return carry

        jax.lax.fori_loop(0, n, body, 0)


def _conv_bn_final_kernel(p_ref, w_ref, g_ref, b_ref, w4_ref, b4_ref, o_ref,
                          y_ref, sum_ref, ssq_ref, *, tm, inv_m, batch, spatial):
    """Fused conv3 + BatchNorm + LeakyReLU + conv4 (4x4 -> 1 channel) + sigmoid.

    Patch rows are ordered (ho, wo, b), so the conv4 contraction over the 4x4
    receptive field is `spatial` static contiguous row-slices of the resident
    VMEM activation (VPU multiply + lane reduce).  Only (B, 1) logits leave VMEM.
    """
    i = pl.program_id(0)
    n = pl.num_programs(0)

    y = jnp.dot(p_ref[...], w_ref[...], preferred_element_type=jnp.float32)
    r0 = pl.multiple_of(i * tm, 8)
    y_ref[pl.ds(r0, tm), :] = y

    @pl.when(i == 0)
    def _():
        sum_ref[...] = jnp.zeros_like(sum_ref)
        ssq_ref[...] = jnp.zeros_like(ssq_ref)

    sum_ref[...] += jnp.sum(y, axis=0, keepdims=True)
    ssq_ref[...] += jnp.sum(y * y, axis=0, keepdims=True)

    @pl.when(i == n - 1)
    def _():
        mean = sum_ref[...] * inv_m
        var = jnp.maximum(ssq_ref[...] * inv_m - mean * mean, 0.0)
        scale = jax.lax.rsqrt(var + BN_EPS) * g_ref[...]
        shift = b_ref[...] - mean * scale

        acc = jnp.zeros((batch, w4_ref.shape[1]), jnp.float32)
        for p in range(spatial):                        # static 16-iteration loop
            zp = y_ref[p * batch:(p + 1) * batch, :] * scale + shift
            zp = jnp.where(zp > 0, zp, ALPHA * zp)      # conv3 LeakyReLU
            acc = acc + zp * w4_ref[p:p + 1, :]         # conv4 partial product
        logits = jnp.sum(acc, axis=1, keepdims=True) + b4_ref[...]
        o_ref[...] = jax.nn.sigmoid(logits)


# ------------------------------- JAX glue ------------------------------------

def _pick_tm(m, target=512):
    """Largest divisor of m <= target (and <= m//2 once m >= 1024 so the grid has
    >= 2 steps), preferring multiples of 16 (bf16 sublane packing)."""
    if m % 8 != 0 or m <= 8:
        return m
    limit = min(m, target)
    if m >= 1024:
        limit = min(limit, m // 2)
    c16 = [d for d in range(16, limit + 1, 16) if m % d == 0]
    if c16:
        return c16[-1]
    c8 = [d for d in range(8, limit + 1, 8) if m % d == 0]
    return c8[-1] if c8 else m


def im2col_nhwc(x, k, stride, pad, *, batch_minor=False):
    """x: (B, H, W, C) -> patches (rows, k*k*C) with per-row layout (kh, kw, C).
    Rows ordered (b, ho, wo), or (ho, wo, b) if batch_minor=True."""
    B, H, W, C = x.shape
    if pad > 0:
        x = jnp.pad(x, ((0, 0), (pad, pad), (pad, pad), (0, 0)))
    Ho = (H + 2 * pad - k) // stride + 1
    Wo = (W + 2 * pad - k) // stride + 1
    cols = []
    for i in range(k):
        for j in range(k):
            cols.append(x[:, i:i + stride * Ho:stride, j:j + stride * Wo:stride, :])
    p = jnp.stack(cols, axis=3)                    # (B, Ho, Wo, k*k, C)
    if batch_minor:
        p = jnp.transpose(p, (1, 2, 0, 3, 4))      # (Ho, Wo, B, k*k, C)
    return p.reshape(-1, k * k * C), Ho, Wo


def _weight_to_matrix(w):
    """(Cout, Cin, kh, kw) -> (kh*kw*Cin, Cout) bf16, matching im2col row layout."""
    Cout, Cin, kh, kw = w.shape
    return jnp.transpose(w, (2, 3, 1, 0)).reshape(kh * kw * Cin, Cout).astype(jnp.bfloat16)


def conv1_leaky(x, w, bias, *, stride=2, pad=1, pack=2):
    """Spectral-norm conv1 + LeakyReLU.  Lane-packs `pack` adjacent output columns per
    matmul row (block-diagonal weight): lane-dense stores and 2x MXU occupancy."""
    B = x.shape[0]
    Cout, _, kh, _ = w.shape
    patches, Ho, Wo = im2col_nhwc(x, kh, stride, pad)          # (B*Ho*Wo, K) bf16
    M, K = patches.shape
    if Wo % pack != 0:
        pack = 1
    wm = _weight_to_matrix(w)                                  # (K, Cout)
    if pack > 1:
        z = jnp.zeros_like(wm)
        w_mat = jnp.concatenate(
            [jnp.concatenate([wm if c == r else z for c in range(pack)], axis=1)
             for r in range(pack)], axis=0)                    # (pack*K, pack*Cout)
    else:
        w_mat = wm
    b_row = jnp.tile(bias.reshape(1, Cout).astype(jnp.float32), (1, pack))
    p_packed = patches.reshape(M // pack, pack * K)
    Mp, Kp = p_packed.shape
    Np = pack * Cout
    tm = _pick_tm(Mp)
    y = pl.pallas_call(
        _mm_bias_leaky_kernel,
        out_shape=jax.ShapeDtypeStruct((Mp, Np), jnp.bfloat16),
        grid=(Mp // tm,),
        in_specs=[
            pl.BlockSpec((tm, Kp), lambda i: (i, 0)),
            pl.BlockSpec((Kp, Np), lambda i: (0, 0)),
            pl.BlockSpec((1, Np), lambda i: (0, 0)),
        ],
        out_specs=pl.BlockSpec((tm, Np), lambda i: (i, 0)),
        compiler_params=pltpu.CompilerParams(dimension_semantics=("parallel",)),
    )(p_packed, w_mat, b_row)
    return y.reshape(M, Cout).reshape(B, Ho, Wo, Cout)


def conv_bn_leaky(x, w, gamma, beta, *, stride=2, pad=1):
    """Conv (no bias) + training-mode BatchNorm + LeakyReLU as one fused kernel."""
    B = x.shape[0]
    Cout, _, kh, _ = w.shape
    patches, Ho, Wo = im2col_nhwc(x, kh, stride, pad)          # bf16
    w_t = _weight_to_matrix(w)
    M, K = patches.shape
    tm = _pick_tm(M)
    out = pl.pallas_call(
        functools.partial(_conv_bn_leaky_kernel, tm=tm, inv_m=1.0 / M),
        out_shape=jax.ShapeDtypeStruct((M, Cout), jnp.bfloat16),
        grid=(M // tm,),
        in_specs=[
            pl.BlockSpec((tm, K), lambda i: (i, 0)),
            pl.BlockSpec((K, Cout), lambda i: (0, 0)),
            pl.BlockSpec((1, Cout), lambda i: (0, 0)),
            pl.BlockSpec((1, Cout), lambda i: (0, 0)),
        ],
        out_specs=pl.BlockSpec((M, Cout), lambda i: (0, 0)),   # resident, written once
        scratch_shapes=[pltpu.VMEM((M, Cout), jnp.float32),    # pre-BN y
                        pltpu.VMEM((1, Cout), jnp.float32),    # sum
                        pltpu.VMEM((1, Cout), jnp.float32)],   # sum of squares
        compiler_params=pltpu.CompilerParams(dimension_semantics=("arbitrary",)),
    )(patches, w_t,
      gamma.reshape(1, Cout).astype(jnp.float32),
      beta.reshape(1, Cout).astype(jnp.float32))
    return out.reshape(B, Ho, Wo, Cout)


def conv_bn_leaky_final(x, w, gamma, beta, w4, b4, *, stride=2, pad=1):
    """conv3 + BN + LeakyReLU fused with conv4 (4x4/s1/p0, N=1) + sigmoid."""
    B = x.shape[0]
    Cout, _, kh, _ = w.shape
    patches, Ho, Wo = im2col_nhwc(x, kh, stride, pad, batch_minor=True)  # rows (ho, wo, b)
    w_t = _weight_to_matrix(w)
    M, K = patches.shape
    spatial = Ho * Wo
    assert spatial == w4.shape[2] * w4.shape[3]        # conv4 window spans conv3's output
    # conv4 weight as (spatial, Cin) rows matching the (ho, wo) ordering of the patch rows.
    w4_row = jnp.transpose(w4, (0, 2, 3, 1)).reshape(spatial, Cout).astype(jnp.float32)
    tm = _pick_tm(M)
    out = pl.pallas_call(
        functools.partial(_conv_bn_final_kernel, tm=tm, inv_m=1.0 / M,
                          batch=B, spatial=spatial),
        out_shape=jax.ShapeDtypeStruct((B, 1), jnp.float32),
        grid=(M // tm,),
        in_specs=[
            pl.BlockSpec((tm, K), lambda i: (i, 0)),
            pl.BlockSpec((K, Cout), lambda i: (0, 0)),
            pl.BlockSpec((1, Cout), lambda i: (0, 0)),
            pl.BlockSpec((1, Cout), lambda i: (0, 0)),
            pl.BlockSpec((spatial, Cout), lambda i: (0, 0)),
            pl.BlockSpec((1, 1), lambda i: (0, 0)),
        ],
        out_specs=pl.BlockSpec((B, 1), lambda i: (0, 0)),
        scratch_shapes=[pltpu.VMEM((M, Cout), jnp.float32),
                        pltpu.VMEM((1, Cout), jnp.float32),
                        pltpu.VMEM((1, Cout), jnp.float32)],
        compiler_params=pltpu.CompilerParams(dimension_semantics=("arbitrary",)),
    )(patches, w_t,
      gamma.reshape(1, Cout).astype(jnp.float32),
      beta.reshape(1, Cout).astype(jnp.float32),
      w4_row, b4.reshape(1, 1).astype(jnp.float32))
    return out


def spectral_normalize(w, u, n_iters=1, eps=1e-12):
    """PyTorch-style spectral norm: n_iters power iterations from u, then w / sigma."""
    w_mat = w.reshape(w.shape[0], -1)
    v = None
    for _ in range(n_iters):
        v = w_mat.T @ u
        v = v / (jnp.linalg.norm(v) + eps)
        u = w_mat @ v
        u = u / (jnp.linalg.norm(u) + eps)
    sigma = u @ (w_mat @ v)
    return w / sigma


# --------------------------- parameters & forward ----------------------------

def init_params(key, n_classes=10, num_channels=3, conv_dim=64):
    ks = jax.random.split(key, 8)
    p = {}
    p["embed"] = jax.random.normal(ks[0], (n_classes, IMAGE_SIZE * IMAGE_SIZE), jnp.float32)
    # conv weights: nn.init.normal_(w, 0.0, 0.02)
    p["w1"] = 0.02 * jax.random.normal(ks[1], (conv_dim, num_channels + 1, 4, 4), jnp.float32)
    fan1 = (num_channels + 1) * 16
    p["b1"] = jax.random.uniform(ks[2], (conv_dim,), jnp.float32,
                                 minval=-1.0 / jnp.sqrt(fan1), maxval=1.0 / jnp.sqrt(fan1))
    u = jax.random.normal(ks[3], (conv_dim,), jnp.float32)
    p["u1"] = u / (jnp.linalg.norm(u) + 1e-12)               # spectral-norm u vector
    p["w2"] = 0.02 * jax.random.normal(ks[4], (conv_dim * 2, conv_dim, 4, 4), jnp.float32)
    p["w3"] = 0.02 * jax.random.normal(ks[5], (conv_dim * 4, conv_dim * 2, 4, 4), jnp.float32)
    p["w4"] = 0.02 * jax.random.normal(ks[6], (1, conv_dim * 4, 4, 4), jnp.float32)
    fan4 = conv_dim * 4 * 16
    p["b4"] = jax.random.uniform(ks[7], (1,), jnp.float32,
                                 minval=-1.0 / jnp.sqrt(fan4), maxval=1.0 / jnp.sqrt(fan4))
    # BatchNorm: weight=1, bias=0 (nn.init.constant_)
    p["g2"] = jnp.ones((conv_dim * 2,), jnp.float32)
    p["be2"] = jnp.zeros((conv_dim * 2,), jnp.float32)
    p["g3"] = jnp.ones((conv_dim * 4,), jnp.float32)
    p["be3"] = jnp.zeros((conv_dim * 4,), jnp.float32)
    return p


def discriminator_sn_forward(params, x, label):
    B = x.shape[0]
    # embedding lookup (gather) + concat: plain-JAX glue; NHWC from here on
    label_embed = jnp.take(params["embed"], label, axis=0)
    label_embed = label_embed.reshape(B, IMAGE_SIZE, IMAGE_SIZE, 1)
    x = jnp.transpose(x, (0, 2, 3, 1))                                    # NCHW -> NHWC once
    x = jnp.concatenate([x, label_embed], axis=-1).astype(jnp.bfloat16)   # (B, 32, 32, C+1)

    w1 = spectral_normalize(params["w1"], params["u1"])
    x = conv1_leaky(x, w1, params["b1"], stride=2, pad=1)                 # (B, 16, 16, 64)
    x = conv_bn_leaky(x, params["w2"], params["g2"], params["be2"],
                      stride=2, pad=1)                                    # (B, 8, 8, 128)
    out = conv_bn_leaky_final(x, params["w3"], params["g3"], params["be3"],
                              params["w4"], params["b4"], stride=2, pad=1)  # (B, 1)
    return jnp.squeeze(out)                                               # (B,)


if __name__ == "__main__":
    key = jax.random.PRNGKey(0)
    kx, kl, kp = jax.random.split(key, 3)
    B = 2
    x = jax.random.normal(kx, (B, 3, IMAGE_SIZE, IMAGE_SIZE), jnp.float32)
    label = jax.random.randint(kl, (B,), 0, 10)
    params = init_params(kp)

    out = jax.jit(discriminator_sn_forward)(params, x, label)
    out = jax.block_until_ready(out)
    assert out.shape == (B,), out.shape
    assert bool(jnp.all(jnp.isfinite(out)))
    print("KERNEL_OK")
</pallas_src>

<mosaic_0001>
module attributes {stable_mosaic.version = 11 : i64} {
  func.func @_mm_bias_leaky_kernel(%arg0: i32, %arg1: memref<256x128xbf16, #tpu.memory_space<vmem>>, %arg2: memref<128x128xbf16, #tpu.memory_space<vmem>>, %arg3: memref<1x128xf32, #tpu.memory_space<vmem>>, %arg4: memref<256x128xbf16, #tpu.memory_space<vmem>>) attributes {dimension_semantics = [#tpu.dimension_semantics<parallel>], iteration_bounds = array<i64: 1>, scalar_prefetch = 0 : i64, scratch_operands = 0 : i64, tpu.core_type = #tpu.core_type<tc>, window_params = [{transform_indices = @transform_0, window_bounds = array<i64: 256, 128>}, {pipeline_mode = #tpu.pipeline_mode<synchronous>, transform_indices = @transform_1, window_bounds = array<i64: 128, 128>}, {pipeline_mode = #tpu.pipeline_mode<synchronous>, transform_indices = @transform_2, window_bounds = array<i64: 1, 128>}, {transform_indices = @transform_3, window_bounds = array<i64: 256, 128>}]} {
    %c0 = arith.constant 0 : index
    %c0_0 = arith.constant 0 : index
    %0 = vector.load %arg1[%c0, %c0_0] : memref<256x128xbf16, #tpu.memory_space<vmem>>, vector<256x128xbf16>
    %c0_1 = arith.constant 0 : index
    %c0_2 = arith.constant 0 : index
    %1 = vector.load %arg2[%c0_1, %c0_2] : memref<128x128xbf16, #tpu.memory_space<vmem>>, vector<128x128xbf16>
    %cst = arith.constant dense<0.000000e+00> : vector<256x128xf32>
    %2 = tpu.matmul %0, %1, %cst {dimension_numbers = #tpu.dot_dimension_numbers<[1], [0], [0], [1], [0, 0, 1, 1], [], []>} : vector<256x128xbf16>, vector<128x128xbf16>, vector<256x128xf32> -> vector<256x128xf32>
    %c0_3 = arith.constant 0 : index
    %c0_4 = arith.constant 0 : index
    %3 = vector.load %arg3[%c0_3, %c0_4] : memref<1x128xf32, #tpu.memory_space<vmem>>, vector<1x128xf32>
    %4 = vector.broadcast %3 : vector<1x128xf32> to vector<256x128xf32>
    %5 = arith.addf %2, %4 : vector<256x128xf32>
    %cst_5 = arith.constant 0.000000e+00 : f32
    %6 = vector.broadcast %cst_5 : f32 to vector<256x128xf32>
    %7 = arith.cmpf ogt, %5, %6 : vector<256x128xf32>
    %cst_6 = arith.constant 2.000000e-01 : f32
    %8 = vector.broadcast %cst_6 : f32 to vector<256x128xf32>
    %9 = arith.mulf %8, %5 : vector<256x128xf32>
    %10 = arith.select %7, %5, %9 : vector<256x128xi1>, vector<256x128xf32>
    %11 = arith.truncf %10 : vector<256x128xf32> to vector<256x128xbf16>
    %c0_7 = arith.constant 0 : index
    %c0_8 = arith.constant 0 : index
    %12 = vector.load %arg4[%c0_7, %c0_8] : memref<256x128xbf16, #tpu.memory_space<vmem>>, vector<256x128xbf16>
    tpu.vector_store %arg4[%c0_7, %c0_8], %11 {strides = array<i32>} : memref<256x128xbf16, #tpu.memory_space<vmem>>, vector<256x128xbf16>,
    return
  }
  func.func @transform_0(%arg0: i32) -> (i32, i32) {
    %c0_i32 = arith.constant 0 : i32
    %c0_i32_0 = arith.constant 0 : i32
    return %arg0, %c0_i32 : i32, i32
  }
  func.func @transform_1(%arg0: i32) -> (i32, i32) {
    %c0_i32 = arith.constant 0 : i32
    %c0_i32_0 = arith.constant 0 : i32
    %c0_i32_1 = arith.constant 0 : i32
    return %c0_i32, %c0_i32_0 : i32, i32
  }
  func.func @transform_2(%arg0: i32) -> (i32, i32) {
    %c0_i32 = arith.constant 0 : i32
    %c0_i32_0 = arith.constant 0 : i32
    %c0_i32_1 = arith.constant 0 : i32
    return %c0_i32, %c0_i32_0 : i32, i32
  }
  func.func @transform_3(%arg0: i32) -> (i32, i32) {
    %c0_i32 = arith.constant 0 : i32
    %c0_i32_0 = arith.constant 0 : i32
    return %arg0, %c0_i32 : i32, i32
  }
}

module attributes {stable_mosaic.version = 11 : i64} {
  func.func @_conv_bn_leaky_kernel(%arg0: i32, %arg1: memref<128x1024xbf16, #tpu.memory_space<vmem>>, %arg2: memref<1024x128xbf16, #tpu.memory_space<vmem>>, %arg3: memref<1x128xf32, #tpu.memory_space<vmem>>, %arg4: memref<1x128xf32, #tpu.memory_space<vmem>>, %arg5: memref<128x128xbf16, #tpu.memory_space<vmem>>, %arg6: memref<128x128xf32, #tpu.memory_space<vmem>>, %arg7: memref<1x128xf32, #tpu.memory_space<vmem>>, %arg8: memref<1x128xf32, #tpu.memory_space<vmem>>) attributes {dimension_semantics = [#tpu.dimension_semantics<arbitrary>], iteration_bounds = array<i64: 1>, scalar_prefetch = 0 : i64, scratch_operands = 3 : i64, tpu.core_type = #tpu.core_type<tc>, window_params = [{transform_indices = @transform_0, window_bounds = array<i64: 128, 1024>}, {pipeline_mode = #tpu.pipeline_mode<synchronous>, transform_indices = @transform_1, window_bounds = array<i64: 1024, 128>}, {pipeline_mode = #tpu.pipeline_mode<synchronous>, transform_indices = @transform_2, window_bounds = array<i64: 1, 128>}, {pipeline_mode = #tpu.pipeline_mode<synchronous>, transform_indices = @transform_3, window_bounds = array<i64: 1, 128>}, {pipeline_mode = #tpu.pipeline_mode<synchronous>, transform_indices = @transform_4, window_bounds = array<i64: 128, 128>}]} {
    %c0 = arith.constant 0 : index
    %c0_0 = arith.constant 0 : index
    %0 = vector.load %arg1[%c0, %c0_0] : memref<128x1024xbf16, #tpu.memory_space<vmem>>, vector<128x1024xbf16>
    %c0_1 = arith.constant 0 : index
    %c0_2 = arith.constant 0 : index
    %1 = vector.load %arg2[%c0_1, %c0_2] : memref<1024x128xbf16, #tpu.memory_space<vmem>>, vector<1024x128xbf16>
    %cst = arith.constant dense<0.000000e+00> : vector<128x128xf32>
    %2 = tpu.matmul %0, %1, %cst {dimension_numbers = #tpu.dot_dimension_numbers<[1], [0], [0], [1], [0, 0, 1, 1], [], []>} : vector<128x1024xbf16>, vector<1024x128xbf16>, vector<128x128xf32> -> vector<128x128xf32>
    %c128_i32 = arith.constant 128 : i32
    %3 = arith.muli %arg0, %c128_i32 : i32
    %4 = tpu.assume_multiple %3, 8 : i32
    %5 = arith.index_cast %4 : i32 to index
    %c0_3 = arith.constant 0 : index
    %6 = vector.load %arg6[%5, %c0_3] : memref<128x128xf32, #tpu.memory_space<vmem>>, vector<128x128xf32>
    tpu.vector_store %arg6[%5, %c0_3], %2 {strides = array<i32>} : memref<128x128xf32, #tpu.memory_space<vmem>>, vector<128x128xf32>,
    %c0_i32 = arith.constant 0 : i32
    %7 = arith.cmpi eq, %arg0, %c0_i32 : i32
    %8 = arith.extui %7 : i1 to i32
    %c0_i32_4 = arith.constant 0 : i32
    %9 = arith.cmpi ne, %8, %c0_i32_4 : i32
    scf.if %9 {
      %cst_17 = arith.constant 0.000000e+00 : f32
      %24 = vector.broadcast %cst_17 : f32 to vector<1x128xf32>
      %c0_18 = arith.constant 0 : index
      %c0_19 = arith.constant 0 : index
      %25 = vector.load %arg7[%c0_18, %c0_19] : memref<1x128xf32, #tpu.memory_space<vmem>>, vector<1x128xf32>
      tpu.vector_store %arg7[%c0_18, %c0_19], %24 {strides = array<i32>} : memref<1x128xf32, #tpu.memory_space<vmem>>, vector<1x128xf32>,
      %cst_20 = arith.constant 0.000000e+00 : f32
      %26 = vector.broadcast %cst_20 : f32 to vector<1x128xf32>
      %c0_21 = arith.constant 0 : index
      %c0_22 = arith.constant 0 : index
      %27 = vector.load %arg8[%c0_21, %c0_22] : memref<1x128xf32, #tpu.memory_space<vmem>>, vector<1x128xf32>
      tpu.vector_store %arg8[%c0_21, %c0_22], %26 {strides = array<i32>} : memref<1x128xf32, #tpu.memory_space<vmem>>, vector<1x128xf32>,
    } else {
    }
    %c0_5 = arith.constant 0 : index
    %c0_6 = arith.constant 0 : index
    %10 = vector.load %arg7[%c0_5, %c0_6] : memref<1x128xf32, #tpu.memory_space<vmem>>, vector<1x128xf32>
    %cst_7 = arith.constant dense<0.000000e+00> : vector<128xf32>
    %11 = vector.multi_reduction <add>, %2, %cst_7 [0] : vector<128x128xf32> to vector<128xf32>
    %12 = vector.shape_cast %11 : vector<128xf32> to vector<1x128xf32>
    %13 = arith.addf %10, %12 : vector<1x128xf32>
    %c0_8 = arith.constant 0 : index
    %c0_9 = arith.constant 0 : index
    %14 = vector.load %arg7[%c0_8, %c0_9] : memref<1x128xf32, #tpu.memory_space<vmem>>, vector<1x128xf32>
    tpu.vector_store %arg7[%c0_8, %c0_9], %13 {strides = array<i32>} : memref<1x128xf32, #tpu.memory_space<vmem>>, vector<1x128xf32>,
    %c0_10 = arith.constant 0 : index
    %c0_11 = arith.constant 0 : index
    %15 = vector.load %arg8[%c0_10, %c0_11] : memref<1x128xf32, #tpu.memory_space<vmem>>, vector<1x128xf32>
    %16 = arith.mulf %2, %2 : vector<128x128xf32>
    %cst_12 = arith.constant dense<0.000000e+00> : vector<128xf32>
    %17 = vector.multi_reduction <add>, %16, %cst_12 [0] : vector<128x128xf32> to vector<128xf32>
    %18 = vector.shape_cast %17 : vector<128xf32> to vector<1x128xf32>
    %19 = arith.addf %15, %18 : vector<1x128xf32>
    %c0_13 = arith.constant 0 : index
    %c0_14 = arith.constant 0 : index
    %20 = vector.load %arg8[%c0_13, %c0_14] : memref<1x128xf32, #tpu.memory_space<vmem>>, vector<1x128xf32>
    tpu.vector_store %arg8[%c0_13, %c0_14], %19 {strides = array<i32>} : memref<1x128xf32, #tpu.memory_space<vmem>>, vector<1x128xf32>,
    %c0_i32_15 = arith.constant 0 : i32
    %21 = arith.cmpi eq, %arg0, %c0_i32_15 : i32
    %22 = arith.extui %21 : i1 to i32
    %c0_i32_16 = arith.constant 0 : i32
    %23 = arith.cmpi ne, %22, %c0_i32_16 : i32
    scf.if %23 {
      %c0_17 = arith.constant 0 : index
      %c0_18 = arith.constant 0 : index
      %24 = vector.load %arg7[%c0_17, %c0_18] : memref<1x128xf32, #tpu.memory_space<vmem>>, vector<1x128xf32>
      %cst_19 = arith.constant 7.812500e-03 : f32
      %25 = vector.broadcast %cst_19 : f32 to vector<1x128xf32>
      %26 = arith.mulf %24, %25 : vector<1x128xf32>
      %c0_20 = arith.constant 0 : index
      %c0_21 = arith.constant 0 : index
      %27 = vector.load %arg8[%c0_20, %c0_21] : memref<1x128xf32, #tpu.memory_space<vmem>>, vector<1x128xf32>
      %cst_22 = arith.constant 7.812500e-03 : f32
      %28 = vector.broadcast %cst_22 : f32 to vector<1x128xf32>
      %29 = arith.mulf %27, %28 : vector<1x128xf32>
      %30 = arith.mulf %26, %26 : vector<1x128xf32>
      %31 = arith.subf %29, %30 : vector<1x128xf32>
      %cst_23 = arith.constant 0.000000e+00 : f32
      %32 = vector.broadcast %cst_23 : f32 to vector<1x128xf32>
      %33 = arith.maximumf %31, %32 : vector<1x128xf32>
      %cst_24 = arith.constant 9.99999974E-6 : f32
      %34 = vector.broadcast %cst_24 : f32 to vector<1x128xf32>
      %35 = arith.addf %33, %34 : vector<1x128xf32>
      %36 = math.rsqrt %35 : vector<1x128xf32>
      %c0_25 = arith.constant 0 : index
      %c0_26 = arith.constant 0 : index
      %37 = vector.load %arg3[%c0_25, %c0_26] : memref<1x128xf32, #tpu.memory_space<vmem>>, vector<1x128xf32>
      %38 = arith.mulf %36, %37 : vector<1x128xf32>
      %c0_27 = arith.constant 0 : index
      %c0_28 = arith.constant 0 : index
      %39 = vector.load %arg4[%c0_27, %c0_28] : memref<1x128xf32, #tpu.memory_space<vmem>>, vector<1x128xf32>
      %40 = arith.mulf %26, %38 : vector<1x128xf32>
      %41 = arith.subf %39, %40 : vector<1x128xf32>
      %c0_i32_29 = arith.constant 0 : i32
      %c128_i32_30 = arith.constant 128 : i32
      %42 = arith.muli %c0_i32_29, %c128_i32_30 : i32
      %43 = tpu.assume_multiple %42, 8 : i32
      %44 = arith.index_cast %43 : i32 to index
      %c0_31 = arith.constant 0 : index
      %45 = vector.load %arg6[%44, %c0_31] : memref<128x128xf32, #tpu.memory_space<vmem>>, vector<128x128xf32>
      %46 = vector.broadcast %38 : vector<1x128xf32> to vector<128x128xf32>
      %47 = arith.mulf %45, %46 : vector<128x128xf32>
      %48 = vector.broadcast %41 : vector<1x128xf32> to vector<128x128xf32>
      %49 = arith.addf %47, %48 : vector<128x128xf32>
      %cst_32 = arith.constant 0.000000e+00 : f32
      %50 = vector.broadcast %cst_32 : f32 to vector<128x128xf32>
      %51 = arith.cmpf ogt, %49, %50 : vector<128x128xf32>
      %cst_33 = arith.constant 2.000000e-01 : f32
      %52 = vector.broadcast %cst_33 : f32 to vector<128x128xf32>
      %53 = arith.mulf %52, %49 : vector<128x128xf32>
      %54 = arith.select %51, %49, %53 : vector<128x128xi1>, vector<128x128xf32>
      %55 = arith.truncf %54 : vector<128x128xf32> to vector<128x128xbf16>
      %56 = arith.index_cast %43 : i32 to index
      %c0_34 = arith.constant 0 : index
      %57 = vector.load %arg5[%56, %c0_34] : memref<128x128xbf16, #tpu.memory_space<vmem>>, vector<128x128xbf16>
      tpu.vector_store %arg5[%56, %c0_34], %55 {strides = array<i32>} : memref<128x128xbf16, #tpu.memory_space<vmem>>, vector<128x128xbf16>,
      %c1_i32 = arith.constant 1 : i32
    } else {
    }
    return
  }
  func.func @transform_0(%arg0: i32) -> (i32, i32) {
    %c0_i32 = arith.constant 0 : i32
    %c0_i32_0 = arith.constant 0 : i32
    return %arg0, %c0_i32 : i32, i32
  }
  func.func @transform_1(%arg0: i32) -> (i32, i32) {
    %c0_i32 = arith.constant 0 : i32
    %c0_i32_0 = arith.constant 0 : i32
    %c0_i32_1 = arith.constant 0 : i32
    return %c0_i32, %c0_i32_0 : i32, i32
  }
  func.func @transform_2(%arg0: i32) -> (i32, i32) {
    %c0_i32 = arith.constant 0 : i32
    %c0_i32_0 = arith.constant 0 : i32
    %c0_i32_1 = arith.constant 0 : i32
    return %c0_i32, %c0_i32_0 : i32, i32
  }
  func.func @transform_3(%arg0: i32) -> (i32, i32) {
    %c0_i32 = arith.constant 0 : i32
    %c0_i32_0 = arith.constant 0 : i32
    %c0_i32_1 = arith.constant 0 : i32
    return %c0_i32, %c0_i32_0 : i32, i32
  }
  func.func @transform_4(%arg0: i32) -> (i32, i32) {
    %c0_i32 = arith.constant 0 : i32
    %c0_i32_0 = arith.constant 0 : i32
    %c0_i32_1 = arith.constant 0 : i32
    return %c0_i32, %c0_i32_0 : i32, i32
  }
}

module attributes {stable_mosaic.version = 11 : i64} {
  func.func @_conv_bn_final_kernel(%arg0: i32, %arg1: memref<32x2048xbf16, #tpu.memory_space<vmem>>, %arg2: memref<2048x256xbf16, #tpu.memory_space<vmem>>, %arg3: memref<1x256xf32, #tpu.memory_space<vmem>>, %arg4: memref<1x256xf32, #tpu.memory_space<vmem>>, %arg5: memref<16x256xf32, #tpu.memory_space<vmem>>, %arg6: memref<1x1xf32, #tpu.memory_space<vmem>>, %arg7: memref<2x1xf32, #tpu.memory_space<vmem>>, %arg8: memref<32x256xf32, #tpu.memory_space<vmem>>, %arg9: memref<1x256xf32, #tpu.memory_space<vmem>>, %arg10: memref<1x256xf32, #tpu.memory_space<vmem>>) attributes {dimension_semantics = [#tpu.dimension_semantics<arbitrary>], iteration_bounds = array<i64: 1>, scalar_prefetch = 0 : i64, scratch_operands = 3 : i64, tpu.core_type = #tpu.core_type<tc>, window_params = [{transform_indices = @transform_0, window_bounds = array<i64: 32, 2048>}, {pipeline_mode = #tpu.pipeline_mode<synchronous>, transform_indices = @transform_1, window_bounds = array<i64: 2048, 256>}, {pipeline_mode = #tpu.pipeline_mode<synchronous>, transform_indices = @transform_2, window_bounds = array<i64: 1, 256>}, {pipeline_mode = #tpu.pipeline_mode<synchronous>, transform_indices = @transform_3, window_bounds = array<i64: 1, 256>}, {pipeline_mode = #tpu.pipeline_mode<synchronous>, transform_indices = @transform_4, window_bounds = array<i64: 16, 256>}, {pipeline_mode = #tpu.pipeline_mode<synchronous>, transform_indices = @transform_5, window_bounds = array<i64: 1, 1>}, {pipeline_mode = #tpu.pipeline_mode<synchronous>, transform_indices = @transform_6, window_bounds = array<i64: 2, 1>}]} {
    %c0 = arith.constant 0 : index
    %c0_0 = arith.constant 0 : index
    %0 = vector.load %arg1[%c0, %c0_0] : memref<32x2048xbf16, #tpu.memory_space<vmem>>, vector<32x2048xbf16>
    %c0_1 = arith.constant 0 : index
    %c0_2 = arith.constant 0 : index
    %1 = vector.load %arg2[%c0_1, %c0_2] : memref<2048x256xbf16, #tpu.memory_space<vmem>>, vector<2048x256xbf16>
    %cst = arith.constant dense<0.000000e+00> : vector<32x256xf32>
    %2 = tpu.matmul %0, %1, %cst {dimension_numbers = #tpu.dot_dimension_numbers<[1], [0], [0], [1], [0, 0, 1, 1], [], []>} : vector<32x2048xbf16>, vector<2048x256xbf16>, vector<32x256xf32> -> vector<32x256xf32>
    %c32_i32 = arith.constant 32 : i32
    %3 = arith.muli %arg0, %c32_i32 : i32
    %4 = tpu.assume_multiple %3, 8 : i32
    %5 = arith.index_cast %4 : i32 to index
    %c0_3 = arith.constant 0 : index
    %6 = vector.load %arg8[%5, %c0_3] : memref<32x256xf32, #tpu.memory_space<vmem>>, vector<32x256xf32>
    tpu.vector_store %arg8[%5, %c0_3], %2 {strides = array<i32>} : memref<32x256xf32, #tpu.memory_space<vmem>>, vector<32x256xf32>,
    %c0_i32 = arith.constant 0 : i32
    %7 = arith.cmpi eq, %arg0, %c0_i32 : i32
    %8 = arith.extui %7 : i1 to i32
    %c0_i32_4 = arith.constant 0 : i32
    %9 = arith.cmpi ne, %8, %c0_i32_4 : i32
    scf.if %9 {
      %cst_17 = arith.constant 0.000000e+00 : f32
      %24 = vector.broadcast %cst_17 : f32 to vector<1x256xf32>
      %c0_18 = arith.constant 0 : index
      %c0_19 = arith.constant 0 : index
      %25 = vector.load %arg9[%c0_18, %c0_19] : memref<1x256xf32, #tpu.memory_space<vmem>>, vector<1x256xf32>
      tpu.vector_store %arg9[%c0_18, %c0_19], %24 {strides = array<i32>} : memref<1x256xf32, #tpu.memory_space<vmem>>, vector<1x256xf32>,
      %cst_20 = arith.constant 0.000000e+00 : f32
      %26 = vector.broadcast %cst_20 : f32 to vector<1x256xf32>
      %c0_21 = arith.constant 0 : index
      %c0_22 = arith.constant 0 : index
      %27 = vector.load %arg10[%c0_21, %c0_22] : memref<1x256xf32, #tpu.memory_space<vmem>>, vector<1x256xf32>
      tpu.vector_store %arg10[%c0_21, %c0_22], %26 {strides = array<i32>} : memref<1x256xf32, #tpu.memory_space<vmem>>, vector<1x256xf32>,
    } else {
    }
    %c0_5 = arith.constant 0 : index
    %c0_6 = arith.constant 0 : index
    %10 = vector.load %arg9[%c0_5, %c0_6] : memref<1x256xf32, #tpu.memory_space<vmem>>, vector<1x256xf32>
    %cst_7 = arith.constant dense<0.000000e+00> : vector<256xf32>
    %11 = vector.multi_reduction <add>, %2, %cst_7 [0] : vector<32x256xf32> to vector<256xf32>
    %12 = vector.shape_cast %11 : vector<256xf32> to vector<1x256xf32>
    %13 = arith.addf %10, %12 : vector<1x256xf32>
    %c0_8 = arith.constant 0 : index
    %c0_9 = arith.constant 0 : index
    %14 = vector.load %arg9[%c0_8, %c0_9] : memref<1x256xf32, #tpu.memory_space<vmem>>, vector<1x256xf32>
    tpu.vector_store %arg9[%c0_8, %c0_9], %13 {strides = array<i32>} : memref<1x256xf32, #tpu.memory_space<vmem>>, vector<1x256xf32>,
    %c0_10 = arith.constant 0 : index
    %c0_11 = arith.constant 0 : index
    %15 = vector.load %arg10[%c0_10, %c0_11] : memref<1x256xf32, #tpu.memory_space<vmem>>, vector<1x256xf32>
    %16 = arith.mulf %2, %2 : vector<32x256xf32>
    %cst_12 = arith.constant dense<0.000000e+00> : vector<256xf32>
    %17 = vector.multi_reduction <add>, %16, %cst_12 [0] : vector<32x256xf32> to vector<256xf32>
    %18 = vector.shape_cast %17 : vector<256xf32> to vector<1x256xf32>
    %19 = arith.addf %15, %18 : vector<1x256xf32>
    %c0_13 = arith.constant 0 : index
    %c0_14 = arith.constant 0 : index
    %20 = vector.load %arg10[%c0_13, %c0_14] : memref<1x256xf32, #tpu.memory_space<vmem>>, vector<1x256xf32>
    tpu.vector_store %arg10[%c0_13, %c0_14], %19 {strides = array<i32>} : memref<1x256xf32, #tpu.memory_space<vmem>>, vector<1x256xf32>,
    %c0_i32_15 = arith.constant 0 : i32
    %21 = arith.cmpi eq, %arg0, %c0_i32_15 : i32
    %22 = arith.extui %21 : i1 to i32
    %c0_i32_16 = arith.constant 0 : i32
    %23 = arith.cmpi ne, %22, %c0_i32_16 : i32
    scf.if %23 {
      %c0_17 = arith.constant 0 : index
      %c0_18 = arith.constant 0 : index
      %24 = vector.load %arg9[%c0_17, %c0_18] : memref<1x256xf32, #tpu.memory_space<vmem>>, vector<1x256xf32>
      %cst_19 = arith.constant 3.125000e-02 : f32
      %25 = vector.broadcast %cst_19 : f32 to vector<1x256xf32>
      %26 = arith.mulf %24, %25 : vector<1x256xf32>
      %c0_20 = arith.constant 0 : index
      %c0_21 = arith.constant 0 : index
      %27 = vector.load %arg10[%c0_20, %c0_21] : memref<1x256xf32, #tpu.memory_space<vmem>>, vector<1x256xf32>
      %cst_22 = arith.constant 3.125000e-02 : f32
      %28 = vector.broadcast %cst_22 : f32 to vector<1x256xf32>
      %29 = arith.mulf %27, %28 : vector<1x256xf32>
      %30 = arith.mulf %26, %26 : vector<1x256xf32>
      %31 = arith.subf %29, %30 : vector<1x256xf32>
      %cst_23 = arith.constant 0.000000e+00 : f32
      %32 = vector.broadcast %cst_23 : f32 to vector<1x256xf32>
      %33 = arith.maximumf %31, %32 : vector<1x256xf32>
      %cst_24 = arith.constant 9.99999974E-6 : f32
      %34 = vector.broadcast %cst_24 : f32 to vector<1x256xf32>
      %35 = arith.addf %33, %34 : vector<1x256xf32>
      %36 = math.rsqrt %35 : vector<1x256xf32>
      %c0_25 = arith.constant 0 : index
      %c0_26 = arith.constant 0 : index
      %37 = vector.load %arg3[%c0_25, %c0_26] : memref<1x256xf32, #tpu.memory_space<vmem>>, vector<1x256xf32>
      %38 = arith.mulf %36, %37 : vector<1x256xf32>
      %c0_27 = arith.constant 0 : index
      %c0_28 = arith.constant 0 : index
      %39 = vector.load %arg4[%c0_27, %c0_28] : memref<1x256xf32, #tpu.memory_space<vmem>>, vector<1x256xf32>
      %40 = arith.mulf %26, %38 : vector<1x256xf32>
      %41 = arith.subf %39, %40 : vector<1x256xf32>
      %cst_29 = arith.constant 0.000000e+00 : f32
      %42 = vector.broadcast %cst_29 : f32 to vector<2x256xf32>
      %c0_30 = arith.constant 0 : index
      %c0_31 = arith.constant 0 : index
      %43 = vector.load %arg8[%c0_30, %c0_31] : memref<32x256xf32, #tpu.memory_space<vmem>>, vector<2x256xf32>
      %44 = vector.broadcast %38 : vector<1x256xf32> to vector<2x256xf32>
      %45 = arith.mulf %43, %44 : vector<2x256xf32>
      %46 = vector.broadcast %41 : vector<1x256xf32> to vector<2x256xf32>
      %47 = arith.addf %45, %46 : vector<2x256xf32>
      %cst_32 = arith.constant 0.000000e+00 : f32
      %48 = vector.broadcast %cst_32 : f32 to vector<2x256xf32>
      %49 = arith.cmpf ogt, %47, %48 : vector<2x256xf32>
      %cst_33 = arith.constant 2.000000e-01 : f32
      %50 = vector.broadcast %cst_33 : f32 to vector<2x256xf32>
      %51 = arith.mulf %50, %47 : vector<2x256xf32>
      %52 = arith.select %49, %47, %51 : vector<2x256xi1>, vector<2x256xf32>
      %c0_34 = arith.constant 0 : index
      %c0_35 = arith.constant 0 : index
      %53 = vector.load %arg5[%c0_34, %c0_35] : memref<16x256xf32, #tpu.memory_space<vmem>>, vector<1x256xf32>
      %54 = vector.broadcast %53 : vector<1x256xf32> to vector<2x256xf32>
      %55 = arith.mulf %52, %54 : vector<2x256xf32>
      %56 = arith.addf %42, %55 : vector<2x256xf32>
      %c2 = arith.constant 2 : index
      %c0_36 = arith.constant 0 : index
      %57 = vector.load %arg8[%c2, %c0_36] : memref<32x256xf32, #tpu.memory_space<vmem>>, vector<2x256xf32>
      %58 = vector.broadcast %38 : vector<1x256xf32> to vector<2x256xf32>
      %59 = arith.mulf %57, %58 : vector<2x256xf32>
      %60 = vector.broadcast %41 : vector<1x256xf32> to vector<2x256xf32>
      %61 = arith.addf %59, %60 : vector<2x256xf32>
      %cst_37 = arith.constant 0.000000e+00 : f32
      %62 = vector.broadcast %cst_37 : f32 to vector<2x256xf32>
      %63 = arith.cmpf ogt, %61, %62 : vector<2x256xf32>
      %cst_38 = arith.constant 2.000000e-01 : f32
      %64 = vector.broadcast %cst_38 : f32 to vector<2x256xf32>
      %65 = arith.mulf %64, %61 : vector<2x256xf32>
      %66 = arith.select %63, %61, %65 : vector<2x256xi1>, vector<2x256xf32>
      %c1 = arith.constant 1 : index
      %c0_39 = arith.constant 0 : index
      %67 = vector.load %arg5[%c1, %c0_39] : memref<16x256xf32, #tpu.memory_space<vmem>>, vector<1x256xf32>
      %68 = vector.broadcast %67 : vector<1x256xf32> to vector<2x256xf32>
      %69 = arith.mulf %66, %68 : vector<2x256xf32>
      %70 = arith.addf %56, %69 : vector<2x256xf32>
      %c4 = arith.constant 4 : index
      %c0_40 = arith.constant 0 : index
      %71 = vector.load %arg8[%c4, %c0_40] : memref<32x256xf32, #tpu.memory_space<vmem>>, vector<2x256xf32>
      %72 = vector.broadcast %38 : vector<1x256xf32> to vector<2x256xf32>
      %73 = arith.mulf %71, %72 : vector<2x256xf32>
      %74 = vector.broadcast %41 : vector<1x256xf32> to vector<2x256xf32>
      %75 = arith.addf %73, %74 : vector<2x256xf32>
      %cst_41 = arith.constant 0.000000e+00 : f32
      %76 = vector.broadcast %cst_41 : f32 to vector<2x256xf32>
      %77 = arith.cmpf ogt, %75, %76 : vector<2x256xf32>
      %cst_42 = arith.constant 2.000000e-01 : f32
      %78 = vector.broadcast %cst_42 : f32 to vector<2x256xf32>
      %79 = arith.mulf %78, %75 : vector<2x256xf32>
      %80 = arith.select %77, %75, %79 : vector<2x256xi1>, vector<2x256xf32>
      %c2_43 = arith.constant 2 : index
      %c0_44 = arith.constant 0 : index
      %81 = vector.load %arg5[%c2_43, %c0_44] : memref<16x256xf32, #tpu.memory_space<vmem>>, vector<1x256xf32>
      %82 = vector.broadcast %81 : vector<1x256xf32> to vector<2x256xf32>
      %83 = arith.mulf %80, %82 : vector<2x256xf32>
      %84 = arith.addf %70, %83 : vector<2x256xf32>
      %c6 = arith.constant 6 : index
      %c0_45 = arith.constant 0 : index
      %85 = vector.load %arg8[%c6, %c0_45] : memref<32x256xf32, #tpu.memory_space<vmem>>, vector<2x256xf32>
      %86 = vector.broadcast %38 : vector<1x256xf32> to vector<2x256xf32>
      %87 = arith.mulf %85, %86 : vector<2x256xf32>
      %88 = vector.broadcast %41 : vector<1x256xf32> to vector<2x256xf32>
      %89 = arith.addf %87, %88 : vector<2x256xf32>
      %cst_46 = arith.constant 0.000000e+00 : f32
      %90 = vector.broadcast %cst_46 : f32 to vector<2x256xf32>
      %91 = arith.cmpf ogt, %89, %90 : vector<2x256xf32>
      %cst_47 = arith.constant 2.000000e-01 : f32
      %92 = vector.broadcast %cst_47 : f32 to vector<2x256xf32>
      %93 = arith.mulf %92, %89 : vector<2x256xf32>
      %94 = arith.select %91, %89, %93 : vector<2x256xi1>, vector<2x256xf32>
      %c3 = arith.constant 3 : index
      %c0_48 = arith.constant 0 : index
      %95 = vector.load %arg5[%c3, %c0_48] : memref<16x256xf32, #tpu.memory_space<vmem>>, vector<1x256xf32>
      %96 = vector.broadcast %95 : vector<1x256xf32> to vector<2x256xf32>
      %97 = arith.mulf %94, %96 : vector<2x256xf32>
      %98 = arith.addf %84, %97 : vector<2x256xf32>
      %c8 = arith.constant 8 : index
      %c0_49 = arith.constant 0 : index
      %99 = vector.load %arg8[%c8, %c0_49] : memref<32x256xf32, #tpu.memory_space<vmem>>, vector<2x256xf32>
      %100 = vector.broadcast %38 : vector<1x256xf32> to vector<2x256xf32>
      %101 = arith.mulf %99, %100 : vector<2x256xf32>
      %102 = vector.broadcast %41 : vector<1x256xf32> to vector<2x256xf32>
      %103 = arith.addf %101, %102 : vector<2x256xf32>
      %cst_50 = arith.constant 0.000000e+00 : f32
      %104 = vector.broadcast %cst_50 : f32 to vector<2x256xf32>
      %105 = arith.cmpf ogt, %103, %104 : vector<2x256xf32>
      %cst_51 = arith.constant 2.000000e-01 : f32
      %106 = vector.broadcast %cst_51 : f32 to vector<2x256xf32>
      %107 = arith.mulf %106, %103 : vector<2x256xf32>
      %108 = arith.select %105, %103, %107 : vector<2x256xi1>, vector<2x256xf32>
      %c4_52 = arith.constant 4 : index
      %c0_53 = arith.constant 0 : index
      %109 = vector.load %arg5[%c4_52, %c0_53] : memref<16x256xf32, #tpu.memory_space<vmem>>, vector<1x256xf32>
      %110 = vector.broadcast %109 : vector<1x256xf32> to vector<2x256xf32>
      %111 = arith.mulf %108, %110 : vector<2x256xf32>
      %112 = arith.addf %98, %111 : vector<2x256xf32>
      %c10 = arith.constant 10 : index
      %c0_54 = arith.constant 0 : index
      %113 = vector.load %arg8[%c10, %c0_54] : memref<32x256xf32, #tpu.memory_space<vmem>>, vector<2x256xf32>
      %114 = vector.broadcast %38 : vector<1x256xf32> to vector<2x256xf32>
      %115 = arith.mulf %113, %114 : vector<2x256xf32>
      %116 = vector.broadcast %41 : vector<1x256xf32> to vector<2x256xf32>
      %117 = arith.addf %115, %116 : vector<2x256xf32>
      %cst_55 = arith.constant 0.000000e+00 : f32
      %118 = vector.broadcast %cst_55 : f32 to vector<2x256xf32>
      %119 = arith.cmpf ogt, %117, %118 : vector<2x256xf32>
      %cst_56 = arith.constant 2.000000e-01 : f32
      %120 = vector.broadcast %cst_56 : f32 to vector<2x256xf32>
      %121 = arith.mulf %120, %117 : vector<2x256xf32>
      %122 = arith.select %119, %117, %121 : vector<2x256xi1>, vector<2x256xf32>
      %c5 = arith.constant 5 : index
      %c0_57 = arith.constant 0 : index
      %123 = vector.load %arg5[%c5, %c0_57] : memref<16x256xf32, #tpu.memory_space<vmem>>, vector<1x256xf32>
      %124 = vector.broadcast %123 : vector<1x256xf32> to vector<2x256xf32>
      %125 = arith.mulf %122, %124 : vector<2x256xf32>
      %126 = arith.addf %112, %125 : vector<2x256xf32>
      %c12 = arith.constant 12 : index
      %c0_58 = arith.constant 0 : index
      %127 = vector.load %arg8[%c12, %c0_58] : memref<32x256xf32, #tpu.memory_space<vmem>>, vector<2x256xf32>
      %128 = vector.broadcast %38 : vector<1x256xf32> to vector<2x256xf32>
      %129 = arith.mulf %127, %128 : vector<2x256xf32>
      %130 = vector.broadcast %41 : vector<1x256xf32> to vector<2x256xf32>
      %131 = arith.addf %129, %130 : vector<2x256xf32>
      %cst_59 = arith.constant 0.000000e+00 : f32
      %132 = vector.broadcast %cst_59 : f32 to vector<2x256xf32>
      %133 = arith.cmpf ogt, %131, %132 : vector<2x256xf32>
      %cst_60 = arith.constant 2.000000e-01 : f32
      %134 = vector.broadcast %cst_60 : f32 to vector<2x256xf32>
      %135 = arith.mulf %134, %131 : vector<2x256xf32>
      %136 = arith.select %133, %131, %135 : vector<2x256xi1>, vector<2x256xf32>
      %c6_61 = arith.constant 6 : index
      %c0_62 = arith.constant 0 : index
      %137 = vector.load %arg5[%c6_61, %c0_62] : memref<16x256xf32, #tpu.memory_space<vmem>>, vector<1x256xf32>
      %138 = vector.broadcast %137 : vector<1x256xf32> to vector<2x256xf32>
      %139 = arith.mulf %136, %138 : vector<2x256xf32>
      %140 = arith.addf %126, %139 : vector<2x256xf32>
      %c14 = arith.constant 14 : index
      %c0_63 = arith.constant 0 : index
      %141 = vector.load %arg8[%c14, %c0_63] : memref<32x256xf32, #tpu.memory_space<vmem>>, vector<2x256xf32>
      %142 = vector.broadcast %38 : vector<1x256xf32> to vector<2x256xf32>
      %143 = arith.mulf %141, %142 : vector<2x256xf32>
      %144 = vector.broadcast %41 : vector<1x256xf32> to vector<2x256xf32>
      %145 = arith.addf %143, %144 : vector<2x256xf32>
      %cst_64 = arith.constant 0.000000e+00 : f32
      %146 = vector.broadcast %cst_64 : f32 to vector<2x256xf32>
      %147 = arith.cmpf ogt, %145, %146 : vector<2x256xf32>
      %cst_65 = arith.constant 2.000000e-01 : f32
      %148 = vector.broadcast %cst_65 : f32 to vector<2x256xf32>
      %149 = arith.mulf %148, %145 : vector<2x256xf32>
      %150 = arith.select %147, %145, %149 : vector<2x256xi1>, vector<2x256xf32>
      %c7 = arith.constant 7 : index
      %c0_66 = arith.constant 0 : index
      %151 = vector.load %arg5[%c7, %c0_66] : memref<16x256xf32, #tpu.memory_space<vmem>>, vector<1x256xf32>
      %152 = vector.broadcast %151 : vector<1x256xf32> to vector<2x256xf32>
      %153 = arith.mulf %150, %152 : vector<2x256xf32>
      %154 = arith.addf %140, %153 : vector<2x256xf32>
      %c16 = arith.constant 16 : index
      %c0_67 = arith.constant 0 : index
      %155 = vector.load %arg8[%c16, %c0_67] : memref<32x256xf32, #tpu.memory_space<vmem>>, vector<2x256xf32>
      %156 = vector.broadcast %38 : vector<1x256xf32> to vector<2x256xf32>
      %157 = arith.mulf %155, %156 : vector<2x256xf32>
      %158 = vector.broadcast %41 : vector<1x256xf32> to vector<2x256xf32>
      %159 = arith.addf %157, %158 : vector<2x256xf32>
      %cst_68 = arith.constant 0.000000e+00 : f32
      %160 = vector.broadcast %cst_68 : f32 to vector<2x256xf32>
      %161 = arith.cmpf ogt, %159, %160 : vector<2x256xf32>
      %cst_69 = arith.constant 2.000000e-01 : f32
      %162 = vector.broadcast %cst_69 : f32 to vector<2x256xf32>
      %163 = arith.mulf %162, %159 : vector<2x256xf32>
      %164 = arith.select %161, %159, %163 : vector<2x256xi1>, vector<2x256xf32>
      %c8_70 = arith.constant 8 : index
      %c0_71 = arith.constant 0 : index
      %165 = vector.load %arg5[%c8_70, %c0_71] : memref<16x256xf32, #tpu.memory_space<vmem>>, vector<1x256xf32>
      %166 = vector.broadcast %165 : vector<1x256xf32> to vector<2x256xf32>
      %167 = arith.mulf %164, %166 : vector<2x256xf32>
      %168 = arith.addf %154, %167 : vector<2x256xf32>
      %c18 = arith.constant 18 : index
      %c0_72 = arith.constant 0 : index
      %169 = vector.load %arg8[%c18, %c0_72] : memref<32x256xf32, #tpu.memory_space<vmem>>, vector<2x256xf32>
      %170 = vector.broadcast %38 : vector<1x256xf32> to vector<2x256xf32>
      %171 = arith.mulf %169, %170 : vector<2x256xf32>
      %172 = vector.broadcast %41 : vector<1x256xf32> to vector<2x256xf32>
      %173 = arith.addf %171, %172 : vector<2x256xf32>
      %cst_73 = arith.constant 0.000000e+00 : f32
      %174 = vector.broadcast %cst_73 : f32 to vector<2x256xf32>
      %175 = arith.cmpf ogt, %173, %174 : vector<2x256xf32>
      %cst_74 = arith.constant 2.000000e-01 : f32
      %176 = vector.broadcast %cst_74 : f32 to vector<2x256xf32>
      %177 = arith.mulf %176, %173 : vector<2x256xf32>
      %178 = arith.select %175, %173, %177 : vector<2x256xi1>, vector<2x256xf32>
      %c9 = arith.constant 9 : index
      %c0_75 = arith.constant 0 : index
      %179 = vector.load %arg5[%c9, %c0_75] : memref<16x256xf32, #tpu.memory_space<vmem>>, vector<1x256xf32>
      %180 = vector.broadcast %179 : vector<1x256xf32> to vector<2x256xf32>
      %181 = arith.mulf %178, %180 : vector<2x256xf32>
      %182 = arith.addf %168, %181 : vector<2x256xf32>
      %c20 = arith.constant 20 : index
      %c0_76 = arith.constant 0 : index
      %183 = vector.load %arg8[%c20, %c0_76] : memref<32x256xf32, #tpu.memory_space<vmem>>, vector<2x256xf32>
      %184 = vector.broadcast %38 : vector<1x256xf32> to vector<2x256xf32>
      %185 = arith.mulf %183, %184 : vector<2x256xf32>
      %186 = vector.broadcast %41 : vector<1x256xf32> to vector<2x256xf32>
      %187 = arith.addf %185, %186 : vector<2x256xf32>
      %cst_77 = arith.constant 0.000000e+00 : f32
      %188 = vector.broadcast %cst_77 : f32 to vector<2x256xf32>
      %189 = arith.cmpf ogt, %187, %188 : vector<2x256xf32>
      %cst_78 = arith.constant 2.000000e-01 : f32
      %190 = vector.broadcast %cst_78 : f32 to vector<2x256xf32>
      %191 = arith.mulf %190, %187 : vector<2x256xf32>
      %192 = arith.select %189, %187, %191 : vector<2x256xi1>, vector<2x256xf32>
      %c10_79 = arith.constant 10 : index
      %c0_80 = arith.constant 0 : index
      %193 = vector.load %arg5[%c10_79, %c0_80] : memref<16x256xf32, #tpu.memory_space<vmem>>, vector<1x256xf32>
      %194 = vector.broadcast %193 : vector<1x256xf32> to vector<2x256xf32>
      %195 = arith.mulf %192, %194 : vector<2x256xf32>
      %196 = arith.addf %182, %195 : vector<2x256xf32>
      %c22 = arith.constant 22 : index
      %c0_81 = arith.constant 0 : index
      %197 = vector.load %arg8[%c22, %c0_81] : memref<32x256xf32, #tpu.memory_space<vmem>>, vector<2x256xf32>
      %198 = vector.broadcast %38 : vector<1x256xf32> to vector<2x256xf32>
      %199 = arith.mulf %197, %198 : vector<2x256xf32>
      %200 = vector.broadcast %41 : vector<1x256xf32> to vector<2x256xf32>
      %201 = arith.addf %199, %200 : vector<2x256xf32>
      %cst_82 = arith.constant 0.000000e+00 : f32
      %202 = vector.broadcast %cst_82 : f32 to vector<2x256xf32>
      %203 = arith.cmpf ogt, %201, %202 : vector<2x256xf32>
      %cst_83 = arith.constant 2.000000e-01 : f32
      %204 = vector.broadcast %cst_83 : f32 to vector<2x256xf32>
      %205 = arith.mulf %204, %201 : vector<2x256xf32>
      %206 = arith.select %203, %201, %205 : vector<2x256xi1>, vector<2x256xf32>
      %c11 = arith.constant 11 : index
      %c0_84 = arith.constant 0 : index
      %207 = vector.load %arg5[%c11, %c0_84] : memref<16x256xf32, #tpu.memory_space<vmem>>, vector<1x256xf32>
      %208 = vector.broadcast %207 : vector<1x256xf32> to vector<2x256xf32>
      %209 = arith.mulf %206, %208 : vector<2x256xf32>
      %210 = arith.addf %196, %209 : vector<2x256xf32>
      %c24 = arith.constant 24 : index
      %c0_85 = arith.constant 0 : index
      %211 = vector.load %arg8[%c24, %c0_85] : memref<32x256xf32, #tpu.memory_space<vmem>>, vector<2x256xf32>
      %212 = vector.broadcast %38 : vector<1x256xf32> to vector<2x256xf32>
      %213 = arith.mulf %211, %212 : vector<2x256xf32>
      %214 = vector.broadcast %41 : vector<1x256xf32> to vector<2x256xf32>
      %215 = arith.addf %213, %214 : vector<2x256xf32>
      %cst_86 = arith.constant 0.000000e+00 : f32
      %216 = vector.broadcast %cst_86 : f32 to vector<2x256xf32>
      %217 = arith.cmpf ogt, %215, %216 : vector<2x256xf32>
      %cst_87 = arith.constant 2.000000e-01 : f32
      %218 = vector.broadcast %cst_87 : f32 to vector<2x256xf32>
      %219 = arith.mulf %218, %215 : vector<2x256xf32>
      %220 = arith.select %217, %215, %219 : vector<2x256xi1>, vector<2x256xf32>
      %c12_88 = arith.constant 12 : index
      %c0_89 = arith.constant 0 : index
      %221 = vector.load %arg5[%c12_88, %c0_89] : memref<16x256xf32, #tpu.memory_space<vmem>>, vector<1x256xf32>
      %222 = vector.broadcast %221 : vector<1x256xf32> to vector<2x256xf32>
      %223 = arith.mulf %220, %222 : vector<2x256xf32>
      %224 = arith.addf %210, %223 : vector<2x256xf32>
      %c26 = arith.constant 26 : index
      %c0_90 = arith.constant 0 : index
      %225 = vector.load %arg8[%c26, %c0_90] : memref<32x256xf32, #tpu.memory_space<vmem>>, vector<2x256xf32>
      %226 = vector.broadcast %38 : vector<1x256xf32> to vector<2x256xf32>
      %227 = arith.mulf %225, %226 : vector<2x256xf32>
      %228 = vector.broadcast %41 : vector<1x256xf32> to vector<2x256xf32>
      %229 = arith.addf %227, %228 : vector<2x256xf32>
      %cst_91 = arith.constant 0.000000e+00 : f32
      %230 = vector.broadcast %cst_91 : f32 to vector<2x256xf32>
      %231 = arith.cmpf ogt, %229, %230 : vector<2x256xf32>
      %cst_92 = arith.constant 2.000000e-01 : f32
      %232 = vector.broadcast %cst_92 : f32 to vector<2x256xf32>
      %233 = arith.mulf %232, %229 : vector<2x256xf32>
      %234 = arith.select %231, %229, %233 : vector<2x256xi1>, vector<2x256xf32>
      %c13 = arith.constant 13 : index
      %c0_93 = arith.constant 0 : index
      %235 = vector.load %arg5[%c13, %c0_93] : memref<16x256xf32, #tpu.memory_space<vmem>>, vector<1x256xf32>
      %236 = vector.broadcast %235 : vector<1x256xf32> to vector<2x256xf32>
      %237 = arith.mulf %234, %236 : vector<2x256xf32>
      %238 = arith.addf %224, %237 : vector<2x256xf32>
      %c28 = arith.constant 28 : index
      %c0_94 = arith.constant 0 : index
      %239 = vector.load %arg8[%c28, %c0_94] : memref<32x256xf32, #tpu.memory_space<vmem>>, vector<2x256xf32>
      %240 = vector.broadcast %38 : vector<1x256xf32> to vector<2x256xf32>
      %241 = arith.mulf %239, %240 : vector<2x256xf32>
      %242 = vector.broadcast %41 : vector<1x256xf32> to vector<2x256xf32>
      %243 = arith.addf %241, %242 : vector<2x256xf32>
      %cst_95 = arith.constant 0.000000e+00 : f32
      %244 = vector.broadcast %cst_95 : f32 to vector<2x256xf32>
      %245 = arith.cmpf ogt, %243, %244 : vector<2x256xf32>
      %cst_96 = arith.constant 2.000000e-01 : f32
      %246 = vector.broadcast %cst_96 : f32 to vector<2x256xf32>
      %247 = arith.mulf %246, %243 : vector<2x256xf32>
      %248 = arith.select %245, %243, %247 : vector<2x256xi1>, vector<2x256xf32>
      %c14_97 = arith.constant 14 : index
      %c0_98 = arith.constant 0 : index
      %249 = vector.load %arg5[%c14_97, %c0_98] : memref<16x256xf32, #tpu.memory_space<vmem>>, vector<1x256xf32>
      %250 = vector.broadcast %249 : vector<1x256xf32> to vector<2x256xf32>
      %251 = arith.mulf %248, %250 : vector<2x256xf32>
      %252 = arith.addf %238, %251 : vector<2x256xf32>
      %c30 = arith.constant 30 : index
      %c0_99 = arith.constant 0 : index
      %253 = vector.load %arg8[%c30, %c0_99] : memref<32x256xf32, #tpu.memory_space<vmem>>, vector<2x256xf32>
      %254 = vector.broadcast %38 : vector<1x256xf32> to vector<2x256xf32>
      %255 = arith.mulf %253, %254 : vector<2x256xf32>
      %256 = vector.broadcast %41 : vector<1x256xf32> to vector<2x256xf32>
      %257 = arith.addf %255, %256 : vector<2x256xf32>
      %cst_100 = arith.constant 0.000000e+00 : f32
      %258 = vector.broadcast %cst_100 : f32 to vector<2x256xf32>
      %259 = arith.cmpf ogt, %257, %258 : vector<2x256xf32>
      %cst_101 = arith.constant 2.000000e-01 : f32
      %260 = vector.broadcast %cst_101 : f32 to vector<2x256xf32>
      %261 = arith.mulf %260, %257 : vector<2x256xf32>
      %262 = arith.select %259, %257, %261 : vector<2x256xi1>, vector<2x256xf32>
      %c15 = arith.constant 15 : index
      %c0_102 = arith.constant 0 : index
      %263 = vector.load %arg5[%c15, %c0_102] : memref<16x256xf32, #tpu.memory_space<vmem>>, vector<1x256xf32>
      %264 = vector.broadcast %263 : vector<1x256xf32> to vector<2x256xf32>
      %265 = arith.mulf %262, %264 : vector<2x256xf32>
      %266 = arith.addf %252, %265 : vector<2x256xf32>
      %cst_103 = arith.constant dense<0.000000e+00> : vector<2xf32>
      %267 = vector.multi_reduction <add>, %266, %cst_103 [1] : vector<2x256xf32> to vector<2xf32>
      %268 = vector.shape_cast %267 : vector<2xf32> to vector<2x1xf32>
      %c0_104 = arith.constant 0 : index
      %c0_105 = arith.constant 0 : index
      %269 = vector.load %arg6[%c0_104, %c0_105] : memref<1x1xf32, #tpu.memory_space<vmem>>, vector<1x1xf32>
      %270 = vector.broadcast %269 : vector<1x1xf32> to vector<2x1xf32>
      %271 = arith.addf %268, %270 : vector<2x1xf32>
      %272 = arith.negf %271 : vector<2x1xf32>
      %273 = math.exp %272 : vector<2x1xf32>
      %cst_106 = arith.constant 1.000000e+00 : f32
      %274 = vector.broadcast %cst_106 : f32 to vector<2x1xf32>
      %275 = arith.addf %274, %273 : vector<2x1xf32>
      %276 = arith.divf %274, %275 : vector<2x1xf32>
      %c0_107 = arith.constant 0 : index
      %c0_108 = arith.constant 0 : index
      %277 = vector.load %arg7[%c0_107, %c0_108] : memref<2x1xf32, #tpu.memory_space<vmem>>, vector<2x1xf32>
      tpu.vector_store %arg7[%c0_107, %c0_108], %276 {strides = array<i32>} : memref<2x1xf32, #tpu.memory_space<vmem>>, vector<2x1xf32>,
    } else {
    }
    return
  }
  func.func @transform_0(%arg0: i32) -> (i32, i32) {
    %c0_i32 = arith.constant 0 : i32
    %c0_i32_0 = arith.constant 0 : i32
    return %arg0, %c0_i32 : i32, i32
  }
  func.func @transform_1(%arg0: i32) -> (i32, i32) {
    %c0_i32 = arith.constant 0 : i32
    %c0_i32_0 = arith.constant 0 : i32
    %c0_i32_1 = arith.constant 0 : i32
    return %c0_i32, %c0_i32_0 : i32, i32
  }
  func.func @transform_2(%arg0: i32) -> (i32, i32) {
    %c0_i32 = arith.constant 0 : i32
    %c0_i32_0 = arith.constant 0 : i32
    %c0_i32_1 = arith.constant 0 : i32
    return %c0_i32, %c0_i32_0 : i32, i32
  }
  func.func @transform_3(%arg0: i32) -> (i32, i32) {
    %c0_i32 = arith.constant 0 : i32
    %c0_i32_0 = arith.constant 0 : i32
    %c0_i32_1 = arith.constant 0 : i32
    return %c0_i32, %c0_i32_0 : i32, i32
  }
  func.func @transform_4(%arg0: i32) -> (i32, i32) {
    %c0_i32 = arith.constant 0 : i32
    %c0_i32_0 = arith.constant 0 : i32
    %c0_i32_1 = arith.constant 0 : i32
    return %c0_i32, %c0_i32_0 : i32, i32
  }
  func.func @transform_5(%arg0: i32) -> (i32, i32) {
    %c0_i32 = arith.constant 0 : i32
    %c0_i32_0 = arith.constant 0 : i32
    %c0_i32_1 = arith.constant 0 : i32
    return %c0_i32, %c0_i32_0 : i32, i32
  }
  func.func @transform_6(%arg0: i32) -> (i32, i32) {
    %c0_i32 = arith.constant 0 : i32
    %c0_i32_0 = arith.constant 0 : i32
    %c0_i32_1 = arith.constant 0 : i32
    return %c0_i32, %c0_i32_0 : i32, i32
  }
}

</mosaic_0001>

<llo_original>
// kernel: discriminator_sn_forward.3
$region0: #{discriminator_sn_forward.3}
  #allocation0 [shape = 'u32[]', space=smem, size = 0x4, offset = 0x4, fixed_abs, tag = 'smem constant byte address 0x4 - core index']
  #allocation1 [shape = 'u32[144,128]{1,0:T(1,128)}', space=vmem, size = 0x12000, scoped, tag = 'internal scratch']
  %s0 = inlined_call_operand.vmem [shape: bf16[256,128], index: 0, kind: input, shape index: {}]
  %s1 = inlined_call_operand.vmem [shape: bf16[128,128], index: 1, kind: input, shape index: {}]
  %s2 = inlined_call_operand.vmem [shape: f32[1,128], index: 2, kind: input, shape index: {}]
  %s3 = inlined_call_operand.vmem [shape: bf16[256,128], index: 3, kind: output, shape index: {}]
  %s4 = sld [smem:[#allocation0]]
  $region22: #{discriminator_sn_forward.3} parent=0
    _
  %s6 = ssub.s32 1, %s4
  %s7 = scalar_select 0, %s6, %s4
  // Predicated region
  $region2: #{discriminator_sn_forward.3} parent=0 // pred_check
    _
  $region3: #{discriminator_sn_forward.3} parent=0 // pred_check_branch
    %9 = sbr.rel (0) target = $region5
  $region4: #{discriminator_sn_forward.3} parent=0 // pred_region
    _
  $region5: #{discriminator_sn_forward.3} parent=0 // pred_fallthru
    _
  // Predicated region
  $region6: #{discriminator_sn_forward.3} parent=0 // pred_check
    _
  $region7: #{discriminator_sn_forward.3} parent=0 // pred_check_branch
    %11 = sbr.rel (0) target = $region9
  $region8: #{discriminator_sn_forward.3} parent=0 // pred_region
    _
  $region9: #{discriminator_sn_forward.3} parent=0 // pred_fallthru
    _
  // Predicated region
  $region10: #{discriminator_sn_forward.3} parent=0 // pred_check
    _
  $region11: #{discriminator_sn_forward.3} parent=0 // pred_check_branch
    %13 = sbr.rel (0) target = $region13
  $region12: #{discriminator_sn_forward.3} parent=0 // pred_region
    _
  $region13: #{discriminator_sn_forward.3} parent=0 // pred_fallthru
    _
  %v15 = vld [vmem:[%s0] sm:$0xf]
  %v16 = vld [vmem:[%s0 + $0x4] sm:$0xf]
  %v17 = vld [vmem:[%s0 + $0x8] sm:$0xf]
  %v18 = vld [vmem:[%s0 + $0xc] sm:$0xf]
  %v19 = vld [vmem:[%s0 + $0x10] sm:$0xf]
  %v20 = vld [vmem:[%s0 + $0x14] sm:$0xf]
  %v21 = vld [vmem:[%s0 + $0x18] sm:$0xf]
  %v22 = vld [vmem:[%s0 + $0x1c] sm:$0xf]
  %v23 = vld [vmem:[%s0 + $0x20] sm:$0xf]
  %v24 = vld [vmem:[%s0 + $0x24] sm:$0xf]
  %v25 = vld [vmem:[%s0 + $0x28] sm:$0xf]
  %v26 = vld [vmem:[%s0 + $0x2c] sm:$0xf]
  %v27 = vld [vmem:[%s0 + $0x30] sm:$0xf]
  %v28 = vld [vmem:[%s0 + $0x34] sm:$0xf]
  %v29 = vld [vmem:[%s0 + $0x38] sm:$0xf]
  %v30 = vld [vmem:[%s0 + $0x3c] sm:$0xf]
  %v31 = vld [vmem:[%s0 + $0x40] sm:$0xf]
  %v32 = vld [vmem:[%s0 + $0x44] sm:$0xf]
  %v33 = vld [vmem:[%s0 + $0x48] sm:$0xf]
  %v34 = vld [vmem:[%s0 + $0x4c] sm:$0xf]
  %v35 = vld [vmem:[%s0 + $0x50] sm:$0xf]
  %v36 = vld [vmem:[%s0 + $0x54] sm:$0xf]
  %v37 = vld [vmem:[%s0 + $0x58] sm:$0xf]
  %v38 = vld [vmem:[%s0 + $0x5c] sm:$0xf]
  %v39 = vld [vmem:[%s0 + $0x60] sm:$0xf]
  %v40 = vld [vmem:[%s0 + $0x64] sm:$0xf]
  %v41 = vld [vmem:[%s0 + $0x68] sm:$0xf]
  %v42 = vld [vmem:[%s0 + $0x6c] sm:$0xf]
  %v43 = vld [vmem:[%s0 + $0x70] sm:$0xf]
  %v44 = vld [vmem:[%s0 + $0x74] sm:$0xf]
  %v45 = vld [vmem:[%s0 + $0x78] sm:$0xf]
  %v46 = vld [vmem:[%s0 + $0x7c] sm:$0xf]
  %v47 = vld [vmem:[%s1] sm:$0xf]
  %v48 = vld [vmem:[%s1 + $0x4] sm:$0xf]
  %v49 = vld [vmem:[%s1 + $0x8] sm:$0xf]
  %v50 = vld [vmem:[%s1 + $0xc] sm:$0xf]
  %v51 = vld [vmem:[%s1 + $0x10] sm:$0xf]
  %v52 = vld [vmem:[%s1 + $0x14] sm:$0xf]
  %v53 = vld [vmem:[%s1 + $0x18] sm:$0xf]
  %v54 = vld [vmem:[%s1 + $0x1c] sm:$0xf]
  %v55 = vld [vmem:[%s1 + $0x20] sm:$0xf]
  %v56 = vld [vmem:[%s1 + $0x24] sm:$0xf]
  %v57 = vld [vmem:[%s1 + $0x28] sm:$0xf]
  %v58 = vld [vmem:[%s1 + $0x2c] sm:$0xf]
  %v59 = vld [vmem:[%s1 + $0x30] sm:$0xf]
  %v60 = vld [vmem:[%s1 + $0x34] sm:$0xf]
  %v61 = vld [vmem:[%s1 + $0x38] sm:$0xf]
  %v62 = vld [vmem:[%s1 + $0x3c] sm:$0xf]
  %v63 = vld [vmem:[%s2] sm:$0x1]
  %v65 = vlaneseq
  %v66 = vshrl.u32 %v65, 7
  %v67 = vsub.s32 0, %v66
  %v68 = vrot.slane %v63, %v67
  %v102 = vunpack.c.l.b16 %v15
  %v103 = vunpack.c.l.b16 %v16
  %v104 = vunpack.c.l.b16 %v17
  %v105 = vunpack.c.l.b16 %v18
  %v106 = vunpack.c.l.b16 %v19
  %v107 = vunpack.c.l.b16 %v20
  %v108 = vunpack.c.l.b16 %v21
  %v109 = vunpack.c.l.b16 %v22
  %v110 = vunpack.c.l.b16 %v23
  %v111 = vunpack.c.l.b16 %v24
  %v112 = vunpack.c.l.b16 %v25
  %v113 = vunpack.c.l.b16 %v26
  %v114 = vunpack.c.l.b16 %v27
  %v115 = vunpack.c.l.b16 %v28
  %v116 = vunpack.c.l.b16 %v29
  %v117 = vunpack.c.l.b16 %v30
  %v118 = vunpack.c.l.b16 %v31
  %v119 = vunpack.c.l.b16 %v32
  %v120 = vunpack.c.l.b16 %v33
  %v121 = vunpack.c.l.b16 %v34
  %v122 = vunpack.c.l.b16 %v35
  %v123 = vunpack.c.l.b16 %v36
  %v124 = vunpack.c.l.b16 %v37
  %v125 = vunpack.c.l.b16 %v38
  %v126 = vunpack.c.l.b16 %v39
  %v127 = vunpack.c.l.b16 %v40
  %v128 = vunpack.c.l.b16 %v41
  %v129 = vunpack.c.l.b16 %v42
  %v130 = vunpack.c.l.b16 %v43
  %v131 = vunpack.c.l.b16 %v44
  %v132 = vunpack.c.l.b16 %v45
  %v133 = vunpack.c.l.b16 %v46
  %v134 = vpack.c.b16 %v103, %v102
  %v135 = vpack.c.b16 %v105, %v104
  %v136 = vpack.c.b16 %v107, %v106
  %v137 = vpack.c.b16 %v109, %v108
  %v138 = vpack.c.b16 %v111, %v110
  %v139 = vpack.c.b16 %v113, %v112
  %v140 = vpack.c.b16 %v115, %v114
  %v141 = vpack.c.b16 %v117, %v116
  %v142 = vpack.c.b16 %v119, %v118
  %v143 = vpack.c.b16 %v121, %v120
  %v144 = vpack.c.b16 %v123, %v122
  %v145 = vpack.c.b16 %v125, %v124
  %v146 = vpack.c.b16 %v127, %v126
  %v147 = vpack.c.b16 %v129, %v128
  %v148 = vpack.c.b16 %v131, %v130
  %v149 = vpack.c.b16 %v133, %v132
  %v182 = vunpack.c.l.b16 %v47
  %v183 = vunpack.c.l.b16 %v48
  %v184 = vunpack.c.l.b16 %v49
  %v185 = vunpack.c.l.b16 %v50
  %v186 = vunpack.c.l.b16 %v51
  %v187 = vunpack.c.l.b16 %v52
  %v188 = vunpack.c.l.b16 %v53
  %v189 = vunpack.c.l.b16 %v54
  %v190 = vunpack.c.l.b16 %v55
  %v191 = vunpack.c.l.b16 %v56
  %v192 = vunpack.c.l.b16 %v57
  %v193 = vunpack.c.l.b16 %v58
  %v194 = vunpack.c.l.b16 %v59
  %v195 = vunpack.c.l.b16 %v60
  %v196 = vunpack.c.l.b16 %v61
  %v197 = vunpack.c.l.b16 %v62
  %v198 = vpack.c.b16 %v183, %v182
  %v199 = vpack.c.b16 %v185, %v184
  %v200 = vpack.c.b16 %v187, %v186
  %v201 = vpack.c.b16 %v189, %v188
  %v202 = vpack.c.b16 %v191, %v190
  %v203 = vpack.c.b16 %v193, %v192
  %v204 = vpack.c.b16 %v195, %v194
  %v205 = vpack.c.b16 %v197, %v196
  %214 = vmatprep.subr.bf16.mxu0 0
  %215 = vmatpush1.bf16.msra.mxu0 %v198
  %216 = vmatprep.subr.bf16.mxu0 0
  %217 = vmatpush1.bf16.msra.mxu0 %v199
  %218 = vmatprep.subr.bf16.mxu0 0
  %219 = vmatpush1.bf16.msra.mxu0 %v200
  %220 = vmatprep.subr.bf16.mxu0 0
  %221 = vmatpush1.bf16.msra.mxu0 %v201
  %222 = vmatprep.subr.bf16.mxu0 0
  %223 = vmatpush1.bf16.msra.mxu0 %v202
  %224 = vmatprep.subr.bf16.mxu0 0
  %225 = vmatpush1.bf16.msra.mxu0 %v203
  %226 = vmatprep.subr.bf16.mxu0 0
  %227 = vmatpush1.bf16.msra.mxu0 %v204
  %228 = vmatprep.subr.bf16.mxu0 0
  %229 = vmatpush1.bf16.msra.mxu0 %v205
  %230 = vmatprep.subr.bf16.mxu0 0
  %231 = vmatpush1.bf16.msra.mxu0 0
  %232 = vmatprep.subr.bf16.mxu0 0
  %233 = vmatpush1.bf16.msra.mxu0 0
  %234 = vmatprep.subr.bf16.mxu0 0
  %235 = vmatpush1.bf16.msra.mxu0 0
  %236 = vmatprep.subr.bf16.mxu0 0
  %237 = vmatpush1.bf16.msra.mxu0 0
  %238 = vmatprep.subr.bf16.mxu0 0
  %239 = vmatpush1.bf16.msra.mxu0 0
  %240 = vmatprep.subr.bf16.mxu0 0
  %241 = vmatpush1.bf16.msra.mxu0 0
  %242 = vmatprep.subr.bf16.mxu0 0
  %243 = vmatpush1.bf16.msra.mxu0 0
  %244 = vmatprep.subr.bf16.mxu0 0
  %245 = vmatpush1.bf16.msra.mxu0 0
  %246 = vmatprep.mubr.bf16.mxu0 0
  %247 = vmatmul.mubr.bf16.gmra.mrb[0].mxu0 %v134
  %v248 = vpop.f32.mrb[0].mxu0
  %v249 = vadd.f32 %v68, %v248
  %v250 = vpop.f32.mrb[0].mxu0
  %v251 = vpop.f32.mrb[0].mxu0
  %v252 = vadd.f32 %v68, %v251
  %v253 = vpop.f32.mrb[0].mxu0
  %254 = vmatprep.mubr.bf16.mxu0 0
  %255 = vmatmul.mubr.bf16.gmra.mrb[0].mxu0 %v135
  %v256 = vpop.f32.mrb[0].mxu0
  %v257 = vadd.f32 %v68, %v256
  %v258 = vpop.f32.mrb[0].mxu0
  %v259 = vpop.f32.mrb[0].mxu0
  %v260 = vadd.f32 %v68, %v259
  %v261 = vpop.f32.mrb[0].mxu0
  %262 = vmatprep.mubr.bf16.mxu0 0
  %263 = vmatmul.mubr.bf16.gmra.mrb[0].mxu0 %v136
  %v264 = vpop.f32.mrb[0].mxu0
  %v265 = vadd.f32 %v68, %v264
  %v266 = vpop.f32.mrb[0].mxu0
  %v267 = vpop.f32.mrb[0].mxu0
  %v268 = vadd.f32 %v68, %v267
  %v269 = vpop.f32.mrb[0].mxu0
  %270 = vmatprep.mubr.bf16.mxu0 0
  %271 = vmatmul.mubr.bf16.gmra.mrb[0].mxu0 %v137
  %v272 = vpop.f32.mrb[0].mxu0
  %v273 = vadd.f32 %v68, %v272
  %v274 = vpop.f32.mrb[0].mxu0
  %v275 = vpop.f32.mrb[0].mxu0
  %v276 = vadd.f32 %v68, %v275
  %v277 = vpop.f32.mrb[0].mxu0
  %278 = vmatprep.mubr.bf16.mxu0 0
  %279 = vmatmul.mubr.bf16.gmra.mrb[0].mxu0 %v138
  %v280 = vpop.f32.mrb[0].mxu0
  %v281 = vadd.f32 %v68, %v280
  %v282 = vpop.f32.mrb[0].mxu0
  %v283 = vpop.f32.mrb[0].mxu0
  %v284 = vadd.f32 %v68, %v283
  %v285 = vpop.f32.mrb[0].mxu0
  %286 = vmatprep.mubr.bf16.mxu0 0
  %287 = vmatmul.mubr.bf16.gmra.mrb[0].mxu0 %v139
  %v288 = vpop.f32.mrb[0].mxu0
  %v289 = vadd.f32 %v68, %v288
  %v290 = vpop.f32.mrb[0].mxu0
  %v291 = vpop.f32.mrb[0].mxu0
  %v292 = vadd.f32 %v68, %v291
  %v293 = vpop.f32.mrb[0].mxu0
  %294 = vmatprep.mubr.bf16.mxu0 0
  %295 = vmatmul.mubr.bf16.gmra.mrb[0].mxu0 %v140
  %v296 = vpop.f32.mrb[0].mxu0
  %v297 = vadd.f32 %v68, %v296
  %v298 = vpop.f32.mrb[0].mxu0
  %v299 = vpop.f32.mrb[0].mxu0
  %v300 = vadd.f32 %v68, %v299
  %v301 = vpop.f32.mrb[0].mxu0
  %302 = vmatprep.mubr.bf16.mxu0 0
  %303 = vmatmul.mubr.bf16.gmra.mrb[0].mxu0 %v141
  %v304 = vpop.f32.mrb[0].mxu0
  %v305 = vadd.f32 %v68, %v304
  %v306 = vpop.f32.mrb[0].mxu0
  %v307 = vpop.f32.mrb[0].mxu0
  %v308 = vadd.f32 %v68, %v307
  %v309 = vpop.f32.mrb[0].mxu0
  %310 = vmatprep.mubr.bf16.mxu0 0
  %311 = vmatmul.mubr.bf16.gmra.mrb[0].mxu0 %v142
  %v312 = vpop.f32.mrb[0].mxu0
  %v313 = vadd.f32 %v68, %v312
  %v314 = vpop.f32.mrb[0].mxu0
  %v315 = vpop.f32.mrb[0].mxu0
  %v316 = vadd.f32 %v68, %v315
  %v317 = vpop.f32.mrb[0].mxu0
  %318 = vmatprep.mubr.bf16.mxu0 0
  %319 = vmatmul.mubr.bf16.gmra.mrb[0].mxu0 %v143
  %v320 = vpop.f32.mrb[0].mxu0
  %v321 = vadd.f32 %v68, %v320
  %v322 = vpop.f32.mrb[0].mxu0
  %v323 = vpop.f32.mrb[0].mxu0
  %v324 = vadd.f32 %v68, %v323
  %v325 = vpop.f32.mrb[0].mxu0
  %326 = vmatprep.mubr.bf16.mxu0 0
  %327 = vmatmul.mubr.bf16.gmra.mrb[0].mxu0 %v144
  %v328 = vpop.f32.mrb[0].mxu0
  %v329 = vadd.f32 %v68, %v328
  %v330 = vpop.f32.mrb[0].mxu0
  %v331 = vpop.f32.mrb[0].mxu0
  %v332 = vadd.f32 %v68, %v331
  %v333 = vpop.f32.mrb[0].mxu0
  %334 = vmatprep.mubr.bf16.mxu0 0
  %335 = vmatmul.mubr.bf16.gmra.mrb[0].mxu0 %v145
  %v336 = vpop.f32.mrb[0].mxu0
  %v337 = vadd.f32 %v68, %v336
  %v338 = vpop.f32.mrb[0].mxu0
  %v339 = vpop.f32.mrb[0].mxu0
  %v340 = vadd.f32 %v68, %v339
  %v341 = vpop.f32.mrb[0].mxu0
  %342 = vmatprep.mubr.bf16.mxu0 0
  %343 = vmatmul.mubr.bf16.gmra.mrb[0].mxu0 %v146
  %v344 = vpop.f32.mrb[0].mxu0
  %v345 = vadd.f32 %v68, %v344
  %v346 = vpop.f32.mrb[0].mxu0
  %v347 = vpop.f32.mrb[0].mxu0
  %v348 = vadd.f32 %v68, %v347
  %v349 = vpop.f32.mrb[0].mxu0
  %350 = vmatprep.mubr.bf16.mxu0 0
  %351 = vmatmul.mubr.bf16.gmra.mrb[0].mxu0 %v147
  %v352 = vpop.f32.mrb[0].mxu0
  %v353 = vadd.f32 %v68, %v352
  %v354 = vpop.f32.mrb[0].mxu0
  %v355 = vpop.f32.mrb[0].mxu0
  %v356 = vadd.f32 %v68, %v355
  %v357 = vpop.f32.mrb[0].mxu0
  %358 = vmatprep.mubr.bf16.mxu0 0
  %359 = vmatmul.mubr.bf16.gmra.mrb[0].mxu0 %v148
  %v360 = vpop.f32.mrb[0].mxu0
  %v361 = vadd.f32 %v68, %v360
  %v362 = vpop.f32.mrb[0].mxu0
  %v363 = vpop.f32.mrb[0].mxu0
  %v364 = vadd.f32 %v68, %v363
  %v365 = vpop.f32.mrb[0].mxu0
  %366 = vmatprep.mubr.bf16.mxu0 0
  %367 = vmatmul.mubr.bf16.gmra.mrb[0].mxu0 %v149
  %v368 = vpop.f32.mrb[0].mxu0
  %v369 = vadd.f32 %v68, %v368
  %v370 = vpop.f32.mrb[0].mxu0
  %v371 = vpop.f32.mrb[0].mxu0
  %v372 = vadd.f32 %v68, %v371
  %v373 = vpop.f32.mrb[0].mxu0
  %374 = vdwg.mxu0
  %vm375 = vcmp.gt.f32.partialorder %v249, 0.0
  %vm376 = vcmp.gt.f32.partialorder %v252, 0.0
  %vm377 = vcmp.gt.f32.partialorder %v257, 0.0
  %vm378 = vcmp.gt.f32.partialorder %v260, 0.0
  %vm379 = vcmp.gt.f32.partialorder %v265, 0.0
  %vm380 = vcmp.gt.f32.partialorder %v268, 0.0
  %vm381 = vcmp.gt.f32.partialorder %v273, 0.0
  %vm382 = vcmp.gt.f32.partialorder %v276, 0.0
  %vm383 = vcmp.gt.f32.partialorder %v281, 0.0
  %vm384 = vcmp.gt.f32.partialorder %v284, 0.0
  %vm385 = vcmp.gt.f32.partialorder %v289, 0.0
  %vm386 = vcmp.gt.f32.partialorder %v292, 0.0
  %vm387 = vcmp.gt.f32.partialorder %v297, 0.0
  %vm388 = vcmp.gt.f32.partialorder %v300, 0.0
  %vm389 = vcmp.gt.f32.partialorder %v305, 0.0
  %vm390 = vcmp.gt.f32.partialorder %v308, 0.0
  %vm391 = vcmp.gt.f32.partialorder %v313, 0.0
  %vm392 = vcmp.gt.f32.partialorder %v316, 0.0
  %vm393 = vcmp.gt.f32.partialorder %v321, 0.0
  %vm394 = vcmp.gt.f32.partialorder %v324, 0.0
  %vm395 = vcmp.gt.f32.partialorder %v329, 0.0
  %vm396 = vcmp.gt.f32.partialorder %v332, 0.0
  %vm397 = vcmp.gt.f32.partialorder %v337, 0.0
  %vm398 = vcmp.gt.f32.partialorder %v340, 0.0
  %vm399 = vcmp.gt.f32.partialorder %v345, 0.0
  %vm400 = vcmp.gt.f32.partialorder %v348, 0.0
  %vm401 = vcmp.gt.f32.partialorder %v353, 0.0
  %vm402 = vcmp.gt.f32.partialorder %v356, 0.0
  %vm403 = vcmp.gt.f32.partialorder %v361, 0.0
  %vm404 = vcmp.gt.f32.partialorder %v364, 0.0
  %vm405 = vcmp.gt.f32.partialorder %v369, 0.0
  %vm406 = vcmp.gt.f32.partialorder %v372, 0.0
  %v407 = vmul.f32 %v249, 0.2
  %v408 = vmul.f32 %v252, 0.2
  %v409 = vmul.f32 %v257, 0.2
  %v410 = vmul.f32 %v260, 0.2
  %v411 = vmul.f32 %v265, 0.2
  %v412 = vmul.f32 %v268, 0.2
  %v413 = vmul.f32 %v273, 0.2
  %v414 = vmul.f32 %v276, 0.2
  %v415 = vmul.f32 %v281, 0.2
  %v416 = vmul.f32 %v284, 0.2
  %v417 = vmul.f32 %v289, 0.2
  %v418 = vmul.f32 %v292, 0.2
  %v419 = vmul.f32 %v297, 0.2
  %v420 = vmul.f32 %v300, 0.2
  %v421 = vmul.f32 %v305, 0.2
  %v422 = vmul.f32 %v308, 0.2
  %v423 = vmul.f32 %v313, 0.2
  %v424 = vmul.f32 %v316, 0.2
  %v425 = vmul.f32 %v321, 0.2
  %v426 = vmul.f32 %v324, 0.2
  %v427 = vmul.f32 %v329, 0.2
  %v428 = vmul.f32 %v332, 0.2
  %v429 = vmul.f32 %v337, 0.2
  %v430 = vmul.f32 %v340, 0.2
  %v431 = vmul.f32 %v345, 0.2
  %v432 = vmul.f32 %v348, 0.2
  %v433 = vmul.f32 %v353, 0.2
  %v434 = vmul.f32 %v356, 0.2
  %v435 = vmul.f32 %v361, 0.2
  %v436 = vmul.f32 %v364, 0.2
  %v437 = vmul.f32 %v369, 0.2
  %v438 = vmul.f32 %v372, 0.2
  %v439 = vsel %vm375, %v249, %v407
  %v440 = vsel %vm376, %v252, %v408
  %v441 = vsel %vm377, %v257, %v409
  %v442 = vsel %vm378, %v260, %v410
  %v443 = vsel %vm379, %v265, %v411
  %v444 = vsel %vm380, %v268, %v412
  %v445 = vsel %vm381, %v273, %v413
  %v446 = vsel %vm382, %v276, %v414
  %v447 = vsel %vm383, %v281, %v415
  %v448 = vsel %vm384, %v284, %v416
  %v449 = vsel %vm385, %v289, %v417
  %v450 = vsel %vm386, %v292, %v418
  %v451 = vsel %vm387, %v297, %v419
  %v452 = vsel %vm388, %v300, %v420
  %v453 = vsel %vm389, %v305, %v421
  %v454 = vsel %vm390, %v308, %v422
  %v455 = vsel %vm391, %v313, %v423
  %v456 = vsel %vm392, %v316, %v424
  %v457 = vsel %vm393, %v321, %v425
  %v458 = vsel %vm394, %v324, %v426
  %v459 = vsel %vm395, %v329, %v427
  %v460 = vsel %vm396, %v332, %v428
  %v461 = vsel %vm397, %v337, %v429
  %v462 = vsel %vm398, %v340, %v430
  %v463 = vsel %vm399, %v345, %v431
  %v464 = vsel %vm400, %v348, %v432
  %v465 = vsel %vm401, %v353, %v433
  %v466 = vsel %vm402, %v356, %v434
  %v467 = vsel %vm403, %v361, %v435
  %v468 = vsel %vm404, %v364, %v436
  %v469 = vsel %vm405, %v369, %v437
  %v470 = vsel %vm406, %v372, %v438
  %v471 = vpack.c.bf16 %v440, %v439
  %v472 = vpack.c.bf16 %v442, %v441
  %v473 = vpack.c.bf16 %v444, %v443
  %v474 = vpack.c.bf16 %v446, %v445
  %v475 = vpack.c.bf16 %v448, %v447
  %v476 = vpack.c.bf16 %v450, %v449
  %v477 = vpack.c.bf16 %v452, %v451
  %v478 = vpack.c.bf16 %v454, %v453
  %v479 = vpack.c.bf16 %v456, %v455
  %v480 = vpack.c.bf16 %v458, %v457
  %v481 = vpack.c.bf16 %v460, %v459
  %v482 = vpack.c.bf16 %v462, %v461
  %v483 = vpack.c.bf16 %v464, %v463
  %v484 = vpack.c.bf16 %v466, %v465
  %v485 = vpack.c.bf16 %v468, %v467
  %v486 = vpack.c.bf16 %v470, %v469
  %v503 = vunpack.c.l.b16 %v471
  %v504 = vunpack.c.h.b16 %v471
  %v505 = vunpack.c.l.b16 %v472
  %v506 = vunpack.c.h.b16 %v472
  %v507 = vunpack.c.l.b16 %v473
  %v508 = vunpack.c.h.b16 %v473
  %v509 = vunpack.c.l.b16 %v474
  %v510 = vunpack.c.h.b16 %v474
  %v511 = vunpack.c.l.b16 %v475
  %v512 = vunpack.c.h.b16 %v475
  %v513 = vunpack.c.l.b16 %v476
  %v514 = vunpack.c.h.b16 %v476
  %v515 = vunpack.c.l.b16 %v477
  %v516 = vunpack.c.h.b16 %v477
  %v517 = vunpack.c.l.b16 %v478
  %v518 = vunpack.c.h.b16 %v478
  %v519 = vunpack.c.l.b16 %v479
  %v520 = vunpack.c.h.b16 %v479
  %v521 = vunpack.c.l.b16 %v480
  %v522 = vunpack.c.h.b16 %v480
  %v523 = vunpack.c.l.b16 %v481
  %v524 = vunpack.c.h.b16 %v481
  %v525 = vunpack.c.l.b16 %v482
  %v526 = vunpack.c.h.b16 %v482
  %v527 = vunpack.c.l.b16 %v483
  %v528 = vunpack.c.h.b16 %v483
  %v529 = vunpack.c.l.b16 %v484
  %v530 = vunpack.c.h.b16 %v484
  %v531 = vunpack.c.l.b16 %v485
  %v532 = vunpack.c.h.b16 %v485
  %v533 = vunpack.c.l.b16 %v486
  %v534 = vunpack.c.h.b16 %v486
  %v535 = vpack.c.b16 %v503, %v503
  %v536 = vpack.c.b16 %v504, %v504
  %v537 = vpack.c.b16 %v505, %v505
  %v538 = vpack.c.b16 %v506, %v506
  %v539 = vpack.c.b16 %v507, %v507
  %v540 = vpack.c.b16 %v508, %v508
  %v541 = vpack.c.b16 %v509, %v509
  %v542 = vpack.c.b16 %v510, %v510
  %v543 = vpack.c.b16 %v511, %v511
  %v544 = vpack.c.b16 %v512, %v512
  %v545 = vpack.c.b16 %v513, %v513
  %v546 = vpack.c.b16 %v514, %v514
  %v547 = vpack.c.b16 %v515, %v515
  %v548 = vpack.c.b16 %v516, %v516
  %v549 = vpack.c.b16 %v517, %v517
  %v550 = vpack.c.b16 %v518, %v518
  %v551 = vpack.c.b16 %v519, %v519
  %v552 = vpack.c.b16 %v520, %v520
  %v553 = vpack.c.b16 %v521, %v521
  %v554 = vpack.c.b16 %v522, %v522
  %v555 = vpack.c.b16 %v523, %v523
  %v556 = vpack.c.b16 %v524, %v524
  %v557 = vpack.c.b16 %v525, %v525
  %v558 = vpack.c.b16 %v526, %v526
  %v559 = vpack.c.b16 %v527, %v527
  %v560 = vpack.c.b16 %v528, %v528
  %v561 = vpack.c.b16 %v529, %v529
  %v562 = vpack.c.b16 %v530, %v530
  %v563 = vpack.c.b16 %v531, %v531
  %v564 = vpack.c.b16 %v532, %v532
  %v565 = vpack.c.b16 %v533, %v533
  %v566 = vpack.c.b16 %v534, %v534
  %599 = vst [vmem:[%s3] sm:$0xf] %v535
  %600 = vst [vmem:[%s3 + $0x4] sm:$0xf] %v536
  %601 = vst [vmem:[%s3 + $0x8] sm:$0xf] %v537
  %602 = vst [vmem:[%s3 + $0xc] sm:$0xf] %v538
  %603 = vst [vmem:[%s3 + $0x10] sm:$0xf] %v539
  %604 = vst [vmem:[%s3 + $0x14] sm:$0xf] %v540
  %605 = vst [vmem:[%s3 + $0x18] sm:$0xf] %v541
  %606 = vst [vmem:[%s3 + $0x1c] sm:$0xf] %v542
  %607 = vst [vmem:[%s3 + $0x20] sm:$0xf] %v543
  %608 = vst [vmem:[%s3 + $0x24] sm:$0xf] %v544
  %609 = vst [vmem:[%s3 + $0x28] sm:$0xf] %v545
  %610 = vst [vmem:[%s3 + $0x2c] sm:$0xf] %v546
  %611 = vst [vmem:[%s3 + $0x30] sm:$0xf] %v547
  %612 = vst [vmem:[%s3 + $0x34] sm:$0xf] %v548
  %613 = vst [vmem:[%s3 + $0x38] sm:$0xf] %v549
  %614 = vst [vmem:[%s3 + $0x3c] sm:$0xf] %v550
  %615 = vst [vmem:[%s3 + $0x40] sm:$0xf] %v551
  %616 = vst [vmem:[%s3 + $0x44] sm:$0xf] %v552
  %617 = vst [vmem:[%s3 + $0x48] sm:$0xf] %v553
  %618 = vst [vmem:[%s3 + $0x4c] sm:$0xf] %v554
  %619 = vst [vmem:[%s3 + $0x50] sm:$0xf] %v555
  %620 = vst [vmem:[%s3 + $0x54] sm:$0xf] %v556
  %621 = vst [vmem:[%s3 + $0x58] sm:$0xf] %v557
  %622 = vst [vmem:[%s3 + $0x5c] sm:$0xf] %v558
  %623 = vst [vmem:[%s3 + $0x60] sm:$0xf] %v559
  %624 = vst [vmem:[%s3 + $0x64] sm:$0xf] %v560
  %625 = vst [vmem:[%s3 + $0x68] sm:$0xf] %v561
  %626 = vst [vmem:[%s3 + $0x6c] sm:$0xf] %v562
  %627 = vst [vmem:[%s3 + $0x70] sm:$0xf] %v563
  %628 = vst [vmem:[%s3 + $0x74] sm:$0xf] %v564
  %629 = vst [vmem:[%s3 + $0x78] sm:$0xf] %v565
  %630 = vst [vmem:[%s3 + $0x7c] sm:$0xf] %v566
  // Predicated region
  $region14: #{discriminator_sn_forward.3} parent=0 // pred_check
    _
  $region15: #{discriminator_sn_forward.3} parent=0 // pred_check_branch
    %632 = sbr.rel (0) target = $region17
  $region16: #{discriminator_sn_forward.3} parent=0 // pred_region
    _
  $region17: #{discriminator_sn_forward.3} parent=0 // pred_fallthru
    _
  // Predicated region
  $region18: #{discriminator_sn_forward.3} parent=0 // pred_check
    _
  $region19: #{discriminator_sn_forward.3} parent=0 // pred_check_branch
    %634 = sbr.rel (0) target = $region21
  $region20: #{discriminator_sn_forward.3} parent=0 // pred_region
    _
  $region21: #{discriminator_sn_forward.3} parent=0 // pred_fallthru
    _

// kernel: discriminator_sn_forward.4
$region0: #{discriminator_sn_forward.4}
  #allocation0 [shape = 'u32[]', space=smem, size = 0x4, offset = 0x4, fixed_abs, tag = 'smem constant byte address 0x4 - core index']
  #allocation1 [shape = 'u32[144,128]{1,0:T(1,128)}', space=vmem, size = 0x12000, scoped, tag = 'internal scratch']
  #allocation2 [shape = 'f32[128,128]{1,0:T(8,128)}', space=vmem, size = 0x10000, scoped, tag = 'scratch operand']
  #allocation3 [shape = 'f32[1,128]{1,0:T(1,128)}', space=vmem, size = 0x200, scoped, tag = 'scratch operand']
  #allocation4 [shape = 'f32[1,128]{1,0:T(1,128)}', space=vmem, size = 0x200, scoped, tag = 'scratch operand']
  %s0 = inlined_call_operand.vmem [shape: bf16[128,1024], index: 0, kind: input, shape index: {}]
  %s1 = inlined_call_operand.vmem [shape: bf16[1024,128], index: 1, kind: input, shape index: {}]
  %s2 = inlined_call_operand.vmem [shape: f32[1,128], index: 2, kind: input, shape index: {}]
  %s3 = inlined_call_operand.vmem [shape: f32[1,128], index: 3, kind: input, shape index: {}]
  %s4 = inlined_call_operand.vmem [shape: bf16[128,128], index: 4, kind: output, shape index: {}]
  %s5 = sld [smem:[#allocation0]]
  $region34: #{discriminator_sn_forward.4} parent=0
    _
  %s7 = ssub.s32 1, %s5
  %s8 = scalar_select 0, %s7, %s5
  // Predicated region
  $region2: #{discriminator_sn_forward.4} parent=0 // pred_check
    _
  $region3: #{discriminator_sn_forward.4} parent=0 // pred_check_branch
    %10 = sbr.rel (0) target = $region5
  $region4: #{discriminator_sn_forward.4} parent=0 // pred_region
    _
  $region5: #{discriminator_sn_forward.4} parent=0 // pred_fallthru
    _
  // Predicated region
  $region6: #{discriminator_sn_forward.4} parent=0 // pred_check
    _
  $region7: #{discriminator_sn_forward.4} parent=0 // pred_check_branch
    %12 = sbr.rel (0) target = $region9
  $region8: #{discriminator_sn_forward.4} parent=0 // pred_region
    _
  $region9: #{discriminator_sn_forward.4} parent=0 // pred_fallthru
    _
  // Predicated region
  $region10: #{discriminator_sn_forward.4} parent=0 // pred_check
    _
  $region11: #{discriminator_sn_forward.4} parent=0 // pred_check_branch
    %14 = sbr.rel (0) target = $region13
  $region12: #{discriminator_sn_forward.4} parent=0 // pred_region
    _
  $region13: #{discriminator_sn_forward.4} parent=0 // pred_fallthru
    _
  // Predicated region
  $region14: #{discriminator_sn_forward.4} parent=0 // pred_check
    _
  $region15: #{discriminator_sn_forward.4} parent=0 // pred_check_branch
    %16 = sbr.rel (0) target = $region17
  $region16: #{discriminator_sn_forward.4} parent=0 // pred_region
    _
  $region17: #{discriminator_sn_forward.4} parent=0 // pred_fallthru
    _
  %v18 = vld [vmem:[%s0] sm:$0xff]
  %v19 = vld [vmem:[%s0 + $0x8] sm:$0xff]
  %v20 = vld [vmem:[%s0 + $0x10] sm:$0xff]
  %v21 = vld [vmem:[%s0 + $0x18] sm:$0xff]
  %v22 = vld [vmem:[%s0 + $0x20] sm:$0xff]
  %v23 = vld [vmem:[%s0 + $0x28] sm:$0xff]
  %v24 = vld [vmem:[%s0 + $0x30] sm:$0xff]
  %v25 = vld [vmem:[%s0 + $0x38] sm:$0xff]
  %v26 = vld [vmem:[%s0 + $0x40] sm:$0xff]
  %v27 = vld [vmem:[%s0 + $0x48] sm:$0xff]
  %v28 = vld [vmem:[%s0 + $0x50] sm:$0xff]
  %v29 = vld [vmem:[%s0 + $0x58] sm:$0xff]
  %v30 = vld [vmem:[%s0 + $0x60] sm:$0xff]
  %v31 = vld [vmem:[%s0 + $0x68] sm:$0xff]
  %v32 = vld [vmem:[%s0 + $0x70] sm:$0xff]
  %v33 = vld [vmem:[%s0 + $0x78] sm:$0xff]
  %v34 = vld [vmem:[%s0 + $0x80] sm:$0xff]
  %v35 = vld [vmem:[%s0 + $0x88] sm:$0xff]
  %v36 = vld [vmem:[%s0 + $0x90] sm:$0xff]
  %v37 = vld [vmem:[%s0 + $0x98] sm:$0xff]
  %v38 = vld [vmem:[%s0 + $0xa0] sm:$0xff]
  %v39 = vld [vmem:[%s0 + $0xa8] sm:$0xff]
  %v40 = vld [vmem:[%s0 + $0xb0] sm:$0xff]
  %v41 = vld [vmem:[%s0 + $0xb8] sm:$0xff]
  %v42 = vld [vmem:[%s0 + $0xc0] sm:$0xff]
  %v43 = vld [vmem:[%s0 + $0xc8] sm:$0xff]
  %v44 = vld [vmem:[%s0 + $0xd0] sm:$0xff]
  %v45 = vld [vmem:[%s0 + $0xd8] sm:$0xff]
  %v46 = vld [vmem:[%s0 + $0xe0] sm:$0xff]
  %v47 = vld [vmem:[%s0 + $0xe8] sm:$0xff]
  %v48 = vld [vmem:[%s0 + $0xf0] sm:$0xff]
  %v49 = vld [vmem:[%s0 + $0xf8] sm:$0xff]
  %v50 = vld [vmem:[%s0 + $0x100] sm:$0xff]
  %v51 = vld [vmem:[%s0 + $0x108] sm:$0xff]
  %v52 = vld [vmem:[%s0 + $0x110] sm:$0xff]
  %v53 = vld [vmem:[%s0 + $0x118] sm:$0xff]
  %v54 = vld [vmem:[%s0 + $0x120] sm:$0xff]
  %v55 = vld [vmem:[%s0 + $0x128] sm:$0xff]
  %v56 = vld [vmem:[%s0 + $0x130] sm:$0xff]
  %v57 = vld [vmem:[%s0 + $0x138] sm:$0xff]
  %v58 = vld [vmem:[%s0 + $0x140] sm:$0xff]
  %v59 = vld [vmem:[%s0 + $0x148] sm:$0xff]
  %v60 = vld [vmem:[%s0 + $0x150] sm:$0xff]
  %v61 = vld [vmem:[%s0 + $0x158] sm:$0xff]
  %v62 = vld [vmem:[%s0 + $0x160] sm:$0xff]
  %v63 = vld [vmem:[%s0 + $0x168] sm:$0xff]
  %v64 = vld [vmem:[%s0 + $0x170] sm:$0xff]
  %v65 = vld [vmem:[%s0 + $0x178] sm:$0xff]
  %v66 = vld [vmem:[%s0 + $0x180] sm:$0xff]
  %v67 = vld [vmem:[%s0 + $0x188] sm:$0xff]
  %v68 = vld [vmem:[%s0 + $0x190] sm:$0xff]
  %v69 = vld [vmem:[%s0 + $0x198] sm:$0xff]
  %v70 = vld [vmem:[%s0 + $0x1a0] sm:$0xff]
  %v71 = vld [vmem:[%s0 + $0x1a8] sm:$0xff]
  %v72 = vld [vmem:[%s0 + $0x1b0] sm:$0xff]
  %v73 = vld [vmem:[%s0 + $0x1b8] sm:$0xff]
  %v74 = vld [vmem:[%s0 + $0x1c0] sm:$0xff]
  %v75 = vld [vmem:[%s0 + $0x1c8] sm:$0xff]
  %v76 = vld [vmem:[%s0 + $0x1d0] sm:$0xff]
  %v77 = vld [vmem:[%s0 + $0x1d8] sm:$0xff]
  %v78 = vld [vmem:[%s0 + $0x1e0] sm:$0xff]
  %v79 = vld [vmem:[%s0 + $0x1e8] sm:$0xff]
  %v80 = vld [vmem:[%s0 + $0x1f0] sm:$0xff]
  %v81 = vld [vmem:[%s0 + $0x1f8] sm:$0xff]
  %v82 = vld [vmem:[%s1] sm:$0xf]
  %v83 = vld [vmem:[%s1 + $0x4] sm:$0xf]
  %v84 = vld [vmem:[%s1 + $0x8] sm:$0xf]
  %v85 = vld [vmem:[%s1 + $0xc] sm:$0xf]
  %v86 = vld [vmem:[%s1 + $0x10] sm:$0xf]
  %v87 = vld [vmem:[%s1 + $0x14] sm:$0xf]
  %v88 = vld [vmem:[%s1 + $0x18] sm:$0xf]
  %v89 = vld [vmem:[%s1 + $0x1c] sm:$0xf]
  %v90 = vld [vmem:[%s1 + $0x20] sm:$0xf]
  %v91 = vld [vmem:[%s1 + $0x24] sm:$0xf]
  %v92 = vld [vmem:[%s1 + $0x28] sm:$0xf]
  %v93 = vld [vmem:[%s1 + $0x2c] sm:$0xf]
  %v94 = vld [vmem:[%s1 + $0x30] sm:$0xf]
  %v95 = vld [vmem:[%s1 + $0x34] sm:$0xf]
  %v96 = vld [vmem:[%s1 + $0x38] sm:$0xf]
  %v97 = vld [vmem:[%s1 + $0x3c] sm:$0xf]
  %v98 = vld [vmem:[%s1 + $0x40] sm:$0xf]
  %v99 = vld [vmem:[%s1 + $0x44] sm:$0xf]
  %v100 = vld [vmem:[%s1 + $0x48] sm:$0xf]
  %v101 = vld [vmem:[%s1 + $0x4c] sm:$0xf]
  %v102 = vld [vmem:[%s1 + $0x50] sm:$0xf]
  %v103 = vld [vmem:[%s1 + $0x54] sm:$0xf]
  %v104 = vld [vmem:[%s1 + $0x58] sm:$0xf]
  %v105 = vld [vmem:[%s1 + $0x5c] sm:$0xf]
  %v106 = vld [vmem:[%s1 + $0x60] sm:$0xf]
  %v107 = vld [vmem:[%s1 + $0x64] sm:$0xf]
  %v108 = vld [vmem:[%s1 + $0x68] sm:$0xf]
  %v109 = vld [vmem:[%s1 + $0x6c] sm:$0xf]
  %v110 = vld [vmem:[%s1 + $0x70] sm:$0xf]
  %v111 = vld [vmem:[%s1 + $0x74] sm:$0xf]
  %v112 = vld [vmem:[%s1 + $0x78] sm:$0xf]
  %v113 = vld [vmem:[%s1 + $0x7c] sm:$0xf]
  %v114 = vld [vmem:[%s1 + $0x80] sm:$0xf]
  %v115 = vld [vmem:[%s1 + $0x84] sm:$0xf]
  %v116 = vld [vmem:[%s1 + $0x88] sm:$0xf]
  %v117 = vld [vmem:[%s1 + $0x8c] sm:$0xf]
  %v118 = vld [vmem:[%s1 + $0x90] sm:$0xf]
  %v119 = vld [vmem:[%s1 + $0x94] sm:$0xf]
  %v120 = vld [vmem:[%s1 + $0x98] sm:$0xf]
  %v121 = vld [vmem:[%s1 + $0x9c] sm:$0xf]
  %v122 = vld [vmem:[%s1 + $0xa0] sm:$0xf]
  %v123 = vld [vmem:[%s1 + $0xa4] sm:$0xf]
  %v124 = vld [vmem:[%s1 + $0xa8] sm:$0xf]
  %v125 = vld [vmem:[%s1 + $0xac] sm:$0xf]
  %v126 = vld [vmem:[%s1 + $0xb0] sm:$0xf]
  %v127 = vld [vmem:[%s1 + $0xb4] sm:$0xf]
  %v128 = vld [vmem:[%s1 + $0xb8] sm:$0xf]
  %v129 = vld [vmem:[%s1 + $0xbc] sm:$0xf]
  %v130 = vld [vmem:[%s1 + $0xc0] sm:$0xf]
  %v131 = vld [vmem:[%s1 + $0xc4] sm:$0xf]
  %v132 = vld [vmem:[%s1 + $0xc8] sm:$0xf]
  %v133 = vld [vmem:[%s1 + $0xcc] sm:$0xf]
  %v134 = vld [vmem:[%s1 + $0xd0] sm:$0xf]
  %v135 = vld [vmem:[%s1 + $0xd4] sm:$0xf]
  %v136 = vld [vmem:[%s1 + $0xd8] sm:$0xf]
  %v137 = vld [vmem:[%s1 + $0xdc] sm:$0xf]
  %v138 = vld [vmem:[%s1 + $0xe0] sm:$0xf]
  %v139 = vld [vmem:[%s1 + $0xe4] sm:$0xf]
  %v140 = vld [vmem:[%s1 + $0xe8] sm:$0xf]
  %v141 = vld [vmem:[%s1 + $0xec] sm:$0xf]
  %v142 = vld [vmem:[%s1 + $0xf0] sm:$0xf]
  %v143 = vld [vmem:[%s1 + $0xf4] sm:$0xf]
  %v144 = vld [vmem:[%s1 + $0xf8] sm:$0xf]
  %v145 = vld [vmem:[%s1 + $0xfc] sm:$0xf]
  %v146 = vld [vmem:[%s1 + $0x100] sm:$0xf]
  %v147 = vld [vmem:[%s1 + $0x104] sm:$0xf]
  %v148 = vld [vmem:[%s1 + $0x108] sm:$0xf]
  %v149 = vld [vmem:[%s1 + $0x10c] sm:$0xf]
  %v150 = vld [vmem:[%s1 + $0x110] sm:$0xf]
  %v151 = vld [vmem:[%s1 + $0x114] sm:$0xf]
  %v152 = vld [vmem:[%s1 + $0x118] sm:$0xf]
  %v153 = vld [vmem:[%s1 + $0x11c] sm:$0xf]
  %v154 = vld [vmem:[%s1 + $0x120] sm:$0xf]
  %v155 = vld [vmem:[%s1 + $0x124] sm:$0xf]
  %v156 = vld [vmem:[%s1 + $0x128] sm:$0xf]
  %v157 = vld [vmem:[%s1 + $0x12c] sm:$0xf]
  %v158 = vld [vmem:[%s1 + $0x130] sm:$0xf]
  %v159 = vld [vmem:[%s1 + $0x134] sm:$0xf]
  %v160 = vld [vmem:[%s1 + $0x138] sm:$0xf]
  %v161 = vld [vmem:[%s1 + $0x13c] sm:$0xf]
  %v162 = vld [vmem:[%s1 + $0x140] sm:$0xf]
  %v163 = vld [vmem:[%s1 + $0x144] sm:$0xf]
  %v164 = vld [vmem:[%s1 + $0x148] sm:$0xf]
  %v165 = vld [vmem:[%s1 + $0x14c] sm:$0xf]
  %v166 = vld [vmem:[%s1 + $0x150] sm:$0xf]
  %v167 = vld [vmem:[%s1 + $0x154] sm:$0xf]
  %v168 = vld [vmem:[%s1 + $0x158] sm:$0xf]
  %v169 = vld [vmem:[%s1 + $0x15c] sm:$0xf]
  %v170 = vld [vmem:[%s1 + $0x160] sm:$0xf]
  %v171 = vld [vmem:[%s1 + $0x164] sm:$0xf]
  %v172 = vld [vmem:[%s1 + $0x168] sm:$0xf]
  %v173 = vld [vmem:[%s1 + $0x16c] sm:$0xf]
  %v174 = vld [vmem:[%s1 + $0x170] sm:$0xf]
  %v175 = vld [vmem:[%s1 + $0x174] sm:$0xf]
  %v176 = vld [vmem:[%s1 + $0x178] sm:$0xf]
  %v177 = vld [vmem:[%s1 + $0x17c] sm:$0xf]
  %v178 = vld [vmem:[%s1 + $0x180] sm:$0xf]
  %v179 = vld [vmem:[%s1 + $0x184] sm:$0xf]
  %v180 = vld [vmem:[%s1 + $0x188] sm:$0xf]
  %v181 = vld [vmem:[%s1 + $0x18c] sm:$0xf]
  %v182 = vld [vmem:[%s1 + $0x190] sm:$0xf]
  %v183 = vld [vmem:[%s1 + $0x194] sm:$0xf]
  %v184 = vld [vmem:[%s1 + $0x198] sm:$0xf]
  %v185 = vld [vmem:[%s1 + $0x19c] sm:$0xf]
  %v186 = vld [vmem:[%s1 + $0x1a0] sm:$0xf]
  %v187 = vld [vmem:[%s1 + $0x1a4] sm:$0xf]
  %v188 = vld [vmem:[%s1 + $0x1a8] sm:$0xf]
  %v189 = vld [vmem:[%s1 + $0x1ac] sm:$0xf]
  %v190 = vld [vmem:[%s1 + $0x1b0] sm:$0xf]
  %v191 = vld [vmem:[%s1 + $0x1b4] sm:$0xf]
  %v192 = vld [vmem:[%s1 + $0x1b8] sm:$0xf]
  %v193 = vld [vmem:[%s1 + $0x1bc] sm:$0xf]
  %v194 = vld [vmem:[%s1 + $0x1c0] sm:$0xf]
  %v195 = vld [vmem:[%s1 + $0x1c4] sm:$0xf]
  %v196 = vld [vmem:[%s1 + $0x1c8] sm:$0xf]
  %v197 = vld [vmem:[%s1 + $0x1cc] sm:$0xf]
  %v198 = vld [vmem:[%s1 + $0x1d0] sm:$0xf]
  %v199 = vld [vmem:[%s1 + $0x1d4] sm:$0xf]
  %v200 = vld [vmem:[%s1 + $0x1d8] sm:$0xf]
  %v201 = vld [vmem:[%s1 + $0x1dc] sm:$0xf]
  %v202 = vld [vmem:[%s1 + $0x1e0] sm:$0xf]
  %v203 = vld [vmem:[%s1 + $0x1e4] sm:$0xf]
  %v204 = vld [vmem:[%s1 + $0x1e8] sm:$0xf]
  %v205 = vld [vmem:[%s1 + $0x1ec] sm:$0xf]
  %v206 = vld [vmem:[%s1 + $0x1f0] sm:$0xf]
  %v207 = vld [vmem:[%s1 + $0x1f4] sm:$0xf]
  %v208 = vld [vmem:[%s1 + $0x1f8] sm:$0xf]
  %v209 = vld [vmem:[%s1 + $0x1fc] sm:$0xf]
  %v274 = vunpack.c.l.b16 %v18
  %v275 = vunpack.c.h.b16 %v18
  %v276 = vunpack.c.l.b16 %v19
  %v277 = vunpack.c.h.b16 %v19
  %v278 = vunpack.c.l.b16 %v20
  %v279 = vunpack.c.h.b16 %v20
  %v280 = vunpack.c.l.b16 %v21
  %v281 = vunpack.c.h.b16 %v21
  %v282 = vunpack.c.l.b16 %v22
  %v283 = vunpack.c.h.b16 %v22
  %v284 = vunpack.c.l.b16 %v23
  %v285 = vunpack.c.h.b16 %v23
  %v286 = vunpack.c.l.b16 %v24
  %v287 = vunpack.c.h.b16 %v24
  %v288 = vunpack.c.l.b16 %v25
  %v289 = vunpack.c.h.b16 %v25
  %v290 = vunpack.c.l.b16 %v26
  %v291 = vunpack.c.h.b16 %v26
  %v292 = vunpack.c.l.b16 %v27
  %v293 = vunpack.c.h.b16 %v27
  %v294 = vunpack.c.l.b16 %v28
  %v295 = vunpack.c.h.b16 %v28
  %v296 = vunpack.c.l.b16 %v29
  %v297 = vunpack.c.h.b16 %v29
  %v298 = vunpack.c.l.b16 %v30
  %v299 = vunpack.c.h.b16 %v30
  %v300 = vunpack.c.l.b16 %v31
  %v301 = vunpack.c.h.b16 %v31
  %v302 = vunpack.c.l.b16 %v32
  %v303 = vunpack.c.h.b16 %v32
  %v304 = vunpack.c.l.b16 %v33
  %v305 = vunpack.c.h.b16 %v33
  %v306 = vunpack.c.l.b16 %v34
  %v307 = vunpack.c.h.b16 %v34
  %v308 = vunpack.c.l.b16 %v35
  %v309 = vunpack.c.h.b16 %v35
  %v310 = vunpack.c.l.b16 %v36
  %v311 = vunpack.c.h.b16 %v36
  %v312 = vunpack.c.l.b16 %v37
  %v313 = vunpack.c.h.b16 %v37
  %v314 = vunpack.c.l.b16 %v38
  %v315 = vunpack.c.h.b16 %v38
  %v316 = vunpack.c.l.b16 %v39
  %v317 = vunpack.c.h.b16 %v39
  %v318 = vunpack.c.l.b16 %v40
  %v319 = vunpack.c.h.b16 %v40
  %v320 = vunpack.c.l.b16 %v41
  %v321 = vunpack.c.h.b16 %v41
  %v322 = vunpack.c.l.b16 %v42
  %v323 = vunpack.c.h.b16 %v42
  %v324 = vunpack.c.l.b16 %v43
  %v325 = vunpack.c.h.b16 %v43
  %v326 = vunpack.c.l.b16 %v44
  %v327 = vunpack.c.h.b16 %v44
  %v328 = vunpack.c.l.b16 %v45
  %v329 = vunpack.c.h.b16 %v45
  %v330 = vunpack.c.l.b16 %v46
  %v331 = vunpack.c.h.b16 %v46
  %v332 = vunpack.c.l.b16 %v47
  %v333 = vunpack.c.h.b16 %v47
  %v334 = vunpack.c.l.b16 %v48
  %v335 = vunpack.c.h.b16 %v48
  %v336 = vunpack.c.l.b16 %v49
  %v337 = vunpack.c.h.b16 %v49
  %v338 = vunpack.c.l.b16 %v50
  %v339 = vunpack.c.h.b16 %v50
  %v340 = vunpack.c.l.b16 %v51
  %v341 = vunpack.c.h.b16 %v51
  %v342 = vunpack.c.l.b16 %v52
  %v343 = vunpack.c.h.b16 %v52
  %v344 = vunpack.c.l.b16 %v53
  %v345 = vunpack.c.h.b16 %v53
  %v346 = vunpack.c.l.b16 %v54
  %v347 = vunpack.c.h.b16 %v54
  %v348 = vunpack.c.l.b16 %v55
  %v349 = vunpack.c.h.b16 %v55
  %v350 = vunpack.c.l.b16 %v56
  %v351 = vunpack.c.h.b16 %v56
  %v352 = vunpack.c.l.b16 %v57
  %v353 = vunpack.c.h.b16 %v57
  %v354 = vunpack.c.l.b16 %v58
  %v355 = vunpack.c.h.b16 %v58
  %v356 = vunpack.c.l.b16 %v59
  %v357 = vunpack.c.h.b16 %v59
  %v358 = vunpack.c.l.b16 %v60
  %v359 = vunpack.c.h.b16 %v60
  %v360 = vunpack.c.l.b16 %v61
  %v361 = vunpack.c.h.b16 %v61
  %v362 = vunpack.c.l.b16 %v62
  %v363 = vunpack.c.h.b16 %v62
  %v364 = vunpack.c.l.b16 %v63
  %v365 = vunpack.c.h.b16 %v63
  %v366 = vunpack.c.l.b16 %v64
  %v367 = vunpack.c.h.b16 %v64
  %v368 = vunpack.c.l.b16 %v65
  %v369 = vunpack.c.h.b16 %v65
  %v370 = vunpack.c.l.b16 %v66
  %v371 = vunpack.c.h.b16 %v66
  %v372 = vunpack.c.l.b16 %v67
  %v373 = vunpack.c.h.b16 %v67
  %v374 = vunpack.c.l.b16 %v68
  %v375 = vunpack.c.h.b16 %v68
  %v376 = vunpack.c.l.b16 %v69
  %v377 = vunpack.c.h.b16 %v69
  %v378 = vunpack.c.l.b16 %v70
  %v379 = vunpack.c.h.b16 %v70
  %v380 = vunpack.c.l.b16 %v71
  %v381 = vunpack.c.h.b16 %v71
  %v382 = vunpack.c.l.b16 %v72
  %v383 = vunpack.c.h.b16 %v72
  %v384 = vunpack.c.l.b16 %v73
  %v385 = vunpack.c.h.b16 %v73
  %v386 = vunpack.c.l.b16 %v74
  %v387 = vunpack.c.h.b16 %v74
  %v388 = vunpack.c.l.b16 %v75
  %v389 = vunpack.c.h.b16 %v75
  %v390 = vunpack.c.l.b16 %v76
  %v391 = vunpack.c.h.b16 %v76
  %v392 = vunpack.c.l.b16 %v77
  %v393 = vunpack.c.h.b16 %v77
  %v394 = vunpack.c.l.b16 %v78
  %v395 = vunpack.c.h.b16 %v78
  %v396 = vunpack.c.l.b16 %v79
  %v397 = vunpack.c.h.b16 %v79
  %v398 = vunpack.c.l.b16 %v80
  %v399 = vunpack.c.h.b16 %v80
  %v400 = vunpack.c.l.b16 %v81
  %v401 = vunpack.c.h.b16 %v81
  %v402 = vpack.c.b16 %v282, %v274
  %v403 = vpack.c.b16 %v283, %v275
  %v404 = vpack.c.b16 %v284, %v276
  %v405 = vpack.c.b16 %v285, %v277
  %v406 = vpack.c.b16 %v286, %v278
  %v407 = vpack.c.b16 %v287, %v279
  %v408 = vpack.c.b16 %v288, %v280
  %v409 = vpack.c.b16 %v289, %v281
  %v410 = vpack.c.b16 %v298, %v290
  %v411 = vpack.c.b16 %v299, %v291
  %v412 = vpack.c.b16 %v300, %v292
  %v413 = vpack.c.b16 %v301, %v293
  %v414 = vpack.c.b16 %v302, %v294
  %v415 = vpack.c.b16 %v303, %v295
  %v416 = vpack.c.b16 %v304, %v296
  %v417 = vpack.c.b16 %v305, %v297
  %v418 = vpack.c.b16 %v314, %v306
  %v419 = vpack.c.b16 %v315, %v307
  %v420 = vpack.c.b16 %v316, %v308
  %v421 = vpack.c.b16 %v317, %v309
  %v422 = vpack.c.b16 %v318, %v310
  %v423 = vpack.c.b16 %v319, %v311
  %v424 = vpack.c.b16 %v320, %v312
  %v425 = vpack.c.b16 %v321, %v313
  %v426 = vpack.c.b16 %v330, %v322
  %v427 = vpack.c.b16 %v331, %v323
  %v428 = vpack.c.b16 %v332, %v324
  %v429 = vpack.c.b16 %v333, %v325
  %v430 = vpack.c.b16 %v334, %v326
  %v431 = vpack.c.b16 %v335, %v327
  %v432 = vpack.c.b16 %v336, %v328
  %v433 = vpack.c.b16 %v337, %v329
  %v434 = vpack.c.b16 %v346, %v338
  %v435 = vpack.c.b16 %v347, %v339
  %v436 = vpack.c.b16 %v348, %v340
  %v437 = vpack.c.b16 %v349, %v341
  %v438 = vpack.c.b16 %v350, %v342
  %v439 = vpack.c.b16 %v351, %v343
  %v440 = vpack.c.b16 %v352, %v344
  %v441 = vpack.c.b16 %v353, %v345
  %v442 = vpack.c.b16 %v362, %v354
  %v443 = vpack.c.b16 %v363, %v355
  %v444 = vpack.c.b16 %v364, %v356
  %v445 = vpack.c.b16 %v365, %v357
  %v446 = vpack.c.b16 %v366, %v358
  %v447 = vpack.c.b16 %v367, %v359
  %v448 = vpack.c.b16 %v368, %v360
  %v449 = vpack.c.b16 %v369, %v361
  %v450 = vpack.c.b16 %v378, %v370
  %v451 = vpack.c.b16 %v379, %v371
  %v452 = vpack.c.b16 %v380, %v372
  %v453 = vpack.c.b16 %v381, %v373
  %v454 = vpack.c.b16 %v382, %v374
  %v455 = vpack.c.b16 %v383, %v375
  %v456 = vpack.c.b16 %v384, %v376
  %v457 = vpack.c.b16 %v385, %v377
  %v458 = vpack.c.b16 %v394, %v386
  %v459 = vpack.c.b16 %v395, %v387
  %v460 = vpack.c.b16 %v396, %v388
  %v461 = vpack.c.b16 %v397, %v389
  %v462 = vpack.c.b16 %v398, %v390
  %v463 = vpack.c.b16 %v399, %v391
  %v464 = vpack.c.b16 %v400, %v392
  %v465 = vpack.c.b16 %v401, %v393
  %v658 = vunpack.c.l.b16 %v82
  %v659 = vunpack.c.l.b16 %v83
  %v660 = vunpack.c.l.b16 %v84
  %v661 = vunpack.c.l.b16 %v85
  %v662 = vunpack.c.l.b16 %v86
  %v663 = vunpack.c.l.b16 %v87
  %v664 = vunpack.c.l.b16 %v88
  %v665 = vunpack.c.l.b16 %v89
  %v666 = vunpack.c.l.b16 %v90
  %v667 = vunpack.c.l.b16 %v91
  %v668 = vunpack.c.l.b16 %v92
  %v669 = vunpack.c.l.b16 %v93
  %v670 = vunpack.c.l.b16 %v94
  %v671 = vunpack.c.l.b16 %v95
  %v672 = vunpack.c.l.b16 %v96
  %v673 = vunpack.c.l.b16 %v97
  %v674 = vunpack.c.l.b16 %v98
  %v675 = vunpack.c.l.b16 %v99
  %v676 = vunpack.c.l.b16 %v100
  %v677 = vunpack.c.l.b16 %v101
  %v678 = vunpack.c.l.b16 %v102
  %v679 = vunpack.c.l.b16 %v103
  %v680 = vunpack.c.l.b16 %v104
  %v681 = vunpack.c.l.b16 %v105
  %v682 = vunpack.c.l.b16 %v106
  %v683 = vunpack.c.l.b16 %v107
  %v684 = vunpack.c.l.b16 %v108
  %v685 = vunpack.c.l.b16 %v109
  %v686 = vunpack.c.l.b16 %v110
  %v687 = vunpack.c.l.b16 %v111
  %v688 = vunpack.c.l.b16 %v112
  %v689 = vunpack.c.l.b16 %v113
  %v690 = vunpack.c.l.b16 %v114
  %v691 = vunpack.c.l.b16 %v115
  %v692 = vunpack.c.l.b16 %v116
  %v693 = vunpack.c.l.b16 %v117
  %v694 = vunpack.c.l.b16 %v118
  %v695 = vunpack.c.l.b16 %v119
  %v696 = vunpack.c.l.b16 %v120
  %v697 = vunpack.c.l.b16 %v121
  %v698 = vunpack.c.l.b16 %v122
  %v699 = vunpack.c.l.b16 %v123
  %v700 = vunpack.c.l.b16 %v124
  %v701 = vunpack.c.l.b16 %v125
  %v702 = vunpack.c.l.b16 %v126
  %v703 = vunpack.c.l.b16 %v127
  %v704 = vunpack.c.l.b16 %v128
  %v705 = vunpack.c.l.b16 %v129
  %v706 = vunpack.c.l.b16 %v130
  %v707 = vunpack.c.l.b16 %v131
  %v708 = vunpack.c.l.b16 %v132
  %v709 = vunpack.c.l.b16 %v133
  %v710 = vunpack.c.l.b16 %v134
  %v711 = vunpack.c.l.b16 %v135
  %v712 = vunpack.c.l.b16 %v136
  %v713 = vunpack.c.l.b16 %v137
  %v714 = vunpack.c.l.b16 %v138
  %v715 = vunpack.c.l.b16 %v139
  %v716 = vunpack.c.l.b16 %v140
  %v717 = vunpack.c.l.b16 %v141
  %v718 = vunpack.c.l.b16 %v142
  %v719 = vunpack.c.l.b16 %v143
  %v720 = vunpack.c.l.b16 %v144
  %v721 = vunpack.c.l.b16 %v145
  %v722 = vunpack.c.l.b16 %v146
  %v723 = vunpack.c.l.b16 %v147
  %v724 = vunpack.c.l.b16 %v148
  %v725 = vunpack.c.l.b16 %v149
  %v726 = vunpack.c.l.b16 %v150
  %v727 = vunpack.c.l.b16 %v151
  %v728 = vunpack.c.l.b16 %v152
  %v729 = vunpack.c.l.b16 %v153
  %v730 = vunpack.c.l.b16 %v154
  %v731 = vunpack.c.l.b16 %v155
  %v732 = vunpack.c.l.b16 %v156
  %v733 = vunpack.c.l.b16 %v157
  %v734 = vunpack.c.l.b16 %v158
  %v735 = vunpack.c.l.b16 %v159
  %v736 = vunpack.c.l.b16 %v160
  %v737 = vunpack.c.l.b16 %v161
  %v738 = vunpack.c.l.b16 %v162
  %v739 = vunpack.c.l.b16 %v163
  %v740 = vunpack.c.l.b16 %v164
  %v741 = vunpack.c.l.b16 %v165
  %v742 = vunpack.c.l.b16 %v166
  %v743 = vunpack.c.l.b16 %v167
  %v744 = vunpack.c.l.b16 %v168
  %v745 = vunpack.c.l.b16 %v169
  %v746 = vunpack.c.l.b16 %v170
  %v747 = vunpack.c.l.b16 %v171
  %v748 = vunpack.c.l.b16 %v172
  %v749 = vunpack.c.l.b16 %v173
  %v750 = vunpack.c.l.b16 %v174
  %v751 = vunpack.c.l.b16 %v175
  %v752 = vunpack.c.l.b16 %v176
  %v753 = vunpack.c.l.b16 %v177
  %v754 = vunpack.c.l.b16 %v178
  %v755 = vunpack.c.l.b16 %v179
  %v756 = vunpack.c.l.b16 %v180
  %v757 = vunpack.c.l.b16 %v181
  %v758 = vunpack.c.l.b16 %v182
  %v759 = vunpack.c.l.b16 %v183
  %v760 = vunpack.c.l.b16 %v184
  %v761 = vunpack.c.l.b16 %v185
  %v762 = vunpack.c.l.b16 %v186
  %v763 = vunpack.c.l.b16 %v187
  %v764 = vunpack.c.l.b16 %v188
  %v765 = vunpack.c.l.b16 %v189
  %v766 = vunpack.c.l.b16 %v190
  %v767 = vunpack.c.l.b16 %v191
  %v768 = vunpack.c.l.b16 %v192
  %v769 = vunpack.c.l.b16 %v193
  %v770 = vunpack.c.l.b16 %v194
  %v771 = vunpack.c.l.b16 %v195
  %v772 = vunpack.c.l.b16 %v196
  %v773 = vunpack.c.l.b16 %v197
  %v774 = vunpack.c.l.b16 %v198
  %v775 = vunpack.c.l.b16 %v199
  %v776 = vunpack.c.l.b16 %v200
  %v777 = vunpack.c.l.b16 %v201
  %v778 = vunpack.c.l.b16 %v202
  %v779 = vunpack.c.l.b16 %v203
  %v780 = vunpack.c.l.b16 %v204
  %v781 = vunpack.c.l.b16 %v205
  %v782 = vunpack.c.l.b16 %v206
  %v783 = vunpack.c.l.b16 %v207
  %v784 = vunpack.c.l.b16 %v208
  %v785 = vunpack.c.l.b16 %v209
  %v786 = vpack.c.b16 %v659, %v658
  %v787 = vpack.c.b16 %v661, %v660
  %v788 = vpack.c.b16 %v663, %v662
  %v789 = vpack.c.b16 %v665, %v664
  %v790 = vpack.c.b16 %v667, %v666
  %v791 = vpack.c.b16 %v669, %v668
  %v792 = vpack.c.b16 %v671, %v670
  %v793 = vpack.c.b16 %v673, %v672
  %v794 = vpack.c.b16 %v675, %v674
  %v795 = vpack.c.b16 %v677, %v676
  %v796 = vpack.c.b16 %v679, %v678
  %v797 = vpack.c.b16 %v681, %v680
  %v798 = vpack.c.b16 %v683, %v682
  %v799 = vpack.c.b16 %v685, %v684
  %v800 = vpack.c.b16 %v687, %v686
  %v801 = vpack.c.b16 %v689, %v688
  %v802 = vpack.c.b16 %v691, %v690
  %v803 = vpack.c.b16 %v693, %v692
  %v804 = vpack.c.b16 %v695, %v694
  %v805 = vpack.c.b16 %v697, %v696
  %v806 = vpack.c.b16 %v699, %v698
  %v807 = vpack.c.b16 %v701, %v700
  %v808 = vpack.c.b16 %v703, %v702
  %v809 = vpack.c.b16 %v705, %v704
  %v810 = vpack.c.b16 %v707, %v706
  %v811 = vpack.c.b16 %v709, %v708
  %v812 = vpack.c.b16 %v711, %v710
  %v813 = vpack.c.b16 %v713, %v712
  %v814 = vpack.c.b16 %v715, %v714
  %v815 = vpack.c.b16 %v717, %v716
  %v816 = vpack.c.b16 %v719, %v718
  %v817 = vpack.c.b16 %v721, %v720
  %v818 = vpack.c.b16 %v723, %v722
  %v819 = vpack.c.b16 %v725, %v724
  %v820 = vpack.c.b16 %v727, %v726
  %v821 = vpack.c.b16 %v729, %v728
  %v822 = vpack.c.b16 %v731, %v730
  %v823 = vpack.c.b16 %v733, %v732
  %v824 = vpack.c.b16 %v735, %v734
  %v825 = vpack.c.b16 %v737, %v736
  %v826 = vpack.c.b16 %v739, %v738
  %v827 = vpack.c.b16 %v741, %v740
  %v828 = vpack.c.b16 %v743, %v742
  %v829 = vpack.c.b16 %v745, %v744
  %v830 = vpack.c.b16 %v747, %v746
  %v831 = vpack.c.b16 %v749, %v748
  %v832 = vpack.c.b16 %v751, %v750
  %v833 = vpack.c.b16 %v753, %v752
  %v834 = vpack.c.b16 %v755, %v754
  %v835 = vpack.c.b16 %v757, %v756
  %v836 = vpack.c.b16 %v759, %v758
  %v837 = vpack.c.b16 %v761, %v760
  %v838 = vpack.c.b16 %v763, %v762
  %v839 = vpack.c.b16 %v765, %v764
  %v840 = vpack.c.b16 %v767, %v766
  %v841 = vpack.c.b16 %v769, %v768
  %v842 = vpack.c.b16 %v771, %v770
  %v843 = vpack.c.b16 %v773, %v772
  %v844 = vpack.c.b16 %v775, %v774
  %v845 = vpack.c.b16 %v777, %v776
  %v846 = vpack.c.b16 %v779, %v778
  %v847 = vpack.c.b16 %v781, %v780
  %v848 = vpack.c.b16 %v783, %v782
  %v849 = vpack.c.b16 %v785, %v784
  %914 = vmatprep.subr.bf16.mxu0 0
  %915 = vmatpush1.bf16.msra.mxu0 %v786
  %916 = vmatprep.subr.bf16.mxu0 0
  %917 = vmatpush1.bf16.msra.mxu0 %v787
  %918 = vmatprep.subr.bf16.mxu0 0
  %919 = vmatpush1.bf16.msra.mxu0 %v788
  %920 = vmatprep.subr.bf16.mxu0 0
  %921 = vmatpush1.bf16.msra.mxu0 %v789
  %922 = vmatprep.subr.bf16.mxu0 0
  %923 = vmatpush1.bf16.msra.mxu0 %v790
  %924 = vmatprep.subr.bf16.mxu0 0
  %925 = vmatpush1.bf16.msra.mxu0 %v791
  %926 = vmatprep.subr.bf16.mxu0 0
  %927 = vmatpush1.bf16.msra.mxu0 %v792
  %928 = vmatprep.subr.bf16.mxu0 0
  %929 = vmatpush1.bf16.msra.mxu0 %v793
  %930 = vmatprep.subr.bf16.mxu0 0
  %931 = vmatpush1.bf16.msra.mxu0 %v794
  %932 = vmatprep.subr.bf16.mxu0 0
  %933 = vmatpush1.bf16.msra.mxu0 %v795
  %934 = vmatprep.subr.bf16.mxu0 0
  %935 = vmatpush1.bf16.msra.mxu0 %v796
  %936 = vmatprep.subr.bf16.mxu0 0
  %937 = vmatpush1.bf16.msra.mxu0 %v797
  %938 = vmatprep.subr.bf16.mxu0 0
  %939 = vmatpush1.bf16.msra.mxu0 %v798
  %940 = vmatprep.subr.bf16.mxu0 0
  %941 = vmatpush1.bf16.msra.mxu0 %v799
  %942 = vmatprep.subr.bf16.mxu0 0
  %943 = vmatpush1.bf16.msra.mxu0 %v800
  %944 = vmatprep.subr.bf16.mxu0 0
  %945 = vmatpush1.bf16.msra.mxu0 %v801
  %946 = vmatprep.mubr.bf16.mxu0 %v403
  %947 = vmatmul.mubr.bf16.gmra.mrb[0].mxu0 %v402
  %v948 = vpop.f32.mrb[0].mxu0
  %v949 = vadd.f32 0.0, %v948
  %v950 = vpop.f32.mrb[0].mxu0
  %v951 = vpop.f32.mrb[0].mxu0
  %v952 = vadd.f32 0.0, %v951
  %v953 = vpop.f32.mrb[0].mxu0
  %954 = vmatprep.mubr.bf16.mxu0 %v411
  %955 = vmatmul.mubr.bf16.gmra.mrb[0].mxu0 %v410
  %v956 = vpop.f32.mrb[0].mxu0
  %v957 = vadd.f32 0.0, %v956
  %v958 = vpop.f32.mrb[0].mxu0
  %v959 = vpop.f32.mrb[0].mxu0
  %v960 = vadd.f32 0.0, %v959
  %v961 = vpop.f32.mrb[0].mxu0
  %962 = vmatprep.mubr.bf16.mxu0 %v419
  %963 = vmatmul.mubr.bf16.gmra.mrb[0].mxu0 %v418
  %v964 = vpop.f32.mrb[0].mxu0
  %v965 = vadd.f32 0.0, %v964
  %v966 = vpop.f32.mrb[0].mxu0
  %v967 = vpop.f32.mrb[0].mxu0
  %v968 = vadd.f32 0.0, %v967
  %v969 = vpop.f32.mrb[0].mxu0
  %970 = vmatprep.mubr.bf16.mxu0 %v427
  %971 = vmatmul.mubr.bf16.gmra.mrb[0].mxu0 %v426
  %v972 = vpop.f32.mrb[0].mxu0
  %v973 = vadd.f32 0.0, %v972
  %v974 = vpop.f32.mrb[0].mxu0
  %v975 = vpop.f32.mrb[0].mxu0
  %v976 = vadd.f32 0.0, %v975
  %v977 = vpop.f32.mrb[0].mxu0
  %978 = vmatprep.mubr.bf16.mxu0 %v435
  %979 = vmatmul.mubr.bf16.gmra.mrb[0].mxu0 %v434
  %v980 = vpop.f32.mrb[0].mxu0
  %v981 = vadd.f32 0.0, %v980
  %v982 = vpop.f32.mrb[0].mxu0
  %v983 = vpop.f32.mrb[0].mxu0
  %v984 = vadd.f32 0.0, %v983
  %v985 = vpop.f32.mrb[0].mxu0
  %986 = vmatprep.mubr.bf16.mxu0 %v443
  %987 = vmatmul.mubr.bf16.gmra.mrb[0].mxu0 %v442
  %v988 = vpop.f32.mrb[0].mxu0
  %v989 = vadd.f32 0.0, %v988
  %v990 = vpop.f32.mrb[0].mxu0
  %v991 = vpop.f32.mrb[0].mxu0
  %v992 = vadd.f32 0.0, %v991
  %v993 = vpop.f32.mrb[0].mxu0
  %994 = vmatprep.mubr.bf16.mxu0 %v451
  %995 = vmatmul.mubr.bf16.gmra.mrb[0].mxu0 %v450
  %v996 = vpop.f32.mrb[0].mxu0
  %v997 = vadd.f32 0.0, %v996
  %v998 = vpop.f32.mrb[0].mxu0
  %v999 = vpop.f32.mrb[0].mxu0
  %v1000 = vadd.f32 0.0, %v999
  %v1001 = vpop.f32.mrb[0].mxu0
  %1002 = vmatprep.mubr.bf16.mxu0 %v459
  %1003 = vmatmul.mubr.bf16.gmra.mrb[0].mxu0 %v458
  %v1004 = vpop.f32.mrb[0].mxu0
  %v1005 = vadd.f32 0.0, %v1004
  %v1006 = vpop.f32.mrb[0].mxu0
  %v1007 = vpop.f32.mrb[0].mxu0
  %v1008 = vadd.f32 0.0, %v1007
  %v1009 = vpop.f32.mrb[0].mxu0
  %1010 = vdwg.mxu0
  %1011 = vmatprep.subr.bf16.mxu0 0
  %1012 = vmatpush1.bf16.msra.mxu0 %v802
  %1013 = vmatprep.subr.bf16.mxu0 0
  %1014 = vmatpush1.bf16.msra.mxu0 %v803
  %1015 = vmatprep.subr.bf16.mxu0 0
  %1016 = vmatpush1.bf16.msra.mxu0 %v804
  %1017 = vmatprep.subr.bf16.mxu0 0
  %1018 = vmatpush1.bf16.msra.mxu0 %v805
  %1019 = vmatprep.subr.bf16.mxu0 0
  %1020 = vmatpush1.bf16.msra.mxu0 %v806
  %1021 = vmatprep.subr.bf16.mxu0 0
  %1022 = vmatpush1.bf16.msra.mxu0 %v807
  %1023 = vmatprep.subr.bf16.mxu0 0
  %1024 = vmatpush1.bf16.msra.mxu0 %v808
  %1025 = vmatprep.subr.bf16.mxu0 0
  %1026 = vmatpush1.bf16.msra.mxu0 %v809
  %1027 = vmatprep.subr.bf16.mxu0 0
  %1028 = vmatpush1.bf16.msra.mxu0 %v810
  %1029 = vmatprep.subr.bf16.mxu0 0
  %1030 = vmatpush1.bf16.msra.mxu0 %v811
  %1031 = vmatprep.subr.bf16.mxu0 0
  %1032 = vmatpush1.bf16.msra.mxu0 %v812
  %1033 = vmatprep.subr.bf16.mxu0 0
  %1034 = vmatpush1.bf16.msra.mxu0 %v813
  %1035 = vmatprep.subr.bf16.mxu0 0
  %1036 = vmatpush1.bf16.msra.mxu0 %v814
  %1037 = vmatprep.subr.bf16.mxu0 0
  %1038 = vmatpush1.bf16.msra.mxu0 %v815
  %1039 = vmatprep.subr.bf16.mxu0 0
  %1040 = vmatpush1.bf16.msra.mxu0 %v816
  %1041 = vmatprep.subr.bf16.mxu0 0
  %1042 = vmatpush1.bf16.msra.mxu0 %v817
  %1043 = vmatprep.mubr.bf16.mxu0 %v405
  %1044 = vmatmul.mubr.bf16.gmra.mrb[0].mxu0 %v404
  %v1045 = vpop.f32.mrb[0].mxu0
  %v1046 = vadd.f32 %v949, %v1045
  %v1047 = vpop.f32.mrb[0].mxu0
  %v1048 = vpop.f32.mrb[0].mxu0
  %v1049 = vadd.f32 %v952, %v1048
  %v1050 = vpop.f32.mrb[0].mxu0
  %1051 = vmatprep.mubr.bf16.mxu0 %v413
  %1052 = vmatmul.mubr.bf16.gmra.mrb[0].mxu0 %v412
  %v1053 = vpop.f32.mrb[0].mxu0
  %v1054 = vadd.f32 %v957, %v1053
  %v1055 = vpop.f32.mrb[0].mxu0
  %v1056 = vpop.f32.mrb[0].mxu0
  %v1057 = vadd.f32 %v960, %v1056
  %v1058 = vpop.f32.mrb[0].mxu0
  %1059 = vmatprep.mubr.bf16.mxu0 %v421
  %1060 = vmatmul.mubr.bf16.gmra.mrb[0].mxu0 %v420
  %v1061 = vpop.f32.mrb[0].mxu0
  %v1062 = vadd.f32 %v965, %v1061
  %v1063 = vpop.f32.mrb[0].mxu0
  %v1064 = vpop.f32.mrb[0].mxu0
  %v1065 = vadd.f32 %v968, %v1064
  %v1066 = vpop.f32.mrb[0].mxu0
  %1067 = vmatprep.mubr.bf16.mxu0 %v429
  %1068 = vmatmul.mubr.bf16.gmra.mrb[0].mxu0 %v428
  %v1069 = vpop.f32.mrb[0].mxu0
  %v1070 = vadd.f32 %v973, %v1069
  %v1071 = vpop.f32.mrb[0].mxu0
  %v1072 = vpop.f32.mrb[0].mxu0
  %v1073 = vadd.f32 %v976, %v1072
  %v1074 = vpop.f32.mrb[0].mxu0
  %1075 = vmatprep.mubr.bf16.mxu0 %v437
  %1076 = vmatmul.mubr.bf16.gmra.mrb[0].mxu0 %v436
  %v1077 = vpop.f32.mrb[0].mxu0
  %v1078 = vadd.f32 %v981, %v1077
  %v1079 = vpop.f32.mrb[0].mxu0
  %v1080 = vpop.f32.mrb[0].mxu0
  %v1081 = vadd.f32 %v984, %v1080
  %v1082 = vpop.f32.mrb[0].mxu0
  %1083 = vmatprep.mubr.bf16.mxu0 %v445
  %1084 = vmatmul.mubr.bf16.gmra.mrb[0].mxu0 %v444
  %v1085 = vpop.f32.mrb[0].mxu0
  %v1086 = vadd.f32 %v989, %v1085
  %v1087 = vpop.f32.mrb[0].mxu0
  %v1088 = vpop.f32.mrb[0].mxu0
  %v1089 = vadd.f32 %v992, %v1088
  %v1090 = vpop.f32.mrb[0].mxu0
  %1091 = vmatprep.mubr.bf16.mxu0 %v453
  %1092 = vmatmul.mubr.bf16.gmra.mrb[0].mxu0 %v452
  %v1093 = vpop.f32.mrb[0].mxu0
  %v1094 = vadd.f32 %v997, %v1093
  %v1095 = vpop.f32.mrb[0].mxu0
  %v1096 = vpop.f32.mrb[0].mxu0
  %v1097 = vadd.f32 %v1000, %v1096
  %v1098 = vpop.f32.mrb[0].mxu0
  %1099 = vmatprep.mubr.bf16.mxu0 %v461
  %1100 = vmatmul.mubr.bf16.gmra.mrb[0].mxu0 %v460
  %v1101 = vpop.f32.mrb[0].mxu0
  %v1102 = vadd.f32 %v1005, %v1101
  %v1103 = vpop.f32.mrb[0].mxu0
  %v1104 = vpop.f32.mrb[0].mxu0
  %v1105 = vadd.f32 %v1008, %v1104
  %v1106 = vpop.f32.mrb[0].mxu0
  %1107 = vdwg.mxu0
  %1108 = vmatprep.subr.bf16.mxu0 0
  %1109 = vmatpush1.bf16.msra.mxu0 %v818
  %1110 = vmatprep.subr.bf16.mxu0 0
  %1111 = vmatpush1.bf16.msra.mxu0 %v819
  %1112 = vmatprep.subr.bf16.mxu0 0
  %1113 = vmatpush1.bf16.msra.mxu0 %v820
  %1114 = vmatprep.subr.bf16.mxu0 0
  %1115 = vmatpush1.bf16.msra.mxu0 %v821
  %1116 = vmatprep.subr.bf16.mxu0 0
  %1117 = vmatpush1.bf16.msra.mxu0 %v822
  %1118 = vmatprep.subr.bf16.mxu0 0
  %1119 = vmatpush1.bf16.msra.mxu0 %v823
  %1120 = vmatprep.subr.bf16.mxu0 0
  %1121 = vmatpush1.bf16.msra.mxu0 %v824
  %1122 = vmatprep.subr.bf16.mxu0 0
  %1123 = vmatpush1.bf16.msra.mxu0 %v825
  %1124 = vmatprep.subr.bf16.mxu0 0
  %1125 = vmatpush1.bf16.msra.mxu0 %v826
  %1126 = vmatprep.subr.bf16.mxu0 0
  %1127 = vmatpush1.bf16.msra.mxu0 %v827
  %1128 = vmatprep.subr.bf16.mxu0 0
  %1129 = vmatpush1.bf16.msra.mxu0 %v828
  %1130 = vmatprep.subr.bf16.mxu0 0
  %1131 = vmatpush1.bf16.msra.mxu0 %v829
  %1132 = vmatprep.subr.bf16.mxu0 0
  %1133 = vmatpush1.bf16.msra.mxu0 %v830
  %1134 = vmatprep.subr.bf16.mxu0 0
  %1135 = vmatpush1.bf16.msra.mxu0 %v831
  %1136 = vmatprep.subr.bf16.mxu0 0
  %1137 = vmatpush1.bf16.msra.mxu0 %v832
  %1138 = vmatprep.subr.bf16.mxu0 0
  %1139 = vmatpush1.bf16.msra.mxu0 %v833
  %1140 = vmatprep.mubr.bf16.mxu0 %v407
  %1141 = vmatmul.mubr.bf16.gmra.mrb[0].mxu0 %v406
  %v1142 = vpop.f32.mrb[0].mxu0
  %v1143 = vadd.f32 %v1046, %v1142
  %v1144 = vpop.f32.mrb[0].mxu0
  %v1145 = vpop.f32.mrb[0].mxu0
  %v1146 = vadd.f32 %v1049, %v1145
  %v1147 = vpop.f32.mrb[0].mxu0
  %1148 = vmatprep.mubr.bf16.mxu0 %v415
  %1149 = vmatmul.mubr.bf16.gmra.mrb[0].mxu0 %v414
  %v1150 = vpop.f32.mrb[0].mxu0
  %v1151 = vadd.f32 %v1054, %v1150
  %v1152 = vpop.f32.mrb[0].mxu0
  %v1153 = vpop.f32.mrb[0].mxu0
  %v1154 = vadd.f32 %v1057, %v1153
  %v1155 = vpop.f32.mrb[0].mxu0
  %1156 = vmatprep.mubr.bf16.mxu0 %v423
  %1157 = vmatmul.mubr.bf16.gmra.mrb[0].mxu0 %v422
  %v1158 = vpop.f32.mrb[0].mxu0
  %v1159 = vadd.f32 %v1062, %v1158
  %v1160 = vpop.f32.mrb[0].mxu0
  %v1161 = vpop.f32.mrb[0].mxu0
  %v1162 = vadd.f32 %v1065, %v1161
  %v1163 = vpop.f32.mrb[0].mxu0
  %1164 = vmatprep.mubr.bf16.mxu0 %v431
  %1165 = vmatmul.mubr.bf16.gmra.mrb[0].mxu0 %v430
  %v1166 = vpop.f32.mrb[0].mxu0
  %v1167 = vadd.f32 %v1070, %v1166
  %v1168 = vpop.f32.mrb[0].mxu0
  %v1169 = vpop.f32.mrb[0].mxu0
  %v1170 = vadd.f32 %v1073, %v1169
  %v1171 = vpop.f32.mrb[0].mxu0
  %1172 = vmatprep.mubr.bf16.mxu0 %v439
  %1173 = vmatmul.mubr.bf16.gmra.mrb[0].mxu0 %v438
  %v1174 = vpop.f32.mrb[0].mxu0
  %v1175 = vadd.f32 %v1078, %v1174
  %v1176 = vpop.f32.mrb[0].mxu0
  %v1177 = vpop.f32.mrb[0].mxu0
  %v1178 = vadd.f32 %v1081, %v1177
  %v1179 = vpop.f32.mrb[0].mxu0
  %1180 = vmatprep.mubr.bf16.mxu0 %v447
  %1181 = vmatmul.mubr.bf16.gmra.mrb[0].mxu0 %v446
  %v1182 = vpop.f32.mrb[0].mxu0
  %v1183 = vadd.f32 %v1086, %v1182
  %v1184 = vpop.f32.mrb[0].mxu0
  %v1185 = vpop.f32.mrb[0].mxu0
  %v1186 = vadd.f32 %v1089, %v1185
  %v1187 = vpop.f32.mrb[0].mxu0
  %1188 = vmatprep.mubr.bf16.mxu0 %v455
  %1189 = vmatmul.mubr.bf16.gmra.mrb[0].mxu0 %v454
  %v1190 = vpop.f32.mrb[0].mxu0
  %v1191 = vadd.f32 %v1094, %v1190
  %v1192 = vpop.f32.mrb[0].mxu0
  %v1193 = vpop.f32.mrb[0].mxu0
  %v1194 = vadd.f32 %v1097, %v1193
  %v1195 = vpop.f32.mrb[0].mxu0
  %1196 = vmatprep.mubr.bf16.mxu0 %v463
  %1197 = vmatmul.mubr.bf16.gmra.mrb[0].mxu0 %v462
  %v1198 = vpop.f32.mrb[0].mxu0
  %v1199 = vadd.f32 %v1102, %v1198
  %v1200 = vpop.f32.mrb[0].mxu0
  %v1201 = vpop.f32.mrb[0].mxu0
  %v1202 = vadd.f32 %v1105, %v1201
  %v1203 = vpop.f32.mrb[0].mxu0
  %1204 = vdwg.mxu0
  %1205 = vmatprep.subr.bf16.mxu0 0
  %1206 = vmatpush1.bf16.msra.mxu0 %v834
  %1207 = vmatprep.subr.bf16.mxu0 0
  %1208 = vmatpush1.bf16.msra.mxu0 %v835
  %1209 = vmatprep.subr.bf16.mxu0 0
  %1210 = vmatpush1.bf16.msra.mxu0 %v836
  %1211 = vmatprep.subr.bf16.mxu0 0
  %1212 = vmatpush1.bf16.msra.mxu0 %v837
  %1213 = vmatprep.subr.bf16.mxu0 0
  %1214 = vmatpush1.bf16.msra.mxu0 %v838
  %1215 = vmatprep.subr.bf16.mxu0 0
  %1216 = vmatpush1.bf16.msra.mxu0 %v839
  %1217 = vmatprep.subr.bf16.mxu0 0
  %1218 = vmatpush1.bf16.msra.mxu0 %v840
  %1219 = vmatprep.subr.bf16.mxu0 0
  %1220 = vmatpush1.bf16.msra.mxu0 %v841
  %1221 = vmatprep.subr.bf16.mxu0 0
  %1222 = vmatpush1.bf16.msra.mxu0 %v842
  %1223 = vmatprep.subr.bf16.mxu0 0
  %1224 = vmatpush1.bf16.msra.mxu0 %v843
  %1225 = vmatprep.subr.bf16.mxu0 0
  %1226 = vmatpush1.bf16.msra.mxu0 %v844
  %1227 = vmatprep.subr.bf16.mxu0 0
  %1228 = vmatpush1.bf16.msra.mxu0 %v845
  %1229 = vmatprep.subr.bf16.mxu0 0
  %1230 = vmatpush1.bf16.msra.mxu0 %v846
  %1231 = vmatprep.subr.bf16.mxu0 0
  %1232 = vmatpush1.bf16.msra.mxu0 %v847
  %1233 = vmatprep.subr.bf16.mxu0 0
  %1234 = vmatpush1.bf16.msra.mxu0 %v848
  %1235 = vmatprep.subr.bf16.mxu0 0
  %1236 = vmatpush1.bf16.msra.mxu0 %v849
  %1237 = vmatprep.mubr.bf16.mxu0 %v409
  %1238 = vmatmul.mubr.bf16.gmra.mrb[0].mxu0 %v408
  %v1239 = vpop.f32.mrb[0].mxu0
  %v1240 = vadd.f32 %v1143, %v1239
  %v1241 = vpop.f32.mrb[0].mxu0
  %v1242 = vpop.f32.mrb[0].mxu0
  %v1243 = vadd.f32 %v1146, %v1242
  %v1244 = vpop.f32.mrb[0].mxu0
  %1245 = vmatprep.mubr.bf16.mxu0 %v417
  %1246 = vmatmul.mubr.bf16.gmra.mrb[0].mxu0 %v416
  %v1247 = vpop.f32.mrb[0].mxu0
  %v1248 = vadd.f32 %v1151, %v1247
  %v1249 = vpop.f32.mrb[0].mxu0
  %v1250 = vpop.f32.mrb[0].mxu0
  %v1251 = vadd.f32 %v1154, %v1250
  %v1252 = vpop.f32.mrb[0].mxu0
  %1253 = vmatprep.mubr.bf16.mxu0 %v425
  %1254 = vmatmul.mubr.bf16.gmra.mrb[0].mxu0 %v424
  %v1255 = vpop.f32.mrb[0].mxu0
  %v1256 = vadd.f32 %v1159, %v1255
  %v1257 = vpop.f32.mrb[0].mxu0
  %v1258 = vpop.f32.mrb[0].mxu0
  %v1259 = vadd.f32 %v1162, %v1258
  %v1260 = vpop.f32.mrb[0].mxu0
  %1261 = vmatprep.mubr.bf16.mxu0 %v433
  %1262 = vmatmul.mubr.bf16.gmra.mrb[0].mxu0 %v432
  %v1263 = vpop.f32.mrb[0].mxu0
  %v1264 = vadd.f32 %v1167, %v1263
  %v1265 = vpop.f32.mrb[0].mxu0
  %v1266 = vpop.f32.mrb[0].mxu0
  %v1267 = vadd.f32 %v1170, %v1266
  %v1268 = vpop.f32.mrb[0].mxu0
  %1269 = vmatprep.mubr.bf16.mxu0 %v441
  %1270 = vmatmul.mubr.bf16.gmra.mrb[0].mxu0 %v440
  %v1271 = vpop.f32.mrb[0].mxu0
  %v1272 = vadd.f32 %v1175, %v1271
  %v1273 = vpop.f32.mrb[0].mxu0
  %v1274 = vpop.f32.mrb[0].mxu0
  %v1275 = vadd.f32 %v1178, %v1274
  %v1276 = vpop.f32.mrb[0].mxu0
  %1277 = vmatprep.mubr.bf16.mxu0 %v449
  %1278 = vmatmul.mubr.bf16.gmra.mrb[0].mxu0 %v448
  %v1279 = vpop.f32.mrb[0].mxu0
  %v1280 = vadd.f32 %v1183, %v1279
  %v1281 = vpop.f32.mrb[0].mxu0
  %v1282 = vpop.f32.mrb[0].mxu0
  %v1283 = vadd.f32 %v1186, %v1282
  %v1284 = vpop.f32.mrb[0].mxu0
  %1285 = vmatprep.mubr.bf16.mxu0 %v457
  %1286 = vmatmul.mubr.bf16.gmra.mrb[0].mxu0 %v456
  %v1287 = vpop.f32.mrb[0].mxu0
  %v1288 = vadd.f32 %v1191, %v1287
  %v1289 = vpop.f32.mrb[0].mxu0
  %v1290 = vpop.f32.mrb[0].mxu0
  %v1291 = vadd.f32 %v1194, %v1290
  %v1292 = vpop.f32.mrb[0].mxu0
  %1293 = vmatprep.mubr.bf16.mxu0 %v465
  %1294 = vmatmul.mubr.bf16.gmra.mrb[0].mxu0 %v464
  %v1295 = vpop.f32.mrb[0].mxu0
  %v1296 = vadd.f32 %v1199, %v1295
  %v1297 = vpop.f32.mrb[0].mxu0
  %v1298 = vpop.f32.mrb[0].mxu0
  %v1299 = vadd.f32 %v1202, %v1298
  %v1300 = vpop.f32.mrb[0].mxu0
  %1301 = vdwg.mxu0
  %s1302 = smul.u32 0, 128
  %s1303 = scalar_lea.vmem [#allocation2], %s1302
  %1304 = vst [vmem:[%s1303] sm:$0xff] %v1240
  %1305 = vst [vmem:[%s1303 + $0x8] sm:$0xff] %v1243
  %1306 = vst [vmem:[%s1303 + $0x10] sm:$0xff] %v1248
  %1307 = vst [vmem:[%s1303 + $0x18] sm:$0xff] %v1251
  %1308 = vst [vmem:[%s1303 + $0x20] sm:$0xff] %v1256
  %1309 = vst [vmem:[%s1303 + $0x28] sm:$0xff] %v1259
  %1310 = vst [vmem:[%s1303 + $0x30] sm:$0xff] %v1264
  %1311 = vst [vmem:[%s1303 + $0x38] sm:$0xff] %v1267
  %1312 = vst [vmem:[%s1303 + $0x40] sm:$0xff] %v1272
  %1313 = vst [vmem:[%s1303 + $0x48] sm:$0xff] %v1275
  %1314 = vst [vmem:[%s1303 + $0x50] sm:$0xff] %v1280
  %1315 = vst [vmem:[%s1303 + $0x58] sm:$0xff] %v1283
  %1316 = vst [vmem:[%s1303 + $0x60] sm:$0xff] %v1288
  %1317 = vst [vmem:[%s1303 + $0x68] sm:$0xff] %v1291
  %1318 = vst [vmem:[%s1303 + $0x70] sm:$0xff] %v1296
  %1319 = vst [vmem:[%s1303 + $0x78] sm:$0xff] %v1299
  %p1320 = scmp.eq.s32.totalorder 0, 0
  // Predicated region
  $region18: #{discriminator_sn_forward.4} parent=0 // pred_check
    %p1321 = pneg %p1320
  $region19: #{discriminator_sn_forward.4} parent=0 // pred_check_branch
    %1323 = sbr.rel (%p1321) target = $region21
  $region20: #{discriminator_sn_forward.4} parent=0 // pred_region
    %1324 = vst [vmem:[#allocation3] sm:$0x1] 0.0
    %1325 = vst [vmem:[#allocation4] sm:$0x1] 0.0
  $region21: #{discriminator_sn_forward.4} parent=0 // pred_fallthru
    _
  %v1326 = vld [vmem:[#allocation3] sm:$0x1]
  %v1327 = vadd.f32 %v1240, %v1243
  %v1328 = vadd.f32 %v1327, %v1248
  %v1329 = vadd.f32 %v1328, %v1251
  %v1330 = vadd.f32 %v1329, %v1256
  %v1331 = vadd.f32 %v1330, %v1259
  %v1332 = vadd.f32 %v1331, %v1264
  %v1333 = vadd.f32 %v1332, %v1267
  %v1334 = vadd.f32 %v1333, %v1272
  %v1335 = vadd.f32 %v1334, %v1275
  %v1336 = vadd.f32 %v1335, %v1280
  %v1337 = vadd.f32 %v1336, %v1283
  %v1338 = vadd.f32 %v1337, %v1288
  %v1339 = vadd.f32 %v1338, %v1291
  %v1340 = vadd.f32 %v1339, %v1296
  %v1341 = vadd.f32 %v1340, %v1299
  %v1342 = vrot.slane %v1341, 4
  %v1343 = vadd.f32 %v1341, %v1342
  %v1344 = vrot.slane %v1343, 2
  %v1345 = vadd.f32 %v1343, %v1344
  %v1346 = vrot.slane %v1345, 1
  %v1347 = vadd.f32 %v1345, %v1346
  %v1348 = vadd.f32 %v1326, %v1347
  %1349 = vst [vmem:[#allocation3] sm:$0x1] %v1348
  %v1350 = vld [vmem:[#allocation4] sm:$0x1]
  %v1351 = vmul.f32 %v1240, %v1240
  %v1352 = vmul.f32 %v1243, %v1243
  %v1353 = vmul.f32 %v1248, %v1248
  %v1354 = vmul.f32 %v1251, %v1251
  %v1355 = vmul.f32 %v1256, %v1256
  %v1356 = vmul.f32 %v1259, %v1259
  %v1357 = vmul.f32 %v1264, %v1264
  %v1358 = vmul.f32 %v1267, %v1267
  %v1359 = vmul.f32 %v1272, %v1272
  %v1360 = vmul.f32 %v1275, %v1275
  %v1361 = vmul.f32 %v1280, %v1280
  %v1362 = vmul.f32 %v1283, %v1283
  %v1363 = vmul.f32 %v1288, %v1288
  %v1364 = vmul.f32 %v1291, %v1291
  %v1365 = vmul.f32 %v1296, %v1296
  %v1366 = vmul.f32 %v1299, %v1299
  %v1367 = vadd.f32 %v1351, %v1352
  %v1368 = vadd.f32 %v1367, %v1353
  %v1369 = vadd.f32 %v1368, %v1354
  %v1370 = vadd.f32 %v1369, %v1355
  %v1371 = vadd.f32 %v1370, %v1356
  %v1372 = vadd.f32 %v1371, %v1357
  %v1373 = vadd.f32 %v1372, %v1358
  %v1374 = vadd.f32 %v1373, %v1359
  %v1375 = vadd.f32 %v1374, %v1360
  %v1376 = vadd.f32 %v1375, %v1361
  %v1377 = vadd.f32 %v1376, %v1362
  %v1378 = vadd.f32 %v1377, %v1363
  %v1379 = vadd.f32 %v1378, %v1364
  %v1380 = vadd.f32 %v1379, %v1365
  %v1381 = vadd.f32 %v1380, %v1366
  %v1382 = vrot.slane %v1381, 4
  %v1383 = vadd.f32 %v1381, %v1382
  %v1384 = vrot.slane %v1383, 2
  %v1385 = vadd.f32 %v1383, %v1384
  %v1386 = vrot.slane %v1385, 1
  %v1387 = vadd.f32 %v1385, %v1386
  %v1388 = vadd.f32 %v1350, %v1387
  %1389 = vst [vmem:[#allocation4] sm:$0x1] %v1388
  // Predicated region
  $region22: #{discriminator_sn_forward.4} parent=0 // pred_check
    %p1390 = pneg %p1320
  $region23: #{discriminator_sn_forward.4} parent=0 // pred_check_branch
    %1392 = sbr.rel (%p1390) target = $region25
  $region24: #{discriminator_sn_forward.4} parent=0 // pred_region
    %v1393 = vld [vmem:[#allocation3] sm:$0x1]
    %v1394 = vmul.f32 %v1393, 0.0078125
    %v1395 = vld [vmem:[#allocation4] sm:$0x1]
    %v1396 = vmul.f32 %v1395, 0.0078125
    %v1397 = vmul.f32 %v1394, %v1394
    %v1398 = vsub.f32 %v1396, %v1397
    %v1399 = vmax.f32 %v1398, 0.0
    %v1400 = vadd.f32 %v1399, 1e-05
    %v1401 = vrsqrt.pop %v1400
    %v1402 = vld [vmem:[%s2] sm:$0x1]
    %v1403 = vmul.f32 %v1401, %v1402
    %v1404 = vld [vmem:[%s3] sm:$0x1]
    %v1405 = vmul.f32 %v1394, %v1403
    %v1406 = vsub.f32 %v1404, %v1405
    %v1407 = vld [vmem:[#allocation2] sm:$0xff]
    %v1408 = vld [vmem:[#allocation2 + $0x8] sm:$0xff]
    %v1409 = vld [vmem:[#allocation2 + $0x10] sm:$0xff]
    %v1410 = vld [vmem:[#allocation2 + $0x18] sm:$0xff]
    %v1411 = vld [vmem:[#allocation2 + $0x20] sm:$0xff]
    %v1412 = vld [vmem:[#allocation2 + $0x28] sm:$0xff]
    %v1413 = vld [vmem:[#allocation2 + $0x30] sm:$0xff]
    %v1414 = vld [vmem:[#allocation2 + $0x38] sm:$0xff]
    %v1415 = vld [vmem:[#allocation2 + $0x40] sm:$0xff]
    %v1416 = vld [vmem:[#allocation2 + $0x48] sm:$0xff]
    %v1417 = vld [vmem:[#allocation2 + $0x50] sm:$0xff]
    %v1418 = vld [vmem:[#allocation2 + $0x58] sm:$0xff]
    %v1419 = vld [vmem:[#allocation2 + $0x60] sm:$0xff]
    %v1420 = vld [vmem:[#allocation2 + $0x68] sm:$0xff]
    %v1421 = vld [vmem:[#allocation2 + $0x70] sm:$0xff]
    %v1422 = vld [vmem:[#allocation2 + $0x78] sm:$0xff]
    %v1424 = vlaneseq
    %v1425 = vshrl.u32 %v1424, 7
    %v1426 = vsub.s32 0, %v1425
    %v1427 = vrot.slane %v1403, %v1426
    %v1429 = vmul.f32 %v1407, %v1427
    %v1430 = vmul.f32 %v1408, %v1427
    %v1431 = vmul.f32 %v1409, %v1427
    %v1432 = vmul.f32 %v1410, %v1427
    %v1433 = vmul.f32 %v1411, %v1427
    %v1434 = vmul.f32 %v1412, %v1427
    %v1435 = vmul.f32 %v1413, %v1427
    %v1436 = vmul.f32 %v1414, %v1427
    %v1437 = vmul.f32 %v1415, %v1427
    %v1438 = vmul.f32 %v1416, %v1427
    %v1439 = vmul.f32 %v1417, %v1427
    %v1440 = vmul.f32 %v1418, %v1427
    %v1441 = vmul.f32 %v1419, %v1427
    %v1442 = vmul.f32 %v1420, %v1427
    %v1443 = vmul.f32 %v1421, %v1427
    %v1444 = vmul.f32 %v1422, %v1427
    %v1446 = vlaneseq
    %v1447 = vshrl.u32 %v1446, 7
    %v1448 = vsub.s32 0, %v1447
    %v1449 = vrot.slane %v1406, %v1448
    %v1451 = vadd.f32 %v1429, %v1449
    %v1452 = vadd.f32 %v1430, %v1449
    %v1453 = vadd.f32 %v1431, %v1449
    %v1454 = vadd.f32 %v1432, %v1449
    %v1455 = vadd.f32 %v1433, %v1449
    %v1456 = vadd.f32 %v1434, %v1449
    %v1457 = vadd.f32 %v1435, %v1449
    %v1458 = vadd.f32 %v1436, %v1449
    %v1459 = vadd.f32 %v1437, %v1449
    %v1460 = vadd.f32 %v1438, %v1449
    %v1461 = vadd.f32 %v1439, %v1449
    %v1462 = vadd.f32 %v1440, %v1449
    %v1463 = vadd.f32 %v1441, %v1449
    %v1464 = vadd.f32 %v1442, %v1449
    %v1465 = vadd.f32 %v1443, %v1449
    %v1466 = vadd.f32 %v1444, %v1449
    %vm1467 = vcmp.gt.f32.partialorder %v1451, 0.0
    %vm1468 = vcmp.gt.f32.partialorder %v1452, 0.0
    %vm1469 = vcmp.gt.f32.partialorder %v1453, 0.0
    %vm1470 = vcmp.gt.f32.partialorder %v1454, 0.0
    %vm1471 = vcmp.gt.f32.partialorder %v1455, 0.0
    %vm1472 = vcmp.gt.f32.partialorder %v1456, 0.0
    %vm1473 = vcmp.gt.f32.partialorder %v1457, 0.0
    %vm1474 = vcmp.gt.f32.partialorder %v1458, 0.0
    %vm1475 = vcmp.gt.f32.partialorder %v1459, 0.0
    %vm1476 = vcmp.gt.f32.partialorder %v1460, 0.0
    %vm1477 = vcmp.gt.f32.partialorder %v1461, 0.0
    %vm1478 = vcmp.gt.f32.partialorder %v1462, 0.0
    %vm1479 = vcmp.gt.f32.partialorder %v1463, 0.0
    %vm1480 = vcmp.gt.f32.partialorder %v1464, 0.0
    %vm1481 = vcmp.gt.f32.partialorder %v1465, 0.0
    %vm1482 = vcmp.gt.f32.partialorder %v1466, 0.0
    %v1483 = vmul.f32 %v1451, 0.2
    %v1484 = vmul.f32 %v1452, 0.2
    %v1485 = vmul.f32 %v1453, 0.2
    %v1486 = vmul.f32 %v1454, 0.2
    %v1487 = vmul.f32 %v1455, 0.2
    %v1488 = vmul.f32 %v1456, 0.2
    %v1489 = vmul.f32 %v1457, 0.2
    %v1490 = vmul.f32 %v1458, 0.2
    %v1491 = vmul.f32 %v1459, 0.2
    %v1492 = vmul.f32 %v1460, 0.2
    %v1493 = vmul.f32 %v1461, 0.2
    %v1494 = vmul.f32 %v1462, 0.2
    %v1495 = vmul.f32 %v1463, 0.2
    %v1496 = vmul.f32 %v1464, 0.2
    %v1497 = vmul.f32 %v1465, 0.2
    %v1498 = vmul.f32 %v1466, 0.2
    %v1499 = vsel %vm1467, %v1451, %v1483
    %v1500 = vsel %vm1468, %v1452, %v1484
    %v1501 = vsel %vm1469, %v1453, %v1485
    %v1502 = vsel %vm1470, %v1454, %v1486
    %v1503 = vsel %vm1471, %v1455, %v1487
    %v1504 = vsel %vm1472, %v1456, %v1488
    %v1505 = vsel %vm1473, %v1457, %v1489
    %v1506 = vsel %vm1474, %v1458, %v1490
    %v1507 = vsel %vm1475, %v1459, %v1491
    %v1508 = vsel %vm1476, %v1460, %v1492
    %v1509 = vsel %vm1477, %v1461, %v1493
    %v1510 = vsel %vm1478, %v1462, %v1494
    %v1511 = vsel %vm1479, %v1463, %v1495
    %v1512 = vsel %vm1480, %v1464, %v1496
    %v1513 = vsel %vm1481, %v1465, %v1497
    %v1514 = vsel %vm1482, %v1466, %v1498
    %v1515 = vpack.c.bf16 %v1500, %v1499
    %v1516 = vpack.c.bf16 %v1502, %v1501
    %v1517 = vpack.c.bf16 %v1504, %v1503
    %v1518 = vpack.c.bf16 %v1506, %v1505
    %v1519 = vpack.c.bf16 %v1508, %v1507
    %v1520 = vpack.c.bf16 %v1510, %v1509
    %v1521 = vpack.c.bf16 %v1512, %v1511
    %v1522 = vpack.c.bf16 %v1514, %v1513
    %v1531 = vunpack.c.l.b16 %v1515
    %v1532 = vunpack.c.h.b16 %v1515
    %v1533 = vunpack.c.l.b16 %v1516
    %v1534 = vunpack.c.h.b16 %v1516
    %v1535 = vunpack.c.l.b16 %v1517
    %v1536 = vunpack.c.h.b16 %v1517
    %v1537 = vunpack.c.l.b16 %v1518
    %v1538 = vunpack.c.h.b16 %v1518
    %v1539 = vunpack.c.l.b16 %v1519
    %v1540 = vunpack.c.h.b16 %v1519
    %v1541 = vunpack.c.l.b16 %v1520
    %v1542 = vunpack.c.h.b16 %v1520
    %v1543 = vunpack.c.l.b16 %v1521
    %v1544 = vunpack.c.h.b16 %v1521
    %v1545 = vunpack.c.l.b16 %v1522
    %v1546 = vunpack.c.h.b16 %v1522
    %v1547 = vpack.c.b16 %v1531, %v1531
    %v1548 = vpack.c.b16 %v1532, %v1532
    %v1549 = vpack.c.b16 %v1533, %v1533
    %v1550 = vpack.c.b16 %v1534, %v1534
    %v1551 = vpack.c.b16 %v1535, %v1535
    %v1552 = vpack.c.b16 %v1536, %v1536
    %v1553 = vpack.c.b16 %v1537, %v1537
    %v1554 = vpack.c.b16 %v1538, %v1538
    %v1555 = vpack.c.b16 %v1539, %v1539
    %v1556 = vpack.c.b16 %v1540, %v1540
    %v1557 = vpack.c.b16 %v1541, %v1541
    %v1558 = vpack.c.b16 %v1542, %v1542
    %v1559 = vpack.c.b16 %v1543, %v1543
    %v1560 = vpack.c.b16 %v1544, %v1544
    %v1561 = vpack.c.b16 %v1545, %v1545
    %v1562 = vpack.c.b16 %v1546, %v1546
    %1579 = vst [vmem:[%s4] sm:$0xf] %v1547
    %1580 = vst [vmem:[%s4 + $0x4] sm:$0xf] %v1548
    %1581 = vst [vmem:[%s4 + $0x8] sm:$0xf] %v1549
    %1582 = vst [vmem:[%s4 + $0xc] sm:$0xf] %v1550
    %1583 = vst [vmem:[%s4 + $0x10] sm:$0xf] %v1551
    %1584 = vst [vmem:[%s4 + $0x14] sm:$0xf] %v1552
    %1585 = vst [vmem:[%s4 + $0x18] sm:$0xf] %v1553
    %1586 = vst [vmem:[%s4 + $0x1c] sm:$0xf] %v1554
    %1587 = vst [vmem:[%s4 + $0x20] sm:$0xf] %v1555
    %1588 = vst [vmem:[%s4 + $0x24] sm:$0xf] %v1556
    %1589 = vst [vmem:[%s4 + $0x28] sm:$0xf] %v1557
    %1590 = vst [vmem:[%s4 + $0x2c] sm:$0xf] %v1558
    %1591 = vst [vmem:[%s4 + $0x30] sm:$0xf] %v1559
    %1592 = vst [vmem:[%s4 + $0x34] sm:$0xf] %v1560
    %1593 = vst [vmem:[%s4 + $0x38] sm:$0xf] %v1561
    %1594 = vst [vmem:[%s4 + $0x3c] sm:$0xf] %v1562
  $region25: #{discriminator_sn_forward.4} parent=0 // pred_fallthru
    _
  // Predicated region
  $region26: #{discriminator_sn_forward.4} parent=0 // pred_check
    _
  $region27: #{discriminator_sn_forward.4} parent=0 // pred_check_branch
    %1596 = sbr.rel (0) target = $region29
  $region28: #{discriminator_sn_forward.4} parent=0 // pred_region
    _
  $region29: #{discriminator_sn_forward.4} parent=0 // pred_fallthru
    _
  // Predicated region
  $region30: #{discriminator_sn_forward.4} parent=0 // pred_check
    _
  $region31: #{discriminator_sn_forward.4} parent=0 // pred_check_branch
    %1598 = sbr.rel (0) target = $region33
  $region32: #{discriminator_sn_forward.4} parent=0 // pred_region
    _
  $region33: #{discriminator_sn_forward.4} parent=0 // pred_fallthru
    _

// kernel: discriminator_sn_forward.5
$region0: #{discriminator_sn_forward.5}
  #allocation0 [shape = 'u32[]', space=smem, size = 0x4, offset = 0x4, fixed_abs, tag = 'smem constant byte address 0x4 - core index']
  #allocation1 [shape = 'u32[144,128]{1,0:T(1,128)}', space=vmem, size = 0x12000, scoped, tag = 'internal scratch']
  #allocation2 [shape = 'f32[32,256]{1,0:T(8,128)}', space=vmem, size = 0x8000, scoped, tag = 'scratch operand']
  #allocation3 [shape = 'f32[1,256]{1,0:T(1,128)}', space=vmem, size = 0x400, scoped, tag = 'scratch operand']
  #allocation4 [shape = 'f32[1,256]{1,0:T(1,128)}', space=vmem, size = 0x400, scoped, tag = 'scratch operand']
  #allocation5 [shape = 'f32[1,1]{1,0:T(1,128)S(1)}', space=vmem, size = 0x200, scoped, tag = 'scoped memory for discriminator_sn_forward.5']
  %s0 = inlined_call_operand.vmem [shape: bf16[32,2048], index: 0, kind: input, shape index: {}]
  %s1 = inlined_call_operand.vmem [shape: bf16[2048,256], index: 1, kind: input, shape index: {}]
  %s2 = inlined_call_operand.vmem [shape: f32[1,256], index: 2, kind: input, shape index: {}]
  %s3 = inlined_call_operand.vmem [shape: f32[1,256], index: 3, kind: input, shape index: {}]
  %s4 = inlined_call_operand.vmem [shape: f32[16,256], index: 4, kind: input, shape index: {}]
  %s5 = inlined_call_operand.<no memory space> [shape: f32[1,1], index: 5, kind: input, shape index: {}]
  %s6 = inlined_call_operand.vmem [shape: f32[2,1], index: 6, kind: output, shape index: {}]
  %s7 = sld [smem:[#allocation0]]
  $region42: #{discriminator_sn_forward.5} parent=0
    _
  %s9 = ssub.s32 1, %s7
  %s10 = scalar_select 0, %s9, %s7
  %v11 = vstv %s5
  %12 = vst [vmem:[#allocation5] sm:$0x1] %v11
  // Predicated region
  $region2: #{discriminator_sn_forward.5} parent=0 // pred_check
    _
  $region3: #{discriminator_sn_forward.5} parent=0 // pred_check_branch
    %14 = sbr.rel (0) target = $region5
  $region4: #{discriminator_sn_forward.5} parent=0 // pred_region
    _
  $region5: #{discriminator_sn_forward.5} parent=0 // pred_fallthru
    _
  // Predicated region
  $region6: #{discriminator_sn_forward.5} parent=0 // pred_check
    _
  $region7: #{discriminator_sn_forward.5} parent=0 // pred_check_branch
    %16 = sbr.rel (0) target = $region9
  $region8: #{discriminator_sn_forward.5} parent=0 // pred_region
    _
  $region9: #{discriminator_sn_forward.5} parent=0 // pred_fallthru
    _
  // Predicated region
  $region10: #{discriminator_sn_forward.5} parent=0 // pred_check
    _
  $region11: #{discriminator_sn_forward.5} parent=0 // pred_check_branch
    %18 = sbr.rel (0) target = $region13
  $region12: #{discriminator_sn_forward.5} parent=0 // pred_region
    _
  $region13: #{discriminator_sn_forward.5} parent=0 // pred_fallthru
    _
  // Predicated region
  $region14: #{discriminator_sn_forward.5} parent=0 // pred_check
    _
  $region15: #{discriminator_sn_forward.5} parent=0 // pred_check_branch
    %20 = sbr.rel (0) target = $region17
  $region16: #{discriminator_sn_forward.5} parent=0 // pred_region
    _
  $region17: #{discriminator_sn_forward.5} parent=0 // pred_fallthru
    _
  // Predicated region
  $region18: #{discriminator_sn_forward.5} parent=0 // pred_check
    _
  $region19: #{discriminator_sn_forward.5} parent=0 // pred_check_branch
    %22 = sbr.rel (0) target = $region21
  $region20: #{discriminator_sn_forward.5} parent=0 // pred_region
    _
  $region21: #{discriminator_sn_forward.5} parent=0 // pred_fallthru
    _
  // Predicated region
  $region22: #{discriminator_sn_forward.5} parent=0 // pred_check
    _
  $region23: #{discriminator_sn_forward.5} parent=0 // pred_check_branch
    %24 = sbr.rel (0) target = $region25
  $region24: #{discriminator_sn_forward.5} parent=0 // pred_region
    _
  $region25: #{discriminator_sn_forward.5} parent=0 // pred_fallthru
    _
  %v25 = vld [vmem:[%s0] sm:$0xff]
  %v26 = vld [vmem:[%s0 + $0x8] sm:$0xff]
  %v27 = vld [vmem:[%s0 + $0x10] sm:$0xff]
  %v28 = vld [vmem:[%s0 + $0x18] sm:$0xff]
  %v29 = vld [vmem:[%s0 + $0x20] sm:$0xff]
  %v30 = vld [vmem:[%s0 + $0x28] sm:$0xff]
  %v31 = vld [vmem:[%s0 + $0x30] sm:$0xff]
  %v32 = vld [vmem:[%s0 + $0x38] sm:$0xff]
  %v33 = vld [vmem:[%s0 + $0x40] sm:$0xff]
  %v34 = vld [vmem:[%s0 + $0x48] sm:$0xff]
  %v35 = vld [vmem:[%s0 + $0x50] sm:$0xff]
  %v36 = vld [vmem:[%s0 + $0x58] sm:$0xff]
  %v37 = vld [vmem:[%s0 + $0x60] sm:$0xff]
  %v38 = vld [vmem:[%s0 + $0x68] sm:$0xff]
  %v39 = vld [vmem:[%s0 + $0x70] sm:$0xff]
  %v40 = vld [vmem:[%s0 + $0x78] sm:$0xff]
  %v41 = vld [vmem:[%s0 + $0x80] sm:$0xff]
  %v42 = vld [vmem:[%s0 + $0x88] sm:$0xff]
  %v43 = vld [vmem:[%s0 + $0x90] sm:$0xff]
  %v44 = vld [vmem:[%s0 + $0x98] sm:$0xff]
  %v45 = vld [vmem:[%s0 + $0xa0] sm:$0xff]
  %v46 = vld [vmem:[%s0 + $0xa8] sm:$0xff]
  %v47 = vld [vmem:[%s0 + $0xb0] sm:$0xff]
  %v48 = vld [vmem:[%s0 + $0xb8] sm:$0xff]
  %v49 = vld [vmem:[%s0 + $0xc0] sm:$0xff]
  %v50 = vld [vmem:[%s0 + $0xc8] sm:$0xff]
  %v51 = vld [vmem:[%s0 + $0xd0] sm:$0xff]
  %v52 = vld [vmem:[%s0 + $0xd8] sm:$0xff]
  %v53 = vld [vmem:[%s0 + $0xe0] sm:$0xff]
  %v54 = vld [vmem:[%s0 + $0xe8] sm:$0xff]
  %v55 = vld [vmem:[%s0 + $0xf0] sm:$0xff]
  %v56 = vld [vmem:[%s0 + $0xf8] sm:$0xff]
  %v57 = vld [vmem:[%s1] sm:$0xff]
  %v58 = vld [vmem:[%s1 + $0x8] sm:$0xff]
  %v59 = vld [vmem:[%s1 + $0x10] sm:$0xff]
  %v60 = vld [vmem:[%s1 + $0x18] sm:$0xff]
  %v61 = vld [vmem:[%s1 + $0x20] sm:$0xff]
  %v62 = vld [vmem:[%s1 + $0x28] sm:$0xff]
  %v63 = vld [vmem:[%s1 + $0x30] sm:$0xff]
  %v64 = vld [vmem:[%s1 + $0x38] sm:$0xff]
  %v65 = vld [vmem:[%s1 + $0x40] sm:$0xff]
  %v66 = vld [vmem:[%s1 + $0x48] sm:$0xff]
  %v67 = vld [vmem:[%s1 + $0x50] sm:$0xff]
  %v68 = vld [vmem:[%s1 + $0x58] sm:$0xff]
  %v69 = vld [vmem:[%s1 + $0x60] sm:$0xff]
  %v70 = vld [vmem:[%s1 + $0x68] sm:$0xff]
  %v71 = vld [vmem:[%s1 + $0x70] sm:$0xff]
  %v72 = vld [vmem:[%s1 + $0x78] sm:$0xff]
  %v73 = vld [vmem:[%s1 + $0x80] sm:$0xff]
  %v74 = vld [vmem:[%s1 + $0x88] sm:$0xff]
  %v75 = vld [vmem:[%s1 + $0x90] sm:$0xff]
  %v76 = vld [vmem:[%s1 + $0x98] sm:$0xff]
  %v77 = vld [vmem:[%s1 + $0xa0] sm:$0xff]
  %v78 = vld [vmem:[%s1 + $0xa8] sm:$0xff]
  %v79 = vld [vmem:[%s1 + $0xb0] sm:$0xff]
  %v80 = vld [vmem:[%s1 + $0xb8] sm:$0xff]
  %v81 = vld [vmem:[%s1 + $0xc0] sm:$0xff]
  %v82 = vld [vmem:[%s1 + $0xc8] sm:$0xff]
  %v83 = vld [vmem:[%s1 + $0xd0] sm:$0xff]
  %v84 = vld [vmem:[%s1 + $0xd8] sm:$0xff]
  %v85 = vld [vmem:[%s1 + $0xe0] sm:$0xff]
  %v86 = vld [vmem:[%s1 + $0xe8] sm:$0xff]
  %v87 = vld [vmem:[%s1 + $0xf0] sm:$0xff]
  %v88 = vld [vmem:[%s1 + $0xf8] sm:$0xff]
  %v89 = vld [vmem:[%s1 + $0x100] sm:$0xff]
  %v90 = vld [vmem:[%s1 + $0x108] sm:$0xff]
  %v91 = vld [vmem:[%s1 + $0x110] sm:$0xff]
  %v92 = vld [vmem:[%s1 + $0x118] sm:$0xff]
  %v93 = vld [vmem:[%s1 + $0x120] sm:$0xff]
  %v94 = vld [vmem:[%s1 + $0x128] sm:$0xff]
  %v95 = vld [vmem:[%s1 + $0x130] sm:$0xff]
  %v96 = vld [vmem:[%s1 + $0x138] sm:$0xff]
  %v97 = vld [vmem:[%s1 + $0x140] sm:$0xff]
  %v98 = vld [vmem:[%s1 + $0x148] sm:$0xff]
  %v99 = vld [vmem:[%s1 + $0x150] sm:$0xff]
  %v100 = vld [vmem:[%s1 + $0x158] sm:$0xff]
  %v101 = vld [vmem:[%s1 + $0x160] sm:$0xff]
  %v102 = vld [vmem:[%s1 + $0x168] sm:$0xff]
  %v103 = vld [vmem:[%s1 + $0x170] sm:$0xff]
  %v104 = vld [vmem:[%s1 + $0x178] sm:$0xff]
  %v105 = vld [vmem:[%s1 + $0x180] sm:$0xff]
  %v106 = vld [vmem:[%s1 + $0x188] sm:$0xff]
  %v107 = vld [vmem:[%s1 + $0x190] sm:$0xff]
  %v108 = vld [vmem:[%s1 + $0x198] sm:$0xff]
  %v109 = vld [vmem:[%s1 + $0x1a0] sm:$0xff]
  %v110 = vld [vmem:[%s1 + $0x1a8] sm:$0xff]
  %v111 = vld [vmem:[%s1 + $0x1b0] sm:$0xff]
  %v112 = vld [vmem:[%s1 + $0x1b8] sm:$0xff]
  %v113 = vld [vmem:[%s1 + $0x1c0] sm:$0xff]
  %v114 = vld [vmem:[%s1 + $0x1c8] sm:$0xff]
  %v115 = vld [vmem:[%s1 + $0x1d0] sm:$0xff]
  %v116 = vld [vmem:[%s1 + $0x1d8] sm:$0xff]
  %v117 = vld [vmem:[%s1 + $0x1e0] sm:$0xff]
  %v118 = vld [vmem:[%s1 + $0x1e8] sm:$0xff]
  %v119 = vld [vmem:[%s1 + $0x1f0] sm:$0xff]
  %v120 = vld [vmem:[%s1 + $0x1f8] sm:$0xff]
  %v121 = vld [vmem:[%s1 + $0x200] sm:$0xff]
  %v122 = vld [vmem:[%s1 + $0x208] sm:$0xff]
  %v123 = vld [vmem:[%s1 + $0x210] sm:$0xff]
  %v124 = vld [vmem:[%s1 + $0x218] sm:$0xff]
  %v125 = vld [vmem:[%s1 + $0x220] sm:$0xff]
  %v126 = vld [vmem:[%s1 + $0x228] sm:$0xff]
  %v127 = vld [vmem:[%s1 + $0x230] sm:$0xff]
  %v128 = vld [vmem:[%s1 + $0x238] sm:$0xff]
  %v129 = vld [vmem:[%s1 + $0x240] sm:$0xff]
  %v130 = vld [vmem:[%s1 + $0x248] sm:$0xff]
  %v131 = vld [vmem:[%s1 + $0x250] sm:$0xff]
  %v132 = vld [vmem:[%s1 + $0x258] sm:$0xff]
  %v133 = vld [vmem:[%s1 + $0x260] sm:$0xff]
  %v134 = vld [vmem:[%s1 + $0x268] sm:$0xff]
  %v135 = vld [vmem:[%s1 + $0x270] sm:$0xff]
  %v136 = vld [vmem:[%s1 + $0x278] sm:$0xff]
  %v137 = vld [vmem:[%s1 + $0x280] sm:$0xff]
  %v138 = vld [vmem:[%s1 + $0x288] sm:$0xff]
  %v139 = vld [vmem:[%s1 + $0x290] sm:$0xff]
  %v140 = vld [vmem:[%s1 + $0x298] sm:$0xff]
  %v141 = vld [vmem:[%s1 + $0x2a0] sm:$0xff]
  %v142 = vld [vmem:[%s1 + $0x2a8] sm:$0xff]
  %v143 = vld [vmem:[%s1 + $0x2b0] sm:$0xff]
  %v144 = vld [vmem:[%s1 + $0x2b8] sm:$0xff]
  %v145 = vld [vmem:[%s1 + $0x2c0] sm:$0xff]
  %v146 = vld [vmem:[%s1 + $0x2c8] sm:$0xff]
  %v147 = vld [vmem:[%s1 + $0x2d0] sm:$0xff]
  %v148 = vld [vmem:[%s1 + $0x2d8] sm:$0xff]
  %v149 = vld [vmem:[%s1 + $0x2e0] sm:$0xff]
  %v150 = vld [vmem:[%s1 + $0x2e8] sm:$0xff]
  %v151 = vld [vmem:[%s1 + $0x2f0] sm:$0xff]
  %v152 = vld [vmem:[%s1 + $0x2f8] sm:$0xff]
  %v153 = vld [vmem:[%s1 + $0x300] sm:$0xff]
  %v154 = vld [vmem:[%s1 + $0x308] sm:$0xff]
  %v155 = vld [vmem:[%s1 + $0x310] sm:$0xff]
  %v156 = vld [vmem:[%s1 + $0x318] sm:$0xff]
  %v157 = vld [vmem:[%s1 + $0x320] sm:$0xff]
  %v158 = vld [vmem:[%s1 + $0x328] sm:$0xff]
  %v159 = vld [vmem:[%s1 + $0x330] sm:$0xff]
  %v160 = vld [vmem:[%s1 + $0x338] sm:$0xff]
  %v161 = vld [vmem:[%s1 + $0x340] sm:$0xff]
  %v162 = vld [vmem:[%s1 + $0x348] sm:$0xff]
  %v163 = vld [vmem:[%s1 + $0x350] sm:$0xff]
  %v164 = vld [vmem:[%s1 + $0x358] sm:$0xff]
  %v165 = vld [vmem:[%s1 + $0x360] sm:$0xff]
  %v166 = vld [vmem:[%s1 + $0x368] sm:$0xff]
  %v167 = vld [vmem:[%s1 + $0x370] sm:$0xff]
  %v168 = vld [vmem:[%s1 + $0x378] sm:$0xff]
  %v169 = vld [vmem:[%s1 + $0x380] sm:$0xff]
  %v170 = vld [vmem:[%s1 + $0x388] sm:$0xff]
  %v171 = vld [vmem:[%s1 + $0x390] sm:$0xff]
  %v172 = vld [vmem:[%s1 + $0x398] sm:$0xff]
  %v173 = vld [vmem:[%s1 + $0x3a0] sm:$0xff]
  %v174 = vld [vmem:[%s1 + $0x3a8] sm:$0xff]
  %v175 = vld [vmem:[%s1 + $0x3b0] sm:$0xff]
  %v176 = vld [vmem:[%s1 + $0x3b8] sm:$0xff]
  %v177 = vld [vmem:[%s1 + $0x3c0] sm:$0xff]
  %v178 = vld [vmem:[%s1 + $0x3c8] sm:$0xff]
  %v179 = vld [vmem:[%s1 + $0x3d0] sm:$0xff]
  %v180 = vld [vmem:[%s1 + $0x3d8] sm:$0xff]
  %v181 = vld [vmem:[%s1 + $0x3e0] sm:$0xff]
  %v182 = vld [vmem:[%s1 + $0x3e8] sm:$0xff]
  %v183 = vld [vmem:[%s1 + $0x3f0] sm:$0xff]
  %v184 = vld [vmem:[%s1 + $0x3f8] sm:$0xff]
  %v185 = vld [vmem:[%s1 + $0x400] sm:$0xff]
  %v186 = vld [vmem:[%s1 + $0x408] sm:$0xff]
  %v187 = vld [vmem:[%s1 + $0x410] sm:$0xff]
  %v188 = vld [vmem:[%s1 + $0x418] sm:$0xff]
  %v189 = vld [vmem:[%s1 + $0x420] sm:$0xff]
  %v190 = vld [vmem:[%s1 + $0x428] sm:$0xff]
  %v191 = vld [vmem:[%s1 + $0x430] sm:$0xff]
  %v192 = vld [vmem:[%s1 + $0x438] sm:$0xff]
  %v193 = vld [vmem:[%s1 + $0x440] sm:$0xff]
  %v194 = vld [vmem:[%s1 + $0x448] sm:$0xff]
  %v195 = vld [vmem:[%s1 + $0x450] sm:$0xff]
  %v196 = vld [vmem:[%s1 + $0x458] sm:$0xff]
  %v197 = vld [vmem:[%s1 + $0x460] sm:$0xff]
  %v198 = vld [vmem:[%s1 + $0x468] sm:$0xff]
  %v199 = vld [vmem:[%s1 + $0x470] sm:$0xff]
  %v200 = vld [vmem:[%s1 + $0x478] sm:$0xff]
  %v201 = vld [vmem:[%s1 + $0x480] sm:$0xff]
  %v202 = vld [vmem:[%s1 + $0x488] sm:$0xff]
  %v203 = vld [vmem:[%s1 + $0x490] sm:$0xff]
  %v204 = vld [vmem:[%s1 + $0x498] sm:$0xff]
  %v205 = vld [vmem:[%s1 + $0x4a0] sm:$0xff]
  %v206 = vld [vmem:[%s1 + $0x4a8] sm:$0xff]
  %v207 = vld [vmem:[%s1 + $0x4b0] sm:$0xff]
  %v208 = vld [vmem:[%s1 + $0x4b8] sm:$0xff]
  %v209 = vld [vmem:[%s1 + $0x4c0] sm:$0xff]
  %v210 = vld [vmem:[%s1 + $0x4c8] sm:$0xff]
  %v211 = vld [vmem:[%s1 + $0x4d0] sm:$0xff]
  %v212 = vld [vmem:[%s1 + $0x4d8] sm:$0xff]
  %v213 = vld [vmem:[%s1 + $0x4e0] sm:$0xff]
  %v214 = vld [vmem:[%s1 + $0x4e8] sm:$0xff]
  %v215 = vld [vmem:[%s1 + $0x4f0] sm:$0xff]
  %v216 = vld [vmem:[%s1 + $0x4f8] sm:$0xff]
  %v217 = vld [vmem:[%s1 + $0x500] sm:$0xff]
  %v218 = vld [vmem:[%s1 + $0x508] sm:$0xff]
  %v219 = vld [vmem:[%s1 + $0x510] sm:$0xff]
  %v220 = vld [vmem:[%s1 + $0x518] sm:$0xff]
  %v221 = vld [vmem:[%s1 + $0x520] sm:$0xff]
  %v222 = vld [vmem:[%s1 + $0x528] sm:$0xff]
  %v223 = vld [vmem:[%s1 + $0x530] sm:$0xff]
  %v224 = vld [vmem:[%s1 + $0x538] sm:$0xff]
  %v225 = vld [vmem:[%s1 + $0x540] sm:$0xff]
  %v226 = vld [vmem:[%s1 + $0x548] sm:$0xff]
  %v227 = vld [vmem:[%s1 + $0x550] sm:$0xff]
  %v228 = vld [vmem:[%s1 + $0x558] sm:$0xff]
  %v229 = vld [vmem:[%s1 + $0x560] sm:$0xff]
  %v230 = vld [vmem:[%s1 + $0x568] sm:$0xff]
  %v231 = vld [vmem:[%s1 + $0x570] sm:$0xff]
  %v232 = vld [vmem:[%s1 + $0x578] sm:$0xff]
  %v233 = vld [vmem:[%s1 + $0x580] sm:$0xff]
  %v234 = vld [vmem:[%s1 + $0x588] sm:$0xff]
  %v235 = vld [vmem:[%s1 + $0x590] sm:$0xff]
  %v236 = vld [vmem:[%s1 + $0x598] sm:$0xff]
  %v237 = vld [vmem:[%s1 + $0x5a0] sm:$0xff]
  %v238 = vld [vmem:[%s1 + $0x5a8] sm:$0xff]
  %v239 = vld [vmem:[%s1 + $0x5b0] sm:$0xff]
  %v240 = vld [vmem:[%s1 + $0x5b8] sm:$0xff]
  %v241 = vld [vmem:[%s1 + $0x5c0] sm:$0xff]
  %v242 = vld [vmem:[%s1 + $0x5c8] sm:$0xff]
  %v243 = vld [vmem:[%s1 + $0x5d0] sm:$0xff]
  %v244 = vld [vmem:[%s1 + $0x5d8] sm:$0xff]
  %v245 = vld [vmem:[%s1 + $0x5e0] sm:$0xff]
  %v246 = vld [vmem:[%s1 + $0x5e8] sm:$0xff]
  %v247 = vld [vmem:[%s1 + $0x5f0] sm:$0xff]
  %v248 = vld [vmem:[%s1 + $0x5f8] sm:$0xff]
  %v249 = vld [vmem:[%s1 + $0x600] sm:$0xff]
  %v250 = vld [vmem:[%s1 + $0x608] sm:$0xff]
  %v251 = vld [vmem:[%s1 + $0x610] sm:$0xff]
  %v252 = vld [vmem:[%s1 + $0x618] sm:$0xff]
  %v253 = vld [vmem:[%s1 + $0x620] sm:$0xff]
  %v254 = vld [vmem:[%s1 + $0x628] sm:$0xff]
  %v255 = vld [vmem:[%s1 + $0x630] sm:$0xff]
  %v256 = vld [vmem:[%s1 + $0x638] sm:$0xff]
  %v257 = vld [vmem:[%s1 + $0x640] sm:$0xff]
  %v258 = vld [vmem:[%s1 + $0x648] sm:$0xff]
  %v259 = vld [vmem:[%s1 + $0x650] sm:$0xff]
  %v260 = vld [vmem:[%s1 + $0x658] sm:$0xff]
  %v261 = vld [vmem:[%s1 + $0x660] sm:$0xff]
  %v262 = vld [vmem:[%s1 + $0x668] sm:$0xff]
  %v263 = vld [vmem:[%s1 + $0x670] sm:$0xff]
  %v264 = vld [vmem:[%s1 + $0x678] sm:$0xff]
  %v265 = vld [vmem:[%s1 + $0x680] sm:$0xff]
  %v266 = vld [vmem:[%s1 + $0x688] sm:$0xff]
  %v267 = vld [vmem:[%s1 + $0x690] sm:$0xff]
  %v268 = vld [vmem:[%s1 + $0x698] sm:$0xff]
  %v269 = vld [vmem:[%s1 + $0x6a0] sm:$0xff]
  %v270 = vld [vmem:[%s1 + $0x6a8] sm:$0xff]
  %v271 = vld [vmem:[%s1 + $0x6b0] sm:$0xff]
  %v272 = vld [vmem:[%s1 + $0x6b8] sm:$0xff]
  %v273 = vld [vmem:[%s1 + $0x6c0] sm:$0xff]
  %v274 = vld [vmem:[%s1 + $0x6c8] sm:$0xff]
  %v275 = vld [vmem:[%s1 + $0x6d0] sm:$0xff]
  %v276 = vld [vmem:[%s1 + $0x6d8] sm:$0xff]
  %v277 = vld [vmem:[%s1 + $0x6e0] sm:$0xff]
  %v278 = vld [vmem:[%s1 + $0x6e8] sm:$0xff]
  %v279 = vld [vmem:[%s1 + $0x6f0] sm:$0xff]
  %v280 = vld [vmem:[%s1 + $0x6f8] sm:$0xff]
  %v281 = vld [vmem:[%s1 + $0x700] sm:$0xff]
  %v282 = vld [vmem:[%s1 + $0x708] sm:$0xff]
  %v283 = vld [vmem:[%s1 + $0x710] sm:$0xff]
  %v284 = vld [vmem:[%s1 + $0x718] sm:$0xff]
  %v285 = vld [vmem:[%s1 + $0x720] sm:$0xff]
  %v286 = vld [vmem:[%s1 + $0x728] sm:$0xff]
  %v287 = vld [vmem:[%s1 + $0x730] sm:$0xff]
  %v288 = vld [vmem:[%s1 + $0x738] sm:$0xff]
  %v289 = vld [vmem:[%s1 + $0x740] sm:$0xff]
  %v290 = vld [vmem:[%s1 + $0x748] sm:$0xff]
  %v291 = vld [vmem:[%s1 + $0x750] sm:$0xff]
  %v292 = vld [vmem:[%s1 + $0x758] sm:$0xff]
  %v293 = vld [vmem:[%s1 + $0x760] sm:$0xff]
  %v294 = vld [vmem:[%s1 + $0x768] sm:$0xff]
  %v295 = vld [vmem:[%s1 + $0x770] sm:$0xff]
  %v296 = vld [vmem:[%s1 + $0x778] sm:$0xff]
  %v297 = vld [vmem:[%s1 + $0x780] sm:$0xff]
  %v298 = vld [vmem:[%s1 + $0x788] sm:$0xff]
  %v299 = vld [vmem:[%s1 + $0x790] sm:$0xff]
  %v300 = vld [vmem:[%s1 + $0x798] sm:$0xff]
  %v301 = vld [vmem:[%s1 + $0x7a0] sm:$0xff]
  %v302 = vld [vmem:[%s1 + $0x7a8] sm:$0xff]
  %v303 = vld [vmem:[%s1 + $0x7b0] sm:$0xff]
  %v304 = vld [vmem:[%s1 + $0x7b8] sm:$0xff]
  %v305 = vld [vmem:[%s1 + $0x7c0] sm:$0xff]
  %v306 = vld [vmem:[%s1 + $0x7c8] sm:$0xff]
  %v307 = vld [vmem:[%s1 + $0x7d0] sm:$0xff]
  %v308 = vld [vmem:[%s1 + $0x7d8] sm:$0xff]
  %v309 = vld [vmem:[%s1 + $0x7e0] sm:$0xff]
  %v310 = vld [vmem:[%s1 + $0x7e8] sm:$0xff]
  %v311 = vld [vmem:[%s1 + $0x7f0] sm:$0xff]
  %v312 = vld [vmem:[%s1 + $0x7f8] sm:$0xff]
  %v345 = vunpack.c.l.b16 %v25
  %v346 = vunpack.c.h.b16 %v25
  %v347 = vunpack.c.l.b16 %v26
  %v348 = vunpack.c.h.b16 %v26
  %v349 = vunpack.c.l.b16 %v27
  %v350 = vunpack.c.h.b16 %v27
  %v351 = vunpack.c.l.b16 %v28
  %v352 = vunpack.c.h.b16 %v28
  %v353 = vunpack.c.l.b16 %v29
  %v354 = vunpack.c.h.b16 %v29
  %v355 = vunpack.c.l.b16 %v30
  %v356 = vunpack.c.h.b16 %v30
  %v357 = vunpack.c.l.b16 %v31
  %v358 = vunpack.c.h.b16 %v31
  %v359 = vunpack.c.l.b16 %v32
  %v360 = vunpack.c.h.b16 %v32
  %v361 = vunpack.c.l.b16 %v33
  %v362 = vunpack.c.h.b16 %v33
  %v363 = vunpack.c.l.b16 %v34
  %v364 = vunpack.c.h.b16 %v34
  %v365 = vunpack.c.l.b16 %v35
  %v366 = vunpack.c.h.b16 %v35
  %v367 = vunpack.c.l.b16 %v36
  %v368 = vunpack.c.h.b16 %v36
  %v369 = vunpack.c.l.b16 %v37
  %v370 = vunpack.c.h.b16 %v37
  %v371 = vunpack.c.l.b16 %v38
  %v372 = vunpack.c.h.b16 %v38
  %v373 = vunpack.c.l.b16 %v39
  %v374 = vunpack.c.h.b16 %v39
  %v375 = vunpack.c.l.b16 %v40
  %v376 = vunpack.c.h.b16 %v40
  %v377 = vunpack.c.l.b16 %v41
  %v378 = vunpack.c.h.b16 %v41
  %v379 = vunpack.c.l.b16 %v42
  %v380 = vunpack.c.h.b16 %v42
  %v381 = vunpack.c.l.b16 %v43
  %v382 = vunpack.c.h.b16 %v43
  %v383 = vunpack.c.l.b16 %v44
  %v384 = vunpack.c.h.b16 %v44
  %v385 = vunpack.c.l.b16 %v45
  %v386 = vunpack.c.h.b16 %v45
  %v387 = vunpack.c.l.b16 %v46
  %v388 = vunpack.c.h.b16 %v46
  %v389 = vunpack.c.l.b16 %v47
  %v390 = vunpack.c.h.b16 %v47
  %v391 = vunpack.c.l.b16 %v48
  %v392 = vunpack.c.h.b16 %v48
  %v393 = vunpack.c.l.b16 %v49
  %v394 = vunpack.c.h.b16 %v49
  %v395 = vunpack.c.l.b16 %v50
  %v396 = vunpack.c.h.b16 %v50
  %v397 = vunpack.c.l.b16 %v51
  %v398 = vunpack.c.h.b16 %v51
  %v399 = vunpack.c.l.b16 %v52
  %v400 = vunpack.c.h.b16 %v52
  %v401 = vunpack.c.l.b16 %v53
  %v402 = vunpack.c.h.b16 %v53
  %v403 = vunpack.c.l.b16 %v54
  %v404 = vunpack.c.h.b16 %v54
  %v405 = vunpack.c.l.b16 %v55
  %v406 = vunpack.c.h.b16 %v55
  %v407 = vunpack.c.l.b16 %v56
  %v408 = vunpack.c.h.b16 %v56
  %v409 = vpack.c.b16 %v361, %v345
  %v410 = vpack.c.b16 %v362, %v346
  %v411 = vpack.c.b16 %v363, %v347
  %v412 = vpack.c.b16 %v364, %v348
  %v413 = vpack.c.b16 %v365, %v349
  %v414 = vpack.c.b16 %v366, %v350
  %v415 = vpack.c.b16 %v367, %v351
  %v416 = vpack.c.b16 %v368, %v352
  %v417 = vpack.c.b16 %v369, %v353
  %v418 = vpack.c.b16 %v370, %v354
  %v419 = vpack.c.b16 %v371, %v355
  %v420 = vpack.c.b16 %v372, %v356
  %v421 = vpack.c.b16 %v373, %v357
  %v422 = vpack.c.b16 %v374, %v358
  %v423 = vpack.c.b16 %v375, %v359
  %v424 = vpack.c.b16 %v376, %v360
  %v425 = vpack.c.b16 %v393, %v377
  %v426 = vpack.c.b16 %v394, %v378
  %v427 = vpack.c.b16 %v395, %v379
  %v428 = vpack.c.b16 %v396, %v380
  %v429 = vpack.c.b16 %v397, %v381
  %v430 = vpack.c.b16 %v398, %v382
  %v431 = vpack.c.b16 %v399, %v383
  %v432 = vpack.c.b16 %v400, %v384
  %v433 = vpack.c.b16 %v401, %v385
  %v434 = vpack.c.b16 %v402, %v386
  %v435 = vpack.c.b16 %v403, %v387
  %v436 = vpack.c.b16 %v404, %v388
  %v437 = vpack.c.b16 %v405, %v389
  %v438 = vpack.c.b16 %v406, %v390
  %v439 = vpack.c.b16 %v407, %v391
  %v440 = vpack.c.b16 %v408, %v392
  %v729 = vunpack.c.l.b16 %v57
  %v730 = vunpack.c.h.b16 %v57
  %v731 = vunpack.c.l.b16 %v58
  %v732 = vunpack.c.h.b16 %v58
  %v733 = vunpack.c.l.b16 %v59
  %v734 = vunpack.c.h.b16 %v59
  %v735 = vunpack.c.l.b16 %v60
  %v736 = vunpack.c.h.b16 %v60
  %v737 = vunpack.c.l.b16 %v61
  %v738 = vunpack.c.h.b16 %v61
  %v739 = vunpack.c.l.b16 %v62
  %v740 = vunpack.c.h.b16 %v62
  %v741 = vunpack.c.l.b16 %v63
  %v742 = vunpack.c.h.b16 %v63
  %v743 = vunpack.c.l.b16 %v64
  %v744 = vunpack.c.h.b16 %v64
  %v745 = vunpack.c.l.b16 %v65
  %v746 = vunpack.c.h.b16 %v65
  %v747 = vunpack.c.l.b16 %v66
  %v748 = vunpack.c.h.b16 %v66
  %v749 = vunpack.c.l.b16 %v67
  %v750 = vunpack.c.h.b16 %v67
  %v751 = vunpack.c.l.b16 %v68
  %v752 = vunpack.c.h.b16 %v68
  %v753 = vunpack.c.l.b16 %v69
  %v754 = vunpack.c.h.b16 %v69
  %v755 = vunpack.c.l.b16 %v70
  %v756 = vunpack.c.h.b16 %v70
  %v757 = vunpack.c.l.b16 %v71
  %v758 = vunpack.c.h.b16 %v71
  %v759 = vunpack.c.l.b16 %v72
  %v760 = vunpack.c.h.b16 %v72
  %v761 = vunpack.c.l.b16 %v73
  %v762 = vunpack.c.h.b16 %v73
  %v763 = vunpack.c.l.b16 %v74
  %v764 = vunpack.c.h.b16 %v74
  %v765 = vunpack.c.l.b16 %v75
  %v766 = vunpack.c.h.b16 %v75
  %v767 = vunpack.c.l.b16 %v76
  %v768 = vunpack.c.h.b16 %v76
  %v769 = vunpack.c.l.b16 %v77
  %v770 = vunpack.c.h.b16 %v77
  %v771 = vunpack.c.l.b16 %v78
  %v772 = vunpack.c.h.b16 %v78
  %v773 = vunpack.c.l.b16 %v79
  %v774 = vunpack.c.h.b16 %v79
  %v775 = vunpack.c.l.b16 %v80
  %v776 = vunpack.c.h.b16 %v80
  %v777 = vunpack.c.l.b16 %v81
  %v778 = vunpack.c.h.b16 %v81
  %v779 = vunpack.c.l.b16 %v82
  %v780 = vunpack.c.h.b16 %v82
  %v781 = vunpack.c.l.b16 %v83
  %v782 = vunpack.c.h.b16 %v83
  %v783 = vunpack.c.l.b16 %v84
  %v784 = vunpack.c.h.b16 %v84
  %v785 = vunpack.c.l.b16 %v85
  %v786 = vunpack.c.h.b16 %v85
  %v787 = vunpack.c.l.b16 %v86
  %v788 = vunpack.c.h.b16 %v86
  %v789 = vunpack.c.l.b16 %v87
  %v790 = vunpack.c.h.b16 %v87
  %v791 = vunpack.c.l.b16 %v88
  %v792 = vunpack.c.h.b16 %v88
  %v793 = vunpack.c.l.b16 %v89
  %v794 = vunpack.c.h.b16 %v89
  %v795 = vunpack.c.l.b16 %v90
  %v796 = vunpack.c.h.b16 %v90
  %v797 = vunpack.c.l.b16 %v91
  %v798 = vunpack.c.h.b16 %v91
  %v799 = vunpack.c.l.b16 %v92
  %v800 = vunpack.c.h.b16 %v92
  %v801 = vunpack.c.l.b16 %v93
  %v802 = vunpack.c.h.b16 %v93
  %v803 = vunpack.c.l.b16 %v94
  %v804 = vunpack.c.h.b16 %v94
  %v805 = vunpack.c.l.b16 %v95
  %v806 = vunpack.c.h.b16 %v95
  %v807 = vunpack.c.l.b16 %v96
  %v808 = vunpack.c.h.b16 %v96
  %v809 = vunpack.c.l.b16 %v97
  %v810 = vunpack.c.h.b16 %v97
  %v811 = vunpack.c.l.b16 %v98
  %v812 = vunpack.c.h.b16 %v98
  %v813 = vunpack.c.l.b16 %v99
  %v814 = vunpack.c.h.b16 %v99
  %v815 = vunpack.c.l.b16 %v100
  %v816 = vunpack.c.h.b16 %v100
  %v817 = vunpack.c.l.b16 %v101
  %v818 = vunpack.c.h.b16 %v101
  %v819 = vunpack.c.l.b16 %v102
  %v820 = vunpack.c.h.b16 %v102
  %v821 = vunpack.c.l.b16 %v103
  %v822 = vunpack.c.h.b16 %v103
  %v823 = vunpack.c.l.b16 %v104
  %v824 = vunpack.c.h.b16 %v104
  %v825 = vunpack.c.l.b16 %v105
  %v826 = vunpack.c.h.b16 %v105
  %v827 = vunpack.c.l.b16 %v106
  %v828 = vunpack.c.h.b16 %v106
  %v829 = vunpack.c.l.b16 %v107
  %v830 = vunpack.c.h.b16 %v107
  %v831 = vunpack.c.l.b16 %v108
  %v832 = vunpack.c.h.b16 %v108
  %v833 = vunpack.c.l.b16 %v109
  %v834 = vunpack.c.h.b16 %v109
  %v835 = vunpack.c.l.b16 %v110
  %v836 = vunpack.c.h.b16 %v110
  %v837 = vunpack.c.l.b16 %v111
  %v838 = vunpack.c.h.b16 %v111
  %v839 = vunpack.c.l.b16 %v112
  %v840 = vunpack.c.h.b16 %v112
  %v841 = vunpack.c.l.b16 %v113
  %v842 = vunpack.c.h.b16 %v113
  %v843 = vunpack.c.l.b16 %v114
  %v844 = vunpack.c.h.b16 %v114
  %v845 = vunpack.c.l.b16 %v115
  %v846 = vunpack.c.h.b16 %v115
  %v847 = vunpack.c.l.b16 %v116
  %v848 = vunpack.c.h.b16 %v116
  %v849 = vunpack.c.l.b16 %v117
  %v850 = vunpack.c.h.b16 %v117
  %v851 = vunpack.c.l.b16 %v118
  %v852 = vunpack.c.h.b16 %v118
  %v853 = vunpack.c.l.b16 %v119
  %v854 = vunpack.c.h.b16 %v119
  %v855 = vunpack.c.l.b16 %v120
  %v856 = vunpack.c.h.b16 %v120
  %v857 = vunpack.c.l.b16 %v121
  %v858 = vunpack.c.h.b16 %v121
  %v859 = vunpack.c.l.b16 %v122
  %v860 = vunpack.c.h.b16 %v122
  %v861 = vunpack.c.l.b16 %v123
  %v862 = vunpack.c.h.b16 %v123
  %v863 = vunpack.c.l.b16 %v124
  %v864 = vunpack.c.h.b16 %v124
  %v865 = vunpack.c.l.b16 %v125
  %v866 = vunpack.c.h.b16 %v125
  %v867 = vunpack.c.l.b16 %v126
  %v868 = vunpack.c.h.b16 %v126
  %v869 = vunpack.c.l.b16 %v127
  %v870 = vunpack.c.h.b16 %v127
  %v871 = vunpack.c.l.b16 %v128
  %v872 = vunpack.c.h.b16 %v128
  %v873 = vunpack.c.l.b16 %v129
  %v874 = vunpack.c.h.b16 %v129
  %v875 = vunpack.c.l.b16 %v130
  %v876 = vunpack.c.h.b16 %v130
  %v877 = vunpack.c.l.b16 %v131
  %v878 = vunpack.c.h.b16 %v131
  %v879 = vunpack.c.l.b16 %v132
  %v880 = vunpack.c.h.b16 %v132
  %v881 = vunpack.c.l.b16 %v133
  %v882 = vunpack.c.h.b16 %v133
  %v883 = vunpack.c.l.b16 %v134
  %v884 = vunpack.c.h.b16 %v134
  %v885 = vunpack.c.l.b16 %v135
  %v886 = vunpack.c.h.b16 %v135
  %v887 = vunpack.c.l.b16 %v136
  %v888 = vunpack.c.h.b16 %v136
  %v889 = vunpack.c.l.b16 %v137
  %v890 = vunpack.c.h.b16 %v137
  %v891 = vunpack.c.l.b16 %v138
  %v892 = vunpack.c.h.b16 %v138
  %v893 = vunpack.c.l.b16 %v139
  %v894 = vunpack.c.h.b16 %v139
  %v895 = vunpack.c.l.b16 %v140
  %v896 = vunpack.c.h.b16 %v140
  %v897 = vunpack.c.l.b16 %v141
  %v898 = vunpack.c.h.b16 %v141
  %v899 = vunpack.c.l.b16 %v142
  %v900 = vunpack.c.h.b16 %v142
  %v901 = vunpack.c.l.b16 %v143
  %v902 = vunpack.c.h.b16 %v143
  %v903 = vunpack.c.l.b16 %v144
  %v904 = vunpack.c.h.b16 %v144
  %v905 = vunpack.c.l.b16 %v145
  %v906 = vunpack.c.h.b16 %v145
  %v907 = vunpack.c.l.b16 %v146
  %v908 = vunpack.c.h.b16 %v146
  %v909 = vunpack.c.l.b16 %v147
  %v910 = vunpack.c.h.b16 %v147
  %v911 = vunpack.c.l.b16 %v148
  %v912 = vunpack.c.h.b16 %v148
  %v913 = vunpack.c.l.b16 %v149
  %v914 = vunpack.c.h.b16 %v149
  %v915 = vunpack.c.l.b16 %v150
  %v916 = vunpack.c.h.b16 %v150
  %v917 = vunpack.c.l.b16 %v151
  %v918 = vunpack.c.h.b16 %v151
  %v919 = vunpack.c.l.b16 %v152
  %v920 = vunpack.c.h.b16 %v152
  %v921 = vunpack.c.l.b16 %v153
  %v922 = vunpack.c.h.b16 %v153
  %v923 = vunpack.c.l.b16 %v154
  %v924 = vunpack.c.h.b16 %v154
  %v925 = vunpack.c.l.b16 %v155
  %v926 = vunpack.c.h.b16 %v155
  %v927 = vunpack.c.l.b16 %v156
  %v928 = vunpack.c.h.b16 %v156
  %v929 = vunpack.c.l.b16 %v157
  %v930 = vunpack.c.h.b16 %v157
  %v931 = vunpack.c.l.b16 %v158
  %v932 = vunpack.c.h.b16 %v158
  %v933 = vunpack.c.l.b16 %v159
  %v934 = vunpack.c.h.b16 %v159
  %v935 = vunpack.c.l.b16 %v160
  %v936 = vunpack.c.h.b16 %v160
  %v937 = vunpack.c.l.b16 %v161
  %v938 = vunpack.c.h.b16 %v161
  %v939 = vunpack.c.l.b16 %v162
  %v940 = vunpack.c.h.b16 %v162
  %v941 = vunpack.c.l.b16 %v163
  %v942 = vunpack.c.h.b16 %v163
  %v943 = vunpack.c.l.b16 %v164
  %v944 = vunpack.c.h.b16 %v164
  %v945 = vunpack.c.l.b16 %v165
  %v946 = vunpack.c.h.b16 %v165
  %v947 = vunpack.c.l.b16 %v166
  %v948 = vunpack.c.h.b16 %v166
  %v949 = vunpack.c.l.b16 %v167
  %v950 = vunpack.c.h.b16 %v167
  %v951 = vunpack.c.l.b16 %v168
  %v952 = vunpack.c.h.b16 %v168
  %v953 = vunpack.c.l.b16 %v169
  %v954 = vunpack.c.h.b16 %v169
  %v955 = vunpack.c.l.b16 %v170
  %v956 = vunpack.c.h.b16 %v170
  %v957 = vunpack.c.l.b16 %v171
  %v958 = vunpack.c.h.b16 %v171
  %v959 = vunpack.c.l.b16 %v172
  %v960 = vunpack.c.h.b16 %v172
  %v961 = vunpack.c.l.b16 %v173
  %v962 = vunpack.c.h.b16 %v173
  %v963 = vunpack.c.l.b16 %v174
  %v964 = vunpack.c.h.b16 %v174
  %v965 = vunpack.c.l.b16 %v175
  %v966 = vunpack.c.h.b16 %v175
  %v967 = vunpack.c.l.b16 %v176
  %v968 = vunpack.c.h.b16 %v176
  %v969 = vunpack.c.l.b16 %v177
  %v970 = vunpack.c.h.b16 %v177
  %v971 = vunpack.c.l.b16 %v178
  %v972 = vunpack.c.h.b16 %v178
  %v973 = vunpack.c.l.b16 %v179
  %v974 = vunpack.c.h.b16 %v179
  %v975 = vunpack.c.l.b16 %v180
  %v976 = vunpack.c.h.b16 %v180
  %v977 = vunpack.c.l.b16 %v181
  %v978 = vunpack.c.h.b16 %v181
  %v979 = vunpack.c.l.b16 %v182
  %v980 = vunpack.c.h.b16 %v182
  %v981 = vunpack.c.l.b16 %v183
  %v982 = vunpack.c.h.b16 %v183
  %v983 = vunpack.c.l.b16 %v184
  %v984 = vunpack.c.h.b16 %v184
  %v985 = vunpack.c.l.b16 %v185
  %v986 = vunpack.c.h.b16 %v185
  %v987 = vunpack.c.l.b16 %v186
  %v988 = vunpack.c.h.b16 %v186
  %v989 = vunpack.c.l.b16 %v187
  %v990 = vunpack.c.h.b16 %v187
  %v991 = vunpack.c.l.b16 %v188
  %v992 = vunpack.c.h.b16 %v188
  %v993 = vunpack.c.l.b16 %v189
  %v994 = vunpack.c.h.b16 %v189
  %v995 = vunpack.c.l.b16 %v190
  %v996 = vunpack.c.h.b16 %v190
  %v997 = vunpack.c.l.b16 %v191
  %v998 = vunpack.c.h.b16 %v191
  %v999 = vunpack.c.l.b16 %v192
  %v1000 = vunpack.c.h.b16 %v192
  %v1001 = vunpack.c.l.b16 %v193
  %v1002 = vunpack.c.h.b16 %v193
  %v1003 = vunpack.c.l.b16 %v194
  %v1004 = vunpack.c.h.b16 %v194
  %v1005 = vunpack.c.l.b16 %v195
  %v1006 = vunpack.c.h.b16 %v195
  %v1007 = vunpack.c.l.b16 %v196
  %v1008 = vunpack.c.h.b16 %v196
  %v1009 = vunpack.c.l.b16 %v197
  %v1010 = vunpack.c.h.b16 %v197
  %v1011 = vunpack.c.l.b16 %v198
  %v1012 = vunpack.c.h.b16 %v198
  %v1013 = vunpack.c.l.b16 %v199
  %v1014 = vunpack.c.h.b16 %v199
  %v1015 = vunpack.c.l.b16 %v200
  %v1016 = vunpack.c.h.b16 %v200
  %v1017 = vunpack.c.l.b16 %v201
  %v1018 = vunpack.c.h.b16 %v201
  %v1019 = vunpack.c.l.b16 %v202
  %v1020 = vunpack.c.h.b16 %v202
  %v1021 = vunpack.c.l.b16 %v203
  %v1022 = vunpack.c.h.b16 %v203
  %v1023 = vunpack.c.l.b16 %v204
  %v1024 = vunpack.c.h.b16 %v204
  %v1025 = vunpack.c.l.b16 %v205
  %v1026 = vunpack.c.h.b16 %v205
  %v1027 = vunpack.c.l.b16 %v206
  %v1028 = vunpack.c.h.b16 %v206
  %v1029 = vunpack.c.l.b16 %v207
  %v1030 = vunpack.c.h.b16 %v207
  %v1031 = vunpack.c.l.b16 %v208
  %v1032 = vunpack.c.h.b16 %v208
  %v1033 = vunpack.c.l.b16 %v209
  %v1034 = vunpack.c.h.b16 %v209
  %v1035 = vunpack.c.l.b16 %v210
  %v1036 = vunpack.c.h.b16 %v210
  %v1037 = vunpack.c.l.b16 %v211
  %v1038 = vunpack.c.h.b16 %v211
  %v1039 = vunpack.c.l.b16 %v212
  %v1040 = vunpack.c.h.b16 %v212
  %v1041 = vunpack.c.l.b16 %v213
  %v1042 = vunpack.c.h.b16 %v213
  %v1043 = vunpack.c.l.b16 %v214
  %v1044 = vunpack.c.h.b16 %v214
  %v1045 = vunpack.c.l.b16 %v215
  %v1046 = vunpack.c.h.b16 %v215
  %v1047 = vunpack.c.l.b16 %v216
  %v1048 = vunpack.c.h.b16 %v216
  %v1049 = vunpack.c.l.b16 %v217
  %v1050 = vunpack.c.h.b16 %v217
  %v1051 = vunpack.c.l.b16 %v218
  %v1052 = vunpack.c.h.b16 %v218
  %v1053 = vunpack.c.l.b16 %v219
  %v1054 = vunpack.c.h.b16 %v219
  %v1055 = vunpack.c.l.b16 %v220
  %v1056 = vunpack.c.h.b16 %v220
  %v1057 = vunpack.c.l.b16 %v221
  %v1058 = vunpack.c.h.b16 %v221
  %v1059 = vunpack.c.l.b16 %v222
  %v1060 = vunpack.c.h.b16 %v222
  %v1061 = vunpack.c.l.b16 %v223
  %v1062 = vunpack.c.h.b16 %v223
  %v1063 = vunpack.c.l.b16 %v224
  %v1064 = vunpack.c.h.b16 %v224
  %v1065 = vunpack.c.l.b16 %v225
  %v1066 = vunpack.c.h.b16 %v225
  %v1067 = vunpack.c.l.b16 %v226
  %v1068 = vunpack.c.h.b16 %v226
  %v1069 = vunpack.c.l.b16 %v227
  %v1070 = vunpack.c.h.b16 %v227
  %v1071 = vunpack.c.l.b16 %v228
  %v1072 = vunpack.c.h.b16 %v228
  %v1073 = vunpack.c.l.b16 %v229
  %v1074 = vunpack.c.h.b16 %v229
  %v1075 = vunpack.c.l.b16 %v230
  %v1076 = vunpack.c.h.b16 %v230
  %v1077 = vunpack.c.l.b16 %v231
  %v1078 = vunpack.c.h.b16 %v231
  %v1079 = vunpack.c.l.b16 %v232
  %v1080 = vunpack.c.h.b16 %v232
  %v1081 = vunpack.c.l.b16 %v233
  %v1082 = vunpack.c.h.b16 %v233
  %v1083 = vunpack.c.l.b16 %v234
  %v1084 = vunpack.c.h.b16 %v234
  %v1085 = vunpack.c.l.b16 %v235
  %v1086 = vunpack.c.h.b16 %v235
  %v1087 = vunpack.c.l.b16 %v236
  %v1088 = vunpack.c.h.b16 %v236
  %v1089 = vunpack.c.l.b16 %v237
  %v1090 = vunpack.c.h.b16 %v237
  %v1091 = vunpack.c.l.b16 %v238
  %v1092 = vunpack.c.h.b16 %v238
  %v1093 = vunpack.c.l.b16 %v239
  %v1094 = vunpack.c.h.b16 %v239
  %v1095 = vunpack.c.l.b16 %v240
  %v1096 = vunpack.c.h.b16 %v240
  %v1097 = vunpack.c.l.b16 %v241
  %v1098 = vunpack.c.h.b16 %v241
  %v1099 = vunpack.c.l.b16 %v242
  %v1100 = vunpack.c.h.b16 %v242
  %v1101 = vunpack.c.l.b16 %v243
  %v1102 = vunpack.c.h.b16 %v243
  %v1103 = vunpack.c.l.b16 %v244
  %v1104 = vunpack.c.h.b16 %v244
  %v1105 = vunpack.c.l.b16 %v245
  %v1106 = vunpack.c.h.b16 %v245
  %v1107 = vunpack.c.l.b16 %v246
  %v1108 = vunpack.c.h.b16 %v246
  %v1109 = vunpack.c.l.b16 %v247
  %v1110 = vunpack.c.h.b16 %v247
  %v1111 = vunpack.c.l.b16 %v248
  %v1112 = vunpack.c.h.b16 %v248
  %v1113 = vunpack.c.l.b16 %v249
  %v1114 = vunpack.c.h.b16 %v249
  %v1115 = vunpack.c.l.b16 %v250
  %v1116 = vunpack.c.h.b16 %v250
  %v1117 = vunpack.c.l.b16 %v251
  %v1118 = vunpack.c.h.b16 %v251
  %v1119 = vunpack.c.l.b16 %v252
  %v1120 = vunpack.c.h.b16 %v252
  %v1121 = vunpack.c.l.b16 %v253
  %v1122 = vunpack.c.h.b16 %v253
  %v1123 = vunpack.c.l.b16 %v254
  %v1124 = vunpack.c.h.b16 %v254
  %v1125 = vunpack.c.l.b16 %v255
  %v1126 = vunpack.c.h.b16 %v255
  %v1127 = vunpack.c.l.b16 %v256
  %v1128 = vunpack.c.h.b16 %v256
  %v1129 = vunpack.c.l.b16 %v257
  %v1130 = vunpack.c.h.b16 %v257
  %v1131 = vunpack.c.l.b16 %v258
  %v1132 = vunpack.c.h.b16 %v258
  %v1133 = vunpack.c.l.b16 %v259
  %v1134 = vunpack.c.h.b16 %v259
  %v1135 = vunpack.c.l.b16 %v260
  %v1136 = vunpack.c.h.b16 %v260
  %v1137 = vunpack.c.l.b16 %v261
  %v1138 = vunpack.c.h.b16 %v261
  %v1139 = vunpack.c.l.b16 %v262
  %v1140 = vunpack.c.h.b16 %v262
  %v1141 = vunpack.c.l.b16 %v263
  %v1142 = vunpack.c.h.b16 %v263
  %v1143 = vunpack.c.l.b16 %v264
  %v1144 = vunpack.c.h.b16 %v264
  %v1145 = vunpack.c.l.b16 %v265
  %v1146 = vunpack.c.h.b16 %v265
  %v1147 = vunpack.c.l.b16 %v266
  %v1148 = vunpack.c.h.b16 %v266
  %v1149 = vunpack.c.l.b16 %v267
  %v1150 = vunpack.c.h.b16 %v267
  %v1151 = vunpack.c.l.b16 %v268
  %v1152 = vunpack.c.h.b16 %v268
  %v1153 = vunpack.c.l.b16 %v269
  %v1154 = vunpack.c.h.b16 %v269
  %v1155 = vunpack.c.l.b16 %v270
  %v1156 = vunpack.c.h.b16 %v270
  %v1157 = vunpack.c.l.b16 %v271
  %v1158 = vunpack.c.h.b16 %v271
  %v1159 = vunpack.c.l.b16 %v272
  %v1160 = vunpack.c.h.b16 %v272
  %v1161 = vunpack.c.l.b16 %v273
  %v1162 = vunpack.c.h.b16 %v273
  %v1163 = vunpack.c.l.b16 %v274
  %v1164 = vunpack.c.h.b16 %v274
  %v1165 = vunpack.c.l.b16 %v275
  %v1166 = vunpack.c.h.b16 %v275
  %v1167 = vunpack.c.l.b16 %v276
  %v1168 = vunpack.c.h.b16 %v276
  %v1169 = vunpack.c.l.b16 %v277
  %v1170 = vunpack.c.h.b16 %v277
  %v1171 = vunpack.c.l.b16 %v278
  %v1172 = vunpack.c.h.b16 %v278
  %v1173 = vunpack.c.l.b16 %v279
  %v1174 = vunpack.c.h.b16 %v279
  %v1175 = vunpack.c.l.b16 %v280
  %v1176 = vunpack.c.h.b16 %v280
  %v1177 = vunpack.c.l.b16 %v281
  %v1178 = vunpack.c.h.b16 %v281
  %v1179 = vunpack.c.l.b16 %v282
  %v1180 = vunpack.c.h.b16 %v282
  %v1181 = vunpack.c.l.b16 %v283
  %v1182 = vunpack.c.h.b16 %v283
  %v1183 = vunpack.c.l.b16 %v284
  %v1184 = vunpack.c.h.b16 %v284
  %v1185 = vunpack.c.l.b16 %v285
  %v1186 = vunpack.c.h.b16 %v285
  %v1187 = vunpack.c.l.b16 %v286
  %v1188 = vunpack.c.h.b16 %v286
  %v1189 = vunpack.c.l.b16 %v287
  %v1190 = vunpack.c.h.b16 %v287
  %v1191 = vunpack.c.l.b16 %v288
  %v1192 = vunpack.c.h.b16 %v288
  %v1193 = vunpack.c.l.b16 %v289
  %v1194 = vunpack.c.h.b16 %v289
  %v1195 = vunpack.c.l.b16 %v290
  %v1196 = vunpack.c.h.b16 %v290
  %v1197 = vunpack.c.l.b16 %v291
  %v1198 = vunpack.c.h.b16 %v291
  %v1199 = vunpack.c.l.b16 %v292
  %v1200 = vunpack.c.h.b16 %v292
  %v1201 = vunpack.c.l.b16 %v293
  %v1202 = vunpack.c.h.b16 %v293
  %v1203 = vunpack.c.l.b16 %v294
  %v1204 = vunpack.c.h.b16 %v294
  %v1205 = vunpack.c.l.b16 %v295
  %v1206 = vunpack.c.h.b16 %v295
  %v1207 = vunpack.c.l.b16 %v296
  %v1208 = vunpack.c.h.b16 %v296
  %v1209 = vunpack.c.l.b16 %v297
  %v1210 = vunpack.c.h.b16 %v297
  %v1211 = vunpack.c.l.b16 %v298
  %v1212 = vunpack.c.h.b16 %v298
  %v1213 = vunpack.c.l.b16 %v299
  %v1214 = vunpack.c.h.b16 %v299
  %v1215 = vunpack.c.l.b16 %v300
  %v1216 = vunpack.c.h.b16 %v300
  %v1217 = vunpack.c.l.b16 %v301
  %v1218 = vunpack.c.h.b16 %v301
  %v1219 = vunpack.c.l.b16 %v302
  %v1220 = vunpack.c.h.b16 %v302
  %v1221 = vunpack.c.l.b16 %v303
  %v1222 = vunpack.c.h.b16 %v303
  %v1223 = vunpack.c.l.b16 %v304
  %v1224 = vunpack.c.h.b16 %v304
  %v1225 = vunpack.c.l.b16 %v305
  %v1226 = vunpack.c.h.b16 %v305
  %v1227 = vunpack.c.l.b16 %v306
  %v1228 = vunpack.c.h.b16 %v306
  %v1229 = vunpack.c.l.b16 %v307
  %v1230 = vunpack.c.h.b16 %v307
  %v1231 = vunpack.c.l.b16 %v308
  %v1232 = vunpack.c.h.b16 %v308
  %v1233 = vunpack.c.l.b16 %v309
  %v1234 = vunpack.c.h.b16 %v309
  %v1235 = vunpack.c.l.b16 %v310
  %v1236 = vunpack.c.h.b16 %v310
  %v1237 = vunpack.c.l.b16 %v311
  %v1238 = vunpack.c.h.b16 %v311
  %v1239 = vunpack.c.l.b16 %v312
  %v1240 = vunpack.c.h.b16 %v312
  %v1241 = vpack.c.b16 %v731, %v729
  %v1242 = vpack.c.b16 %v732, %v730
  %v1243 = vpack.c.b16 %v735, %v733
  %v1244 = vpack.c.b16 %v736, %v734
  %v1245 = vpack.c.b16 %v739, %v737
  %v1246 = vpack.c.b16 %v740, %v738
  %v1247 = vpack.c.b16 %v743, %v741
  %v1248 = vpack.c.b16 %v744, %v742
  %v1249 = vpack.c.b16 %v747, %v745
  %v1250 = vpack.c.b16 %v748, %v746
  %v1251 = vpack.c.b16 %v751, %v749
  %v1252 = vpack.c.b16 %v752, %v750
  %v1253 = vpack.c.b16 %v755, %v753
  %v1254 = vpack.c.b16 %v756, %v754
  %v1255 = vpack.c.b16 %v759, %v757
  %v1256 = vpack.c.b16 %v760, %v758
  %v1257 = vpack.c.b16 %v763, %v761
  %v1258 = vpack.c.b16 %v764, %v762
  %v1259 = vpack.c.b16 %v767, %v765
  %v1260 = vpack.c.b16 %v768, %v766
  %v1261 = vpack.c.b16 %v771, %v769
  %v1262 = vpack.c.b16 %v772, %v770
  %v1263 = vpack.c.b16 %v775, %v773
  %v1264 = vpack.c.b16 %v776, %v774
  %v1265 = vpack.c.b16 %v779, %v777
  %v1266 = vpack.c.b16 %v780, %v778
  %v1267 = vpack.c.b16 %v783, %v781
  %v1268 = vpack.c.b16 %v784, %v782
  %v1269 = vpack.c.b16 %v787, %v785
  %v1270 = vpack.c.b16 %v788, %v786
  %v1271 = vpack.c.b16 %v791, %v789
  %v1272 = vpack.c.b16 %v792, %v790
  %v1273 = vpack.c.b16 %v795, %v793
  %v1274 = vpack.c.b16 %v796, %v794
  %v1275 = vpack.c.b16 %v799, %v797
  %v1276 = vpack.c.b16 %v800, %v798
  %v1277 = vpack.c.b16 %v803, %v801
  %v1278 = vpack.c.b16 %v804, %v802
  %v1279 = vpack.c.b16 %v807, %v805
  %v1280 = vpack.c.b16 %v808, %v806
  %v1281 = vpack.c.b16 %v811, %v809
  %v1282 = vpack.c.b16 %v812, %v810
  %v1283 = vpack.c.b16 %v815, %v813
  %v1284 = vpack.c.b16 %v816, %v814
  %v1285 = vpack.c.b16 %v819, %v817
  %v1286 = vpack.c.b16 %v820, %v818
  %v1287 = vpack.c.b16 %v823, %v821
  %v1288 = vpack.c.b16 %v824, %v822
  %v1289 = vpack.c.b16 %v827, %v825
  %v1290 = vpack.c.b16 %v828, %v826
  %v1291 = vpack.c.b16 %v831, %v829
  %v1292 = vpack.c.b16 %v832, %v830
  %v1293 = vpack.c.b16 %v835, %v833
  %v1294 = vpack.c.b16 %v836, %v834
  %v1295 = vpack.c.b16 %v839, %v837
  %v1296 = vpack.c.b16 %v840, %v838
  %v1297 = vpack.c.b16 %v843, %v841
  %v1298 = vpack.c.b16 %v844, %v842
  %v1299 = vpack.c.b16 %v847, %v845
  %v1300 = vpack.c.b16 %v848, %v846
  %v1301 = vpack.c.b16 %v851, %v849
  %v1302 = vpack.c.b16 %v852, %v850
  %v1303 = vpack.c.b16 %v855, %v853
  %v1304 = vpack.c.b16 %v856, %v854
  %v1305 = vpack.c.b16 %v859, %v857
  %v1306 = vpack.c.b16 %v860, %v858
  %v1307 = vpack.c.b16 %v863, %v861
  %v1308 = vpack.c.b16 %v864, %v862
  %v1309 = vpack.c.b16 %v867, %v865
  %v1310 = vpack.c.b16 %v868, %v866
  %v1311 = vpack.c.b16 %v871, %v869
  %v1312 = vpack.c.b16 %v872, %v870
  %v1313 = vpack.c.b16 %v875, %v873
  %v1314 = vpack.c.b16 %v876, %v874
  %v1315 = vpack.c.b16 %v879, %v877
  %v1316 = vpack.c.b16 %v880, %v878
  %v1317 = vpack.c.b16 %v883, %v881
  %v1318 = vpack.c.b16 %v884, %v882
  %v1319 = vpack.c.b16 %v887, %v885
  %v1320 = vpack.c.b16 %v888, %v886
  %v1321 = vpack.c.b16 %v891, %v889
  %v1322 = vpack.c.b16 %v892, %v890
  %v1323 = vpack.c.b16 %v895, %v893
  %v1324 = vpack.c.b16 %v896, %v894
  %v1325 = vpack.c.b16 %v899, %v897
  %v1326 = vpack.c.b16 %v900, %v898
  %v1327 = vpack.c.b16 %v903, %v901
  %v1328 = vpack.c.b16 %v904, %v902
  %v1329 = vpack.c.b16 %v907, %v905
  %v1330 = vpack.c.b16 %v908, %v906
  %v1331 = vpack.c.b16 %v911, %v909
  %v1332 = vpack.c.b16 %v912, %v910
  %v1333 = vpack.c.b16 %v915, %v913
  %v1334 = vpack.c.b16 %v916, %v914
  %v1335 = vpack.c.b16 %v919, %v917
  %v1336 = vpack.c.b16 %v920, %v918
  %v1337 = vpack.c.b16 %v923, %v921
  %v1338 = vpack.c.b16 %v924, %v922
  %v1339 = vpack.c.b16 %v927, %v925
  %v1340 = vpack.c.b16 %v928, %v926
  %v1341 = vpack.c.b16 %v931, %v929
  %v1342 = vpack.c.b16 %v932, %v930
  %v1343 = vpack.c.b16 %v935, %v933
  %v1344 = vpack.c.b16 %v936, %v934
  %v1345 = vpack.c.b16 %v939, %v937
  %v1346 = vpack.c.b16 %v940, %v938
  %v1347 = vpack.c.b16 %v943, %v941
  %v1348 = vpack.c.b16 %v944, %v942
  %v1349 = vpack.c.b16 %v947, %v945
  %v1350 = vpack.c.b16 %v948, %v946
  %v1351 = vpack.c.b16 %v951, %v949
  %v1352 = vpack.c.b16 %v952, %v950
  %v1353 = vpack.c.b16 %v955, %v953
  %v1354 = vpack.c.b16 %v956, %v954
  %v1355 = vpack.c.b16 %v959, %v957
  %v1356 = vpack.c.b16 %v960, %v958
  %v1357 = vpack.c.b16 %v963, %v961
  %v1358 = vpack.c.b16 %v964, %v962
  %v1359 = vpack.c.b16 %v967, %v965
  %v1360 = vpack.c.b16 %v968, %v966
  %v1361 = vpack.c.b16 %v971, %v969
  %v1362 = vpack.c.b16 %v972, %v970
  %v1363 = vpack.c.b16 %v975, %v973
  %v1364 = vpack.c.b16 %v976, %v974
  %v1365 = vpack.c.b16 %v979, %v977
  %v1366 = vpack.c.b16 %v980, %v978
  %v1367 = vpack.c.b16 %v983, %v981
  %v1368 = vpack.c.b16 %v984, %v982
  %v1369 = vpack.c.b16 %v987, %v985
  %v1370 = vpack.c.b16 %v988, %v986
  %v1371 = vpack.c.b16 %v991, %v989
  %v1372 = vpack.c.b16 %v992, %v990
  %v1373 = vpack.c.b16 %v995, %v993
  %v1374 = vpack.c.b16 %v996, %v994
  %v1375 = vpack.c.b16 %v999, %v997
  %v1376 = vpack.c.b16 %v1000, %v998
  %v1377 = vpack.c.b16 %v1003, %v1001
  %v1378 = vpack.c.b16 %v1004, %v1002
  %v1379 = vpack.c.b16 %v1007, %v1005
  %v1380 = vpack.c.b16 %v1008, %v1006
  %v1381 = vpack.c.b16 %v1011, %v1009
  %v1382 = vpack.c.b16 %v1012, %v1010
  %v1383 = vpack.c.b16 %v1015, %v1013
  %v1384 = vpack.c.b16 %v1016, %v1014
  %v1385 = vpack.c.b16 %v1019, %v1017
  %v1386 = vpack.c.b16 %v1020, %v1018
  %v1387 = vpack.c.b16 %v1023, %v1021
  %v1388 = vpack.c.b16 %v1024, %v1022
  %v1389 = vpack.c.b16 %v1027, %v1025
  %v1390 = vpack.c.b16 %v1028, %v1026
  %v1391 = vpack.c.b16 %v1031, %v1029
  %v1392 = vpack.c.b16 %v1032, %v1030
  %v1393 = vpack.c.b16 %v1035, %v1033
  %v1394 = vpack.c.b16 %v1036, %v1034
  %v1395 = vpack.c.b16 %v1039, %v1037
  %v1396 = vpack.c.b16 %v1040, %v1038
  %v1397 = vpack.c.b16 %v1043, %v1041
  %v1398 = vpack.c.b16 %v1044, %v1042
  %v1399 = vpack.c.b16 %v1047, %v1045
  %v1400 = vpack.c.b16 %v1048, %v1046
  %v1401 = vpack.c.b16 %v1051, %v1049
  %v1402 = vpack.c.b16 %v1052, %v1050
  %v1403 = vpack.c.b16 %v1055, %v1053
  %v1404 = vpack.c.b16 %v1056, %v1054
  %v1405 = vpack.c.b16 %v1059, %v1057
  %v1406 = vpack.c.b16 %v1060, %v1058
  %v1407 = vpack.c.b16 %v1063, %v1061
  %v1408 = vpack.c.b16 %v1064, %v1062
  %v1409 = vpack.c.b16 %v1067, %v1065
  %v1410 = vpack.c.b16 %v1068, %v1066
  %v1411 = vpack.c.b16 %v1071, %v1069
  %v1412 = vpack.c.b16 %v1072, %v1070
  %v1413 = vpack.c.b16 %v1075, %v1073
  %v1414 = vpack.c.b16 %v1076, %v1074
  %v1415 = vpack.c.b16 %v1079, %v1077
  %v1416 = vpack.c.b16 %v1080, %v1078
  %v1417 = vpack.c.b16 %v1083, %v1081
  %v1418 = vpack.c.b16 %v1084, %v1082
  %v1419 = vpack.c.b16 %v1087, %v1085
  %v1420 = vpack.c.b16 %v1088, %v1086
  %v1421 = vpack.c.b16 %v1091, %v1089
  %v1422 = vpack.c.b16 %v1092, %v1090
  %v1423 = vpack.c.b16 %v1095, %v1093
  %v1424 = vpack.c.b16 %v1096, %v1094
  %v1425 = vpack.c.b16 %v1099, %v1097
  %v1426 = vpack.c.b16 %v1100, %v1098
  %v1427 = vpack.c.b16 %v1103, %v1101
  %v1428 = vpack.c.b16 %v1104, %v1102
  %v1429 = vpack.c.b16 %v1107, %v1105
  %v1430 = vpack.c.b16 %v1108, %v1106
  %v1431 = vpack.c.b16 %v1111, %v1109
  %v1432 = vpack.c.b16 %v1112, %v1110
  %v1433 = vpack.c.b16 %v1115, %v1113
  %v1434 = vpack.c.b16 %v1116, %v1114
  %v1435 = vpack.c.b16 %v1119, %v1117
  %v1436 = vpack.c.b16 %v1120, %v1118
  %v1437 = vpack.c.b16 %v1123, %v1121
  %v1438 = vpack.c.b16 %v1124, %v1122
  %v1439 = vpack.c.b16 %v1127, %v1125
  %v1440 = vpack.c.b16 %v1128, %v1126
  %v1441 = vpack.c.b16 %v1131, %v1129
  %v1442 = vpack.c.b16 %v1132, %v1130
  %v1443 = vpack.c.b16 %v1135, %v1133
  %v1444 = vpack.c.b16 %v1136, %v1134
  %v1445 = vpack.c.b16 %v1139, %v1137
  %v1446 = vpack.c.b16 %v1140, %v1138
  %v1447 = vpack.c.b16 %v1143, %v1141
  %v1448 = vpack.c.b16 %v1144, %v1142
  %v1449 = vpack.c.b16 %v1147, %v1145
  %v1450 = vpack.c.b16 %v1148, %v1146
  %v1451 = vpack.c.b16 %v1151, %v1149
  %v1452 = vpack.c.b16 %v1152, %v1150
  %v1453 = vpack.c.b16 %v1155, %v1153
  %v1454 = vpack.c.b16 %v1156, %v1154
  %v1455 = vpack.c.b16 %v1159, %v1157
  %v1456 = vpack.c.b16 %v1160, %v1158
  %v1457 = vpack.c.b16 %v1163, %v1161
  %v1458 = vpack.c.b16 %v1164, %v1162
  %v1459 = vpack.c.b16 %v1167, %v1165
  %v1460 = vpack.c.b16 %v1168, %v1166
  %v1461 = vpack.c.b16 %v1171, %v1169
  %v1462 = vpack.c.b16 %v1172, %v1170
  %v1463 = vpack.c.b16 %v1175, %v1173
  %v1464 = vpack.c.b16 %v1176, %v1174
  %v1465 = vpack.c.b16 %v1179, %v1177
  %v1466 = vpack.c.b16 %v1180, %v1178
  %v1467 = vpack.c.b16 %v1183, %v1181
  %v1468 = vpack.c.b16 %v1184, %v1182
  %v1469 = vpack.c.b16 %v1187, %v1185
  %v1470 = vpack.c.b16 %v1188, %v1186
  %v1471 = vpack.c.b16 %v1191, %v1189
  %v1472 = vpack.c.b16 %v1192, %v1190
  %v1473 = vpack.c.b16 %v1195, %v1193
  %v1474 = vpack.c.b16 %v1196, %v1194
  %v1475 = vpack.c.b16 %v1199, %v1197
  %v1476 = vpack.c.b16 %v1200, %v1198
  %v1477 = vpack.c.b16 %v1203, %v1201
  %v1478 = vpack.c.b16 %v1204, %v1202
  %v1479 = vpack.c.b16 %v1207, %v1205
  %v1480 = vpack.c.b16 %v1208, %v1206
  %v1481 = vpack.c.b16 %v1211, %v1209
  %v1482 = vpack.c.b16 %v1212, %v1210
  %v1483 = vpack.c.b16 %v1215, %v1213
  %v1484 = vpack.c.b16 %v1216, %v1214
  %v1485 = vpack.c.b16 %v1219, %v1217
  %v1486 = vpack.c.b16 %v1220, %v1218
  %v1487 = vpack.c.b16 %v1223, %v1221
  %v1488 = vpack.c.b16 %v1224, %v1222
  %v1489 = vpack.c.b16 %v1227, %v1225
  %v1490 = vpack.c.b16 %v1228, %v1226
  %v1491 = vpack.c.b16 %v1231, %v1229
  %v1492 = vpack.c.b16 %v1232, %v1230
  %v1493 = vpack.c.b16 %v1235, %v1233
  %v1494 = vpack.c.b16 %v1236, %v1234
  %v1495 = vpack.c.b16 %v1239, %v1237
  %v1496 = vpack.c.b16 %v1240, %v1238
  %1753 = vmatprep.subr.bf16.mxu0 %v1242
  %1754 = vmatpush1.bf16.msra.mxu0 %v1241
  %1755 = vmatprep.subr.bf16.mxu0 %v1244
  %1756 = vmatpush1.bf16.msra.mxu0 %v1243
  %1757 = vmatprep.subr.bf16.mxu0 %v1246
  %1758 = vmatpush1.bf16.msra.mxu0 %v1245
  %1759 = vmatprep.subr.bf16.mxu0 %v1248
  %1760 = vmatpush1.bf16.msra.mxu0 %v1247
  %1761 = vmatprep.subr.bf16.mxu0 %v1250
  %1762 = vmatpush1.bf16.msra.mxu0 %v1249
  %1763 = vmatprep.subr.bf16.mxu0 %v1252
  %1764 = vmatpush1.bf16.msra.mxu0 %v1251
  %1765 = vmatprep.subr.bf16.mxu0 %v1254
  %1766 = vmatpush1.bf16.msra.mxu0 %v1253
  %1767 = vmatprep.subr.bf16.mxu0 %v1256
  %1768 = vmatpush1.bf16.msra.mxu0 %v1255
  %1769 = vmatprep.subr.bf16.mxu0 %v1258
  %1770 = vmatpush1.bf16.msra.mxu0 %v1257
  %1771 = vmatprep.subr.bf16.mxu0 %v1260
  %1772 = vmatpush1.bf16.msra.mxu0 %v1259
  %1773 = vmatprep.subr.bf16.mxu0 %v1262
  %1774 = vmatpush1.bf16.msra.mxu0 %v1261
  %1775 = vmatprep.subr.bf16.mxu0 %v1264
  %1776 = vmatpush1.bf16.msra.mxu0 %v1263
  %1777 = vmatprep.subr.bf16.mxu0 %v1266
  %1778 = vmatpush1.bf16.msra.mxu0 %v1265
  %1779 = vmatprep.subr.bf16.mxu0 %v1268
  %1780 = vmatpush1.bf16.msra.mxu0 %v1267
  %1781 = vmatprep.subr.bf16.mxu0 %v1270
  %1782 = vmatpush1.bf16.msra.mxu0 %v1269
  %1783 = vmatprep.subr.bf16.mxu0 %v1272
  %1784 = vmatpush1.bf16.msra.mxu0 %v1271
  %1785 = vmatprep.mubr.bf16.mxu0 %v410
  %1786 = vmatmul.mubr.bf16.gmra.mrb[0].mxu0 %v409
  %v1787 = vpop.f32.mrb[0].mxu0
  %v1788 = vadd.f32 0.0, %v1787
  %v1789 = vpop.f32.mrb[0].mxu0
  %v1790 = vadd.f32 0.0, %v1789
  %v1791 = vpop.f32.mrb[0].mxu0
  %v1792 = vadd.f32 0.0, %v1791
  %v1793 = vpop.f32.mrb[0].mxu0
  %v1794 = vadd.f32 0.0, %v1793
  %1795 = vmatprep.mubr.bf16.mxu0 %v426
  %1796 = vmatmul.mubr.bf16.gmra.mrb[0].mxu0 %v425
  %v1797 = vpop.f32.mrb[0].mxu0
  %v1798 = vadd.f32 0.0, %v1797
  %v1799 = vpop.f32.mrb[0].mxu0
  %v1800 = vadd.f32 0.0, %v1799
  %v1801 = vpop.f32.mrb[0].mxu0
  %v1802 = vadd.f32 0.0, %v1801
  %v1803 = vpop.f32.mrb[0].mxu0
  %v1804 = vadd.f32 0.0, %v1803
  %1805 = vdwg.mxu0
  %1806 = vmatprep.subr.bf16.mxu0 %v1274
  %1807 = vmatpush1.bf16.msra.mxu0 %v1273
  %1808 = vmatprep.subr.bf16.mxu0 %v1276
  %1809 = vmatpush1.bf16.msra.mxu0 %v1275
  %1810 = vmatprep.subr.bf16.mxu0 %v1278
  %1811 = vmatpush1.bf16.msra.mxu0 %v1277
  %1812 = vmatprep.subr.bf16.mxu0 %v1280
  %1813 = vmatpush1.bf16.msra.mxu0 %v1279
  %1814 = vmatprep.subr.bf16.mxu0 %v1282
  %1815 = vmatpush1.bf16.msra.mxu0 %v1281
  %1816 = vmatprep.subr.bf16.mxu0 %v1284
  %1817 = vmatpush1.bf16.msra.mxu0 %v1283
  %1818 = vmatprep.subr.bf16.mxu0 %v1286
  %1819 = vmatpush1.bf16.msra.mxu0 %v1285
  %1820 = vmatprep.subr.bf16.mxu0 %v1288
  %1821 = vmatpush1.bf16.msra.mxu0 %v1287
  %1822 = vmatprep.subr.bf16.mxu0 %v1290
  %1823 = vmatpush1.bf16.msra.mxu0 %v1289
  %1824 = vmatprep.subr.bf16.mxu0 %v1292
  %1825 = vmatpush1.bf16.msra.mxu0 %v1291
  %1826 = vmatprep.subr.bf16.mxu0 %v1294
  %1827 = vmatpush1.bf16.msra.mxu0 %v1293
  %1828 = vmatprep.subr.bf16.mxu0 %v1296
  %1829 = vmatpush1.bf16.msra.mxu0 %v1295
  %1830 = vmatprep.subr.bf16.mxu0 %v1298
  %1831 = vmatpush1.bf16.msra.mxu0 %v1297
  %1832 = vmatprep.subr.bf16.mxu0 %v1300
  %1833 = vmatpush1.bf16.msra.mxu0 %v1299
  %1834 = vmatprep.subr.bf16.mxu0 %v1302
  %1835 = vmatpush1.bf16.msra.mxu0 %v1301
  %1836 = vmatprep.subr.bf16.mxu0 %v1304
  %1837 = vmatpush1.bf16.msra.mxu0 %v1303
  %1838 = vmatprep.mubr.bf16.mxu0 %v412
  %1839 = vmatmul.mubr.bf16.gmra.mrb[0].mxu0 %v411
  %v1840 = vpop.f32.mrb[0].mxu0
  %v1841 = vadd.f32 %v1788, %v1840
  %v1842 = vpop.f32.mrb[0].mxu0
  %v1843 = vadd.f32 %v1790, %v1842
  %v1844 = vpop.f32.mrb[0].mxu0
  %v1845 = vadd.f32 %v1792, %v1844
  %v1846 = vpop.f32.mrb[0].mxu0
  %v1847 = vadd.f32 %v1794, %v1846
  %1848 = vmatprep.mubr.bf16.mxu0 %v428
  %1849 = vmatmul.mubr.bf16.gmra.mrb[0].mxu0 %v427
  %v1850 = vpop.f32.mrb[0].mxu0
  %v1851 = vadd.f32 %v1798, %v1850
  %v1852 = vpop.f32.mrb[0].mxu0
  %v1853 = vadd.f32 %v1800, %v1852
  %v1854 = vpop.f32.mrb[0].mxu0
  %v1855 = vadd.f32 %v1802, %v1854
  %v1856 = vpop.f32.mrb[0].mxu0
  %v1857 = vadd.f32 %v1804, %v1856
  %1858 = vdwg.mxu0
  %1859 = vmatprep.subr.bf16.mxu0 %v1306
  %1860 = vmatpush1.bf16.msra.mxu0 %v1305
  %1861 = vmatprep.subr.bf16.mxu0 %v1308
  %1862 = vmatpush1.bf16.msra.mxu0 %v1307
  %1863 = vmatprep.subr.bf16.mxu0 %v1310
  %1864 = vmatpush1.bf16.msra.mxu0 %v1309
  %1865 = vmatprep.subr.bf16.mxu0 %v1312
  %1866 = vmatpush1.bf16.msra.mxu0 %v1311
  %1867 = vmatprep.subr.bf16.mxu0 %v1314
  %1868 = vmatpush1.bf16.msra.mxu0 %v1313
  %1869 = vmatprep.subr.bf16.mxu0 %v1316
  %1870 = vmatpush1.bf16.msra.mxu0 %v1315
  %1871 = vmatprep.subr.bf16.mxu0 %v1318
  %1872 = vmatpush1.bf16.msra.mxu0 %v1317
  %1873 = vmatprep.subr.bf16.mxu0 %v1320
  %1874 = vmatpush1.bf16.msra.mxu0 %v1319
  %1875 = vmatprep.subr.bf16.mxu0 %v1322
  %1876 = vmatpush1.bf16.msra.mxu0 %v1321
  %1877 = vmatprep.subr.bf16.mxu0 %v1324
  %1878 = vmatpush1.bf16.msra.mxu0 %v1323
  %1879 = vmatprep.subr.bf16.mxu0 %v1326
  %1880 = vmatpush1.bf16.msra.mxu0 %v1325
  %1881 = vmatprep.subr.bf16.mxu0 %v1328
  %1882 = vmatpush1.bf16.msra.mxu0 %v1327
  %1883 = vmatprep.subr.bf16.mxu0 %v1330
  %1884 = vmatpush1.bf16.msra.mxu0 %v1329
  %1885 = vmatprep.subr.bf16.mxu0 %v1332
  %1886 = vmatpush1.bf16.msra.mxu0 %v1331
  %1887 = vmatprep.subr.bf16.mxu0 %v1334
  %1888 = vmatpush1.bf16.msra.mxu0 %v1333
  %1889 = vmatprep.subr.bf16.mxu0 %v1336
  %1890 = vmatpush1.bf16.msra.mxu0 %v1335
  %1891 = vmatprep.mubr.bf16.mxu0 %v414
  %1892 = vmatmul.mubr.bf16.gmra.mrb[0].mxu0 %v413
  %v1893 = vpop.f32.mrb[0].mxu0
  %v1894 = vadd.f32 %v1841, %v1893
  %v1895 = vpop.f32.mrb[0].mxu0
  %v1896 = vadd.f32 %v1843, %v1895
  %v1897 = vpop.f32.mrb[0].mxu0
  %v1898 = vadd.f32 %v1845, %v1897
  %v1899 = vpop.f32.mrb[0].mxu0
  %v1900 = vadd.f32 %v1847, %v1899
  %1901 = vmatprep.mubr.bf16.mxu0 %v430
  %1902 = vmatmul.mubr.bf16.gmra.mrb[0].mxu0 %v429
  %v1903 = vpop.f32.mrb[0].mxu0
  %v1904 = vadd.f32 %v1851, %v1903
  %v1905 = vpop.f32.mrb[0].mxu0
  %v1906 = vadd.f32 %v1853, %v1905
  %v1907 = vpop.f32.mrb[0].mxu0
  %v1908 = vadd.f32 %v1855, %v1907
  %v1909 = vpop.f32.mrb[0].mxu0
  %v1910 = vadd.f32 %v1857, %v1909
  %1911 = vdwg.mxu0
  %1912 = vmatprep.subr.bf16.mxu0 %v1338
  %1913 = vmatpush1.bf16.msra.mxu0 %v1337
  %1914 = vmatprep.subr.bf16.mxu0 %v1340
  %1915 = vmatpush1.bf16.msra.mxu0 %v1339
  %1916 = vmatprep.subr.bf16.mxu0 %v1342
  %1917 = vmatpush1.bf16.msra.mxu0 %v1341
  %1918 = vmatprep.subr.bf16.mxu0 %v1344
  %1919 = vmatpush1.bf16.msra.mxu0 %v1343
  %1920 = vmatprep.subr.bf16.mxu0 %v1346
  %1921 = vmatpush1.bf16.msra.mxu0 %v1345
  %1922 = vmatprep.subr.bf16.mxu0 %v1348
  %1923 = vmatpush1.bf16.msra.mxu0 %v1347
  %1924 = vmatprep.subr.bf16.mxu0 %v1350
  %1925 = vmatpush1.bf16.msra.mxu0 %v1349
  %1926 = vmatprep.subr.bf16.mxu0 %v1352
  %1927 = vmatpush1.bf16.msra.mxu0 %v1351
  %1928 = vmatprep.subr.bf16.mxu0 %v1354
  %1929 = vmatpush1.bf16.msra.mxu0 %v1353
  %1930 = vmatprep.subr.bf16.mxu0 %v1356
  %1931 = vmatpush1.bf16.msra.mxu0 %v1355
  %1932 = vmatprep.subr.bf16.mxu0 %v1358
  %1933 = vmatpush1.bf16.msra.mxu0 %v1357
  %1934 = vmatprep.subr.bf16.mxu0 %v1360
  %1935 = vmatpush1.bf16.msra.mxu0 %v1359
  %1936 = vmatprep.subr.bf16.mxu0 %v1362
  %1937 = vmatpush1.bf16.msra.mxu0 %v1361
  %1938 = vmatprep.subr.bf16.mxu0 %v1364
  %1939 = vmatpush1.bf16.msra.mxu0 %v1363
  %1940 = vmatprep.subr.bf16.mxu0 %v1366
  %1941 = vmatpush1.bf16.msra.mxu0 %v1365
  %1942 = vmatprep.subr.bf16.mxu0 %v1368
  %1943 = vmatpush1.bf16.msra.mxu0 %v1367
  %1944 = vmatprep.mubr.bf16.mxu0 %v416
  %1945 = vmatmul.mubr.bf16.gmra.mrb[0].mxu0 %v415
  %v1946 = vpop.f32.mrb[0].mxu0
  %v1947 = vadd.f32 %v1894, %v1946
  %v1948 = vpop.f32.mrb[0].mxu0
  %v1949 = vadd.f32 %v1896, %v1948
  %v1950 = vpop.f32.mrb[0].mxu0
  %v1951 = vadd.f32 %v1898, %v1950
  %v1952 = vpop.f32.mrb[0].mxu0
  %v1953 = vadd.f32 %v1900, %v1952
  %1954 = vmatprep.mubr.bf16.mxu0 %v432
  %1955 = vmatmul.mubr.bf16.gmra.mrb[0].mxu0 %v431
  %v1956 = vpop.f32.mrb[0].mxu0
  %v1957 = vadd.f32 %v1904, %v1956
  %v1958 = vpop.f32.mrb[0].mxu0
  %v1959 = vadd.f32 %v1906, %v1958
  %v1960 = vpop.f32.mrb[0].mxu0
  %v1961 = vadd.f32 %v1908, %v1960
  %v1962 = vpop.f32.mrb[0].mxu0
  %v1963 = vadd.f32 %v1910, %v1962
  %1964 = vdwg.mxu0
  %1965 = vmatprep.subr.bf16.mxu0 %v1370
  %1966 = vmatpush1.bf16.msra.mxu0 %v1369
  %1967 = vmatprep.subr.bf16.mxu0 %v1372
  %1968 = vmatpush1.bf16.msra.mxu0 %v1371
  %1969 = vmatprep.subr.bf16.mxu0 %v1374
  %1970 = vmatpush1.bf16.msra.mxu0 %v1373
  %1971 = vmatprep.subr.bf16.mxu0 %v1376
  %1972 = vmatpush1.bf16.msra.mxu0 %v1375
  %1973 = vmatprep.subr.bf16.mxu0 %v1378
  %1974 = vmatpush1.bf16.msra.mxu0 %v1377
  %1975 = vmatprep.subr.bf16.mxu0 %v1380
  %1976 = vmatpush1.bf16.msra.mxu0 %v1379
  %1977 = vmatprep.subr.bf16.mxu0 %v1382
  %1978 = vmatpush1.bf16.msra.mxu0 %v1381
  %1979 = vmatprep.subr.bf16.mxu0 %v1384
  %1980 = vmatpush1.bf16.msra.mxu0 %v1383
  %1981 = vmatprep.subr.bf16.mxu0 %v1386
  %1982 = vmatpush1.bf16.msra.mxu0 %v1385
  %1983 = vmatprep.subr.bf16.mxu0 %v1388
  %1984 = vmatpush1.bf16.msra.mxu0 %v1387
  %1985 = vmatprep.subr.bf16.mxu0 %v1390
  %1986 = vmatpush1.bf16.msra.mxu0 %v1389
  %1987 = vmatprep.subr.bf16.mxu0 %v1392
  %1988 = vmatpush1.bf16.msra.mxu0 %v1391
  %1989 = vmatprep.subr.bf16.mxu0 %v1394
  %1990 = vmatpush1.bf16.msra.mxu0 %v1393
  %1991 = vmatprep.subr.bf16.mxu0 %v1396
  %1992 = vmatpush1.bf16.msra.mxu0 %v1395
  %1993 = vmatprep.subr.bf16.mxu0 %v1398
  %1994 = vmatpush1.bf16.msra.mxu0 %v1397
  %1995 = vmatprep.subr.bf16.mxu0 %v1400
  %1996 = vmatpush1.bf16.msra.mxu0 %v1399
  %1997 = vmatprep.mubr.bf16.mxu0 %v418
  %1998 = vmatmul.mubr.bf16.gmra.mrb[0].mxu0 %v417
  %v1999 = vpop.f32.mrb[0].mxu0
  %v2000 = vadd.f32 %v1947, %v1999
  %v2001 = vpop.f32.mrb[0].mxu0
  %v2002 = vadd.f32 %v1949, %v2001
  %v2003 = vpop.f32.mrb[0].mxu0
  %v2004 = vadd.f32 %v1951, %v2003
  %v2005 = vpop.f32.mrb[0].mxu0
  %v2006 = vadd.f32 %v1953, %v2005
  %2007 = vmatprep.mubr.bf16.mxu0 %v434
  %2008 = vmatmul.mubr.bf16.gmra.mrb[0].mxu0 %v433
  %v2009 = vpop.f32.mrb[0].mxu0
  %v2010 = vadd.f32 %v1957, %v2009
  %v2011 = vpop.f32.mrb[0].mxu0
  %v2012 = vadd.f32 %v1959, %v2011
  %v2013 = vpop.f32.mrb[0].mxu0
  %v2014 = vadd.f32 %v1961, %v2013
  %v2015 = vpop.f32.mrb[0].mxu0
  %v2016 = vadd.f32 %v1963, %v2015
  %2017 = vdwg.mxu0
  %2018 = vmatprep.subr.bf16.mxu0 %v1402
  %2019 = vmatpush1.bf16.msra.mxu0 %v1401
  %2020 = vmatprep.subr.bf16.mxu0 %v1404
  %2021 = vmatpush1.bf16.msra.mxu0 %v1403
  %2022 = vmatprep.subr.bf16.mxu0 %v1406
  %2023 = vmatpush1.bf16.msra.mxu0 %v1405
  %2024 = vmatprep.subr.bf16.mxu0 %v1408
  %2025 = vmatpush1.bf16.msra.mxu0 %v1407
  %2026 = vmatprep.subr.bf16.mxu0 %v1410
  %2027 = vmatpush1.bf16.msra.mxu0 %v1409
  %2028 = vmatprep.subr.bf16.mxu0 %v1412
  %2029 = vmatpush1.bf16.msra.mxu0 %v1411
  %2030 = vmatprep.subr.bf16.mxu0 %v1414
  %2031 = vmatpush1.bf16.msra.mxu0 %v1413
  %2032 = vmatprep.subr.bf16.mxu0 %v1416
  %2033 = vmatpush1.bf16.msra.mxu0 %v1415
  %2034 = vmatprep.subr.bf16.mxu0 %v1418
  %2035 = vmatpush1.bf16.msra.mxu0 %v1417
  %2036 = vmatprep.subr.bf16.mxu0 %v1420
  %2037 = vmatpush1.bf16.msra.mxu0 %v1419
  %2038 = vmatprep.subr.bf16.mxu0 %v1422
  %2039 = vmatpush1.bf16.msra.mxu0 %v1421
  %2040 = vmatprep.subr.bf16.mxu0 %v1424
  %2041 = vmatpush1.bf16.msra.mxu0 %v1423
  %2042 = vmatprep.subr.bf16.mxu0 %v1426
  %2043 = vmatpush1.bf16.msra.mxu0 %v1425
  %2044 = vmatprep.subr.bf16.mxu0 %v1428
  %2045 = vmatpush1.bf16.msra.mxu0 %v1427
  %2046 = vmatprep.subr.bf16.mxu0 %v1430
  %2047 = vmatpush1.bf16.msra.mxu0 %v1429
  %2048 = vmatprep.subr.bf16.mxu0 %v1432
  %2049 = vmatpush1.bf16.msra.mxu0 %v1431
  %2050 = vmatprep.mubr.bf16.mxu0 %v420
  %2051 = vmatmul.mubr.bf16.gmra.mrb[0].mxu0 %v419
  %v2052 = vpop.f32.mrb[0].mxu0
  %v2053 = vadd.f32 %v2000, %v2052
  %v2054 = vpop.f32.mrb[0].mxu0
  %v2055 = vadd.f32 %v2002, %v2054
  %v2056 = vpop.f32.mrb[0].mxu0
  %v2057 = vadd.f32 %v2004, %v2056
  %v2058 = vpop.f32.mrb[0].mxu0
  %v2059 = vadd.f32 %v2006, %v2058
  %2060 = vmatprep.mubr.bf16.mxu0 %v436
  %2061 = vmatmul.mubr.bf16.gmra.mrb[0].mxu0 %v435
  %v2062 = vpop.f32.mrb[0].mxu0
  %v2063 = vadd.f32 %v2010, %v2062
  %v2064 = vpop.f32.mrb[0].mxu0
  %v2065 = vadd.f32 %v2012, %v2064
  %v2066 = vpop.f32.mrb[0].mxu0
  %v2067 = vadd.f32 %v2014, %v2066
  %v2068 = vpop.f32.mrb[0].mxu0
  %v2069 = vadd.f32 %v2016, %v2068
  %2070 = vdwg.mxu0
  %2071 = vmatprep.subr.bf16.mxu0 %v1434
  %2072 = vmatpush1.bf16.msra.mxu0 %v1433
  %2073 = vmatprep.subr.bf16.mxu0 %v1436
  %2074 = vmatpush1.bf16.msra.mxu0 %v1435
  %2075 = vmatprep.subr.bf16.mxu0 %v1438
  %2076 = vmatpush1.bf16.msra.mxu0 %v1437
  %2077 = vmatprep.subr.bf16.mxu0 %v1440
  %2078 = vmatpush1.bf16.msra.mxu0 %v1439
  %2079 = vmatprep.subr.bf16.mxu0 %v1442
  %2080 = vmatpush1.bf16.msra.mxu0 %v1441
  %2081 = vmatprep.subr.bf16.mxu0 %v1444
  %2082 = vmatpush1.bf16.msra.mxu0 %v1443
  %2083 = vmatprep.subr.bf16.mxu0 %v1446
  %2084 = vmatpush1.bf16.msra.mxu0 %v1445
  %2085 = vmatprep.subr.bf16.mxu0 %v1448
  %2086 = vmatpush1.bf16.msra.mxu0 %v1447
  %2087 = vmatprep.subr.bf16.mxu0 %v1450
  %2088 = vmatpush1.bf16.msra.mxu0 %v1449
  %2089 = vmatprep.subr.bf16.mxu0 %v1452
  %2090 = vmatpush1.bf16.msra.mxu0 %v1451
  %2091 = vmatprep.subr.bf16.mxu0 %v1454
  %2092 = vmatpush1.bf16.msra.mxu0 %v1453
  %2093 = vmatprep.subr.bf16.mxu0 %v1456
  %2094 = vmatpush1.bf16.msra.mxu0 %v1455
  %2095 = vmatprep.subr.bf16.mxu0 %v1458
  %2096 = vmatpush1.bf16.msra.mxu0 %v1457
  %2097 = vmatprep.subr.bf16.mxu0 %v1460
  %2098 = vmatpush1.bf16.msra.mxu0 %v1459
  %2099 = vmatprep.subr.bf16.mxu0 %v1462
  %2100 = vmatpush1.bf16.msra.mxu0 %v1461
  %2101 = vmatprep.subr.bf16.mxu0 %v1464
  %2102 = vmatpush1.bf16.msra.mxu0 %v1463
  %2103 = vmatprep.mubr.bf16.mxu0 %v422
  %2104 = vmatmul.mubr.bf16.gmra.mrb[0].mxu0 %v421
  %v2105 = vpop.f32.mrb[0].mxu0
  %v2106 = vadd.f32 %v2053, %v2105
  %v2107 = vpop.f32.mrb[0].mxu0
  %v2108 = vadd.f32 %v2055, %v2107
  %v2109 = vpop.f32.mrb[0].mxu0
  %v2110 = vadd.f32 %v2057, %v2109
  %v2111 = vpop.f32.mrb[0].mxu0
  %v2112 = vadd.f32 %v2059, %v2111
  %2113 = vmatprep.mubr.bf16.mxu0 %v438
  %2114 = vmatmul.mubr.bf16.gmra.mrb[0].mxu0 %v437
  %v2115 = vpop.f32.mrb[0].mxu0
  %v2116 = vadd.f32 %v2063, %v2115
  %v2117 = vpop.f32.mrb[0].mxu0
  %v2118 = vadd.f32 %v2065, %v2117
  %v2119 = vpop.f32.mrb[0].mxu0
  %v2120 = vadd.f32 %v2067, %v2119
  %v2121 = vpop.f32.mrb[0].mxu0
  %v2122 = vadd.f32 %v2069, %v2121
  %2123 = vdwg.mxu0
  %2124 = vmatprep.subr.bf16.mxu0 %v1466
  %2125 = vmatpush1.bf16.msra.mxu0 %v1465
  %2126 = vmatprep.subr.bf16.mxu0 %v1468
  %2127 = vmatpush1.bf16.msra.mxu0 %v1467
  %2128 = vmatprep.subr.bf16.mxu0 %v1470
  %2129 = vmatpush1.bf16.msra.mxu0 %v1469
  %2130 = vmatprep.subr.bf16.mxu0 %v1472
  %2131 = vmatpush1.bf16.msra.mxu0 %v1471
  %2132 = vmatprep.subr.bf16.mxu0 %v1474
  %2133 = vmatpush1.bf16.msra.mxu0 %v1473
  %2134 = vmatprep.subr.bf16.mxu0 %v1476
  %2135 = vmatpush1.bf16.msra.mxu0 %v1475
  %2136 = vmatprep.subr.bf16.mxu0 %v1478
  %2137 = vmatpush1.bf16.msra.mxu0 %v1477
  %2138 = vmatprep.subr.bf16.mxu0 %v1480
  %2139 = vmatpush1.bf16.msra.mxu0 %v1479
  %2140 = vmatprep.subr.bf16.mxu0 %v1482
  %2141 = vmatpush1.bf16.msra.mxu0 %v1481
  %2142 = vmatprep.subr.bf16.mxu0 %v1484
  %2143 = vmatpush1.bf16.msra.mxu0 %v1483
  %2144 = vmatprep.subr.bf16.mxu0 %v1486
  %2145 = vmatpush1.bf16.msra.mxu0 %v1485
  %2146 = vmatprep.subr.bf16.mxu0 %v1488
  %2147 = vmatpush1.bf16.msra.mxu0 %v1487
  %2148 = vmatprep.subr.bf16.mxu0 %v1490
  %2149 = vmatpush1.bf16.msra.mxu0 %v1489
  %2150 = vmatprep.subr.bf16.mxu0 %v1492
  %2151 = vmatpush1.bf16.msra.mxu0 %v1491
  %2152 = vmatprep.subr.bf16.mxu0 %v1494
  %2153 = vmatpush1.bf16.msra.mxu0 %v1493
  %2154 = vmatprep.subr.bf16.mxu0 %v1496
  %2155 = vmatpush1.bf16.msra.mxu0 %v1495
  %2156 = vmatprep.mubr.bf16.mxu0 %v424
  %2157 = vmatmul.mubr.bf16.gmra.mrb[0].mxu0 %v423
  %v2158 = vpop.f32.mrb[0].mxu0
  %v2159 = vadd.f32 %v2106, %v2158
  %v2160 = vpop.f32.mrb[0].mxu0
  %v2161 = vadd.f32 %v2108, %v2160
  %v2162 = vpop.f32.mrb[0].mxu0
  %v2163 = vadd.f32 %v2110, %v2162
  %v2164 = vpop.f32.mrb[0].mxu0
  %v2165 = vadd.f32 %v2112, %v2164
  %2166 = vmatprep.mubr.bf16.mxu0 %v440
  %2167 = vmatmul.mubr.bf16.gmra.mrb[0].mxu0 %v439
  %v2168 = vpop.f32.mrb[0].mxu0
  %v2169 = vadd.f32 %v2116, %v2168
  %v2170 = vpop.f32.mrb[0].mxu0
  %v2171 = vadd.f32 %v2118, %v2170
  %v2172 = vpop.f32.mrb[0].mxu0
  %v2173 = vadd.f32 %v2120, %v2172
  %v2174 = vpop.f32.mrb[0].mxu0
  %v2175 = vadd.f32 %v2122, %v2174
  %2176 = vdwg.mxu0
  %s2177 = smul.u32 0, 32
  %s2178 = sshra.s32 %s2177, 3
  %s2179 = sand.u32 %s2177, 7
  %s2180 = smul.u32 %s2178, 2
  %s2181 = smul.addr %s2180, 8
  %s2182 = scalar_lea.vmem [#allocation2], %s2181
  %2183 = vst [vmem:[%s2182] sm:$0xff] %v2159
  %2184 = vst [vmem:[%s2182 + $0x8] sm:$0xff] %v2161
  %2185 = vst [vmem:[%s2182 + $0x10] sm:$0xff] %v2163
  %2186 = vst [vmem:[%s2182 + $0x18] sm:$0xff] %v2165
  %2187 = vst [vmem:[%s2182 + $0x20] sm:$0xff] %v2169
  %2188 = vst [vmem:[%s2182 + $0x28] sm:$0xff] %v2171
  %2189 = vst [vmem:[%s2182 + $0x30] sm:$0xff] %v2173
  %2190 = vst [vmem:[%s2182 + $0x38] sm:$0xff] %v2175
  %p2191 = scmp.eq.s32.totalorder 0, 0
  // Predicated region
  $region26: #{discriminator_sn_forward.5} parent=0 // pred_check
    %p2192 = pneg %p2191
  $region27: #{discriminator_sn_forward.5} parent=0 // pred_check_branch
    %2194 = sbr.rel (%p2192) target = $region29
  $region28: #{discriminator_sn_forward.5} parent=0 // pred_region
    %v2195 = vlaneseq
    %vm2196 = vcmp.ge.s32.totalorder %v2195, 0
    %vm2197 = vcmp.lt.s32.totalorder %v2195, 256
    %vm2198 = vmand %vm2196, %vm2197
    %2199 = vst.msk [vmem:[#allocation3] sm:$0x3] %vm2198, 0.0
    %2200 = vst.msk [vmem:[#allocation4] sm:$0x3] %vm2198, 0.0
  $region29: #{discriminator_sn_forward.5} parent=0 // pred_fallthru
    _
  %v2201 = vld [vmem:[#allocation3] sm:$0x3]
  %v2202 = vadd.f32 %v2159, %v2163
  %v2203 = vadd.f32 %v2202, %v2169
  %v2204 = vadd.f32 %v2203, %v2173
  %v2205 = vrot.slane %v2204, 4
  %v2206 = vadd.f32 %v2204, %v2205
  %v2207 = vrot.slane %v2206, 2
  %v2208 = vadd.f32 %v2206, %v2207
  %v2209 = vrot.slane %v2208, 1
  %v2210 = vadd.f32 %v2208, %v2209
  %v2211 = vadd.f32 %v2161, %v2165
  %v2212 = vadd.f32 %v2211, %v2171
  %v2213 = vadd.f32 %v2212, %v2175
  %v2214 = vrot.slane %v2213, 4
  %v2215 = vadd.f32 %v2213, %v2214
  %v2216 = vrot.slane %v2215, 2
  %v2217 = vadd.f32 %v2215, %v2216
  %v2218 = vrot.slane %v2217, 1
  %v2219 = vadd.f32 %v2217, %v2218
  %v2222 = vcombine.low %v2210, %v2219
  %v2224 = vunpack.c.l.s4 1966171168
  %v2225 = vunpack.c.0.s8 %v2224
  %v2226 = vlaneseq
  %v2227 = vshrl.u32 %v2226, 7
  %v2228 = vsub.s32 %v2225, %v2227
  %v2229 = vrot.slane %v2222, %v2228
  %v2231 = vunpack.c.l.s4 1966171168
  %v2232 = vunpack.c.0.s8 %v2231
  %v2233 = vlaneseq
  %v2234 = vshrl.u32 %v2233, 7
  %v2235 = vsub.s32 %v2232, %v2234
  %v2236 = vrot.slane %v2229, %v2235
  %v2238 = vadd.f32 %v2201, %v2236
  %v2239 = vlaneseq
  %vm2240 = vcmp.ge.s32.totalorder %v2239, 0
  %vm2241 = vcmp.lt.s32.totalorder %v2239, 256
  %vm2242 = vmand %vm2240, %vm2241
  %2243 = vst.msk [vmem:[#allocation3] sm:$0x3] %vm2242, %v2238
  %v2244 = vld [vmem:[#allocation4] sm:$0x3]
  %v2245 = vmul.f32 %v2159, %v2159
  %v2246 = vmul.f32 %v2161, %v2161
  %v2247 = vmul.f32 %v2163, %v2163
  %v2248 = vmul.f32 %v2165, %v2165
  %v2249 = vmul.f32 %v2169, %v2169
  %v2250 = vmul.f32 %v2171, %v2171
  %v2251 = vmul.f32 %v2173, %v2173
  %v2252 = vmul.f32 %v2175, %v2175
  %v2253 = vadd.f32 %v2245, %v2247
  %v2254 = vadd.f32 %v2253, %v2249
  %v2255 = vadd.f32 %v2254, %v2251
  %v2256 = vrot.slane %v2255, 4
  %v2257 = vadd.f32 %v2255, %v2256
  %v2258 = vrot.slane %v2257, 2
  %v2259 = vadd.f32 %v2257, %v2258
  %v2260 = vrot.slane %v2259, 1
  %v2261 = vadd.f32 %v2259, %v2260
  %v2262 = vadd.f32 %v2246, %v2248
  %v2263 = vadd.f32 %v2262, %v2250
  %v2264 = vadd.f32 %v2263, %v2252
  %v2265 = vrot.slane %v2264, 4
  %v2266 = vadd.f32 %v2264, %v2265
  %v2267 = vrot.slane %v2266, 2
  %v2268 = vadd.f32 %v2266, %v2267
  %v2269 = vrot.slane %v2268, 1
  %v2270 = vadd.f32 %v2268, %v2269
  %v2273 = vcombine.low %v2261, %v2270
  %v2275 = vunpack.c.l.s4 1966171168
  %v2276 = vunpack.c.0.s8 %v2275
  %v2277 = vlaneseq
  %v2278 = vshrl.u32 %v2277, 7
  %v2279 = vsub.s32 %v2276, %v2278
  %v2280 = vrot.slane %v2273, %v2279
  %v2282 = vunpack.c.l.s4 1966171168
  %v2283 = vunpack.c.0.s8 %v2282
  %v2284 = vlaneseq
  %v2285 = vshrl.u32 %v2284, 7
  %v2286 = vsub.s32 %v2283, %v2285
  %v2287 = vrot.slane %v2280, %v2286
  %v2289 = vadd.f32 %v2244, %v2287
  %2290 = vst.msk [vmem:[#allocation4] sm:$0x3] %vm2242, %v2289
  // Predicated region
  $region30: #{discriminator_sn_forward.5} parent=0 // pred_check
    %p2291 = pneg %p2191
  $region31: #{discriminator_sn_forward.5} parent=0 // pred_check_branch
    %2293 = sbr.rel (%p2291) target = $region33
  $region32: #{discriminator_sn_forward.5} parent=0 // pred_region
    %v2294 = vld [vmem:[#allocation3] sm:$0x3]
    %v2295 = vmul.f32 %v2294, 0.03125
    %v2296 = vld [vmem:[#allocation4] sm:$0x3]
    %v2297 = vmul.f32 %v2296, 0.03125
    %v2298 = vmul.f32 %v2295, %v2295
    %v2299 = vsub.f32 %v2297, %v2298
    %v2300 = vmax.f32 %v2299, 0.0
    %v2301 = vadd.f32 %v2300, 1e-05
    %v2302 = vrsqrt.pop %v2301
    %v2303 = vld [vmem:[%s2] sm:$0x3]
    %v2304 = vmul.f32 %v2302, %v2303
    %v2305 = vld [vmem:[%s3] sm:$0x3]
    %v2306 = vmul.f32 %v2295, %v2304
    %v2307 = vsub.f32 %v2305, %v2306
    %v2308 = vld [vmem:[#allocation2] sm:$0x3]
    %v2309 = vld [vmem:[#allocation2 + $0x8] sm:$0x3]
    %v2311 = vlaneseq
    %v2312 = vshrl.u32 %v2311, 7
    %v2313 = vsub.s32 0, %v2312
    %v2314 = vrot.slane %v2304, %v2313
    %v2315 = vlaneseq
    %v2316 = vshrl.u32 %v2315, 7
    %v2317 = vsub.s32 1, %v2316
    %v2318 = vrot.slane %v2304, %v2317
    %v2321 = vmul.f32 %v2308, %v2314
    %v2322 = vmul.f32 %v2309, %v2318
    %v2324 = vlaneseq
    %v2325 = vshrl.u32 %v2324, 7
    %v2326 = vsub.s32 0, %v2325
    %v2327 = vrot.slane %v2307, %v2326
    %v2328 = vlaneseq
    %v2329 = vshrl.u32 %v2328, 7
    %v2330 = vsub.s32 1, %v2329
    %v2331 = vrot.slane %v2307, %v2330
    %v2334 = vadd.f32 %v2321, %v2327
    %v2335 = vadd.f32 %v2322, %v2331
    %vm2336 = vcmp.gt.f32.partialorder %v2334, 0.0
    %vm2337 = vcmp.gt.f32.partialorder %v2335, 0.0
    %v2338 = vmul.f32 %v2334, 0.2
    %v2339 = vmul.f32 %v2335, 0.2
    %v2340 = vsel %vm2336, %v2334, %v2338
    %v2341 = vsel %vm2337, %v2335, %v2339
    %v2342 = vld [vmem:[%s4] ss:$8 sm:$0x3]
    %v2344 = vlaneseq
    %v2345 = vshrl.u32 %v2344, 7
    %v2346 = vsub.s32 0, %v2345
    %v2347 = vrot.slane %v2342, %v2346
    %v2348 = vlaneseq
    %v2349 = vshrl.u32 %v2348, 7
    %v2350 = vsub.s32 1, %v2349
    %v2351 = vrot.slane %v2342, %v2350
    %v2354 = vmul.f32 %v2340, %v2347
    %v2355 = vmul.f32 %v2341, %v2351
    %v2356 = vadd.f32 %v2354, 0.0
    %v2357 = vadd.f32 %v2355, 0.0
    %v2358 = vld [vmem:[#allocation2] sm:$0xc]
    %v2359 = vld [vmem:[#allocation2 + $0x8] sm:$0xc]
    %v2360 = vmul.f32 %v2358, %v2314
    %v2361 = vmul.f32 %v2359, %v2318
    %v2362 = vadd.f32 %v2360, %v2327
    %v2363 = vadd.f32 %v2361, %v2331
    %vm2364 = vcmp.gt.f32.partialorder %v2362, 0.0
    %vm2365 = vcmp.gt.f32.partialorder %v2363, 0.0
    %v2366 = vmul.f32 %v2362, 0.2
    %v2367 = vmul.f32 %v2363, 0.2
    %v2368 = vsel %vm2364, %v2362, %v2366
    %v2369 = vsel %vm2365, %v2363, %v2367
    %s2370 = scalar_lea.vmem %s4, 1
    %v2371 = vld [vmem:[%s2370] ss:$8 sm:$0x3]
    %v2373 = vlaneseq
    %v2374 = vshrl.u32 %v2373, 7
    %v2375 = vsub.s32 0, %v2374
    %v2376 = vrot.slane %v2371, %v2375
    %v2377 = vlaneseq
    %v2378 = vshrl.u32 %v2377, 7
    %v2379 = vsub.s32 1, %v2378
    %v2380 = vrot.slane %v2371, %v2379
    %v2383 = vmul.f32 %v2368, %v2376
    %v2384 = vmul.f32 %v2369, %v2380
    %v2387 = vrot.slane %v2383, 2
    %v2388 = vrot.slane %v2384, 2
    %v2391 = vadd.f32 %v2356, %v2387
    %v2392 = vadd.f32 %v2357, %v2388
    %v2393 = vld [vmem:[#allocation2] sm:$0x30]
    %v2394 = vld [vmem:[#allocation2 + $0x8] sm:$0x30]
    %v2395 = vmul.f32 %v2393, %v2314
    %v2396 = vmul.f32 %v2394, %v2318
    %v2397 = vadd.f32 %v2395, %v2327
    %v2398 = vadd.f32 %v2396, %v2331
    %vm2399 = vcmp.gt.f32.partialorder %v2397, 0.0
    %vm2400 = vcmp.gt.f32.partialorder %v2398, 0.0
    %v2401 = vmul.f32 %v2397, 0.2
    %v2402 = vmul.f32 %v2398, 0.2
    %v2403 = vsel %vm2399, %v2397, %v2401
    %v2404 = vsel %vm2400, %v2398, %v2402
    %s2405 = scalar_lea.vmem %s4, 2
    %v2406 = vld [vmem:[%s2405] ss:$8 sm:$0x3]
    %v2408 = vlaneseq
    %v2409 = vshrl.u32 %v2408, 7
    %v2410 = vsub.s32 0, %v2409
    %v2411 = vrot.slane %v2406, %v2410
    %v2412 = vlaneseq
    %v2413 = vshrl.u32 %v2412, 7
    %v2414 = vsub.s32 1, %v2413
    %v2415 = vrot.slane %v2406, %v2414
    %v2418 = vmul.f32 %v2403, %v2411
    %v2419 = vmul.f32 %v2404, %v2415
    %v2422 = vrot.slane %v2418, 4
    %v2423 = vrot.slane %v2419, 4
    %v2426 = vadd.f32 %v2391, %v2422
    %v2427 = vadd.f32 %v2392, %v2423
    %v2428 = vld [vmem:[#allocation2] sm:$0xc0]
    %v2429 = vld [vmem:[#allocation2 + $0x8] sm:$0xc0]
    %v2430 = vmul.f32 %v2428, %v2314
    %v2431 = vmul.f32 %v2429, %v2318
    %v2432 = vadd.f32 %v2430, %v2327
    %v2433 = vadd.f32 %v2431, %v2331
    %vm2434 = vcmp.gt.f32.partialorder %v2432, 0.0
    %vm2435 = vcmp.gt.f32.partialorder %v2433, 0.0
    %v2436 = vmul.f32 %v2432, 0.2
    %v2437 = vmul.f32 %v2433, 0.2
    %v2438 = vsel %vm2434, %v2432, %v2436
    %v2439 = vsel %vm2435, %v2433, %v2437
    %s2440 = scalar_lea.vmem %s4, 3
    %v2441 = vld [vmem:[%s2440] ss:$8 sm:$0x3]
    %v2443 = vlaneseq
    %v2444 = vshrl.u32 %v2443, 7
    %v2445 = vsub.s32 0, %v2444
    %v2446 = vrot.slane %v2441, %v2445
    %v2447 = vlaneseq
    %v2448 = vshrl.u32 %v2447, 7
    %v2449 = vsub.s32 1, %v2448
    %v2450 = vrot.slane %v2441, %v2449
    %v2453 = vmul.f32 %v2438, %v2446
    %v2454 = vmul.f32 %v2439, %v2450
    %v2457 = vrot.slane %v2453, 6
    %v2458 = vrot.slane %v2454, 6
    %v2461 = vadd.f32 %v2426, %v2457
    %v2462 = vadd.f32 %v2427, %v2458
    %v2463 = vld [vmem:[#allocation2 + $0x10] sm:$0x3]
    %v2464 = vld [vmem:[#allocation2 + $0x18] sm:$0x3]
    %v2465 = vmul.f32 %v2463, %v2314
    %v2466 = vmul.f32 %v2464, %v2318
    %v2467 = vadd.f32 %v2465, %v2327
    %v2468 = vadd.f32 %v2466, %v2331
    %vm2469 = vcmp.gt.f32.partialorder %v2467, 0.0
    %vm2470 = vcmp.gt.f32.partialorder %v2468, 0.0
    %v2471 = vmul.f32 %v2467, 0.2
    %v2472 = vmul.f32 %v2468, 0.2
    %v2473 = vsel %vm2469, %v2467, %v2471
    %v2474 = vsel %vm2470, %v2468, %v2472
    %s2475 = scalar_lea.vmem %s4, 4
    %v2476 = vld [vmem:[%s2475] ss:$8 sm:$0x3]
    %v2478 = vlaneseq
    %v2479 = vshrl.u32 %v2478, 7
    %v2480 = vsub.s32 0, %v2479
    %v2481 = vrot.slane %v2476, %v2480
    %v2482 = vlaneseq
    %v2483 = vshrl.u32 %v2482, 7
    %v2484 = vsub.s32 1, %v2483
    %v2485 = vrot.slane %v2476, %v2484
    %v2488 = vmul.f32 %v2473, %v2481
    %v2489 = vmul.f32 %v2474, %v2485
    %v2490 = vadd.f32 %v2461, %v2488
    %v2491 = vadd.f32 %v2462, %v2489
    %v2492 = vld [vmem:[#allocation2 + $0x10] sm:$0xc]
    %v2493 = vld [vmem:[#allocation2 + $0x18] sm:$0xc]
    %v2494 = vmul.f32 %v2492, %v2314
    %v2495 = vmul.f32 %v2493, %v2318
    %v2496 = vadd.f32 %v2494, %v2327
    %v2497 = vadd.f32 %v2495, %v2331
    %vm2498 = vcmp.gt.f32.partialorder %v2496, 0.0
    %vm2499 = vcmp.gt.f32.partialorder %v2497, 0.0
    %v2500 = vmul.f32 %v2496, 0.2
    %v2501 = vmul.f32 %v2497, 0.2
    %v2502 = vsel %vm2498, %v2496, %v2500
    %v2503 = vsel %vm2499, %v2497, %v2501
    %s2504 = scalar_lea.vmem %s4, 5
    %v2505 = vld [vmem:[%s2504] ss:$8 sm:$0x3]
    %v2507 = vlaneseq
    %v2508 = vshrl.u32 %v2507, 7
    %v2509 = vsub.s32 0, %v2508
    %v2510 = vrot.slane %v2505, %v2509
    %v2511 = vlaneseq
    %v2512 = vshrl.u32 %v2511, 7
    %v2513 = vsub.s32 1, %v2512
    %v2514 = vrot.slane %v2505, %v2513
    %v2517 = vmul.f32 %v2502, %v2510
    %v2518 = vmul.f32 %v2503, %v2514
    %v2521 = vrot.slane %v2517, 2
    %v2522 = vrot.slane %v2518, 2
    %v2525 = vadd.f32 %v2490, %v2521
    %v2526 = vadd.f32 %v2491, %v2522
    %v2527 = vld [vmem:[#allocation2 + $0x10] sm:$0x30]
    %v2528 = vld [vmem:[#allocation2 + $0x18] sm:$0x30]
    %v2529 = vmul.f32 %v2527, %v2314
    %v2530 = vmul.f32 %v2528, %v2318
    %v2531 = vadd.f32 %v2529, %v2327
    %v2532 = vadd.f32 %v2530, %v2331
    %vm2533 = vcmp.gt.f32.partialorder %v2531, 0.0
    %vm2534 = vcmp.gt.f32.partialorder %v2532, 0.0
    %v2535 = vmul.f32 %v2531, 0.2
    %v2536 = vmul.f32 %v2532, 0.2
    %v2537 = vsel %vm2533, %v2531, %v2535
    %v2538 = vsel %vm2534, %v2532, %v2536
    %s2539 = scalar_lea.vmem %s4, 6
    %v2540 = vld [vmem:[%s2539] ss:$8 sm:$0x3]
    %v2542 = vlaneseq
    %v2543 = vshrl.u32 %v2542, 7
    %v2544 = vsub.s32 0, %v2543
    %v2545 = vrot.slane %v2540, %v2544
    %v2546 = vlaneseq
    %v2547 = vshrl.u32 %v2546, 7
    %v2548 = vsub.s32 1, %v2547
    %v2549 = vrot.slane %v2540, %v2548
    %v2552 = vmul.f32 %v2537, %v2545
    %v2553 = vmul.f32 %v2538, %v2549
    %v2556 = vrot.slane %v2552, 4
    %v2557 = vrot.slane %v2553, 4
    %v2560 = vadd.f32 %v2525, %v2556
    %v2561 = vadd.f32 %v2526, %v2557
    %v2562 = vld [vmem:[#allocation2 + $0x10] sm:$0xc0]
    %v2563 = vld [vmem:[#allocation2 + $0x18] sm:$0xc0]
    %v2564 = vmul.f32 %v2562, %v2314
    %v2565 = vmul.f32 %v2563, %v2318
    %v2566 = vadd.f32 %v2564, %v2327
    %v2567 = vadd.f32 %v2565, %v2331
    %vm2568 = vcmp.gt.f32.partialorder %v2566, 0.0
    %vm2569 = vcmp.gt.f32.partialorder %v2567, 0.0
    %v2570 = vmul.f32 %v2566, 0.2
    %v2571 = vmul.f32 %v2567, 0.2
    %v2572 = vsel %vm2568, %v2566, %v2570
    %v2573 = vsel %vm2569, %v2567, %v2571
    %s2574 = scalar_lea.vmem %s4, 7
    %v2575 = vld [vmem:[%s2574] ss:$8 sm:$0x3]
    %v2577 = vlaneseq
    %v2578 = vshrl.u32 %v2577, 7
    %v2579 = vsub.s32 0, %v2578
    %v2580 = vrot.slane %v2575, %v2579
    %v2581 = vlaneseq
    %v2582 = vshrl.u32 %v2581, 7
    %v2583 = vsub.s32 1, %v2582
    %v2584 = vrot.slane %v2575, %v2583
    %v2587 = vmul.f32 %v2572, %v2580
    %v2588 = vmul.f32 %v2573, %v2584
    %v2591 = vrot.slane %v2587, 6
    %v2592 = vrot.slane %v2588, 6
    %v2595 = vadd.f32 %v2560, %v2591
    %v2596 = vadd.f32 %v2561, %v2592
    %v2597 = vld [vmem:[#allocation2 + $0x20] sm:$0x3]
    %v2598 = vld [vmem:[#allocation2 + $0x28] sm:$0x3]
    %v2599 = vmul.f32 %v2597, %v2314
    %v2600 = vmul.f32 %v2598, %v2318
    %v2601 = vadd.f32 %v2599, %v2327
    %v2602 = vadd.f32 %v2600, %v2331
    %vm2603 = vcmp.gt.f32.partialorder %v2601, 0.0
    %vm2604 = vcmp.gt.f32.partialorder %v2602, 0.0
    %v2605 = vmul.f32 %v2601, 0.2
    %v2606 = vmul.f32 %v2602, 0.2
    %v2607 = vsel %vm2603, %v2601, %v2605
    %v2608 = vsel %vm2604, %v2602, %v2606
    %s2609 = scalar_lea.vmem %s4, 16
    %v2610 = vld [vmem:[%s2609] ss:$8 sm:$0x3]
    %v2612 = vlaneseq
    %v2613 = vshrl.u32 %v2612, 7
    %v2614 = vsub.s32 0, %v2613
    %v2615 = vrot.slane %v2610, %v2614
    %v2616 = vlaneseq
    %v2617 = vshrl.u32 %v2616, 7
    %v2618 = vsub.s32 1, %v2617
    %v2619 = vrot.slane %v2610, %v2618
    %v2622 = vmul.f32 %v2607, %v2615
    %v2623 = vmul.f32 %v2608, %v2619
    %v2624 = vadd.f32 %v2595, %v2622
    %v2625 = vadd.f32 %v2596, %v2623
    %v2626 = vld [vmem:[#allocation2 + $0x20] sm:$0xc]
    %v2627 = vld [vmem:[#allocation2 + $0x28] sm:$0xc]
    %v2628 = vmul.f32 %v2626, %v2314
    %v2629 = vmul.f32 %v2627, %v2318
    %v2630 = vadd.f32 %v2628, %v2327
    %v2631 = vadd.f32 %v2629, %v2331
    %vm2632 = vcmp.gt.f32.partialorder %v2630, 0.0
    %vm2633 = vcmp.gt.f32.partialorder %v2631, 0.0
    %v2634 = vmul.f32 %v2630, 0.2
    %v2635 = vmul.f32 %v2631, 0.2
    %v2636 = vsel %vm2632, %v2630, %v2634
    %v2637 = vsel %vm2633, %v2631, %v2635
    %s2638 = scalar_lea.vmem %s4, 17
    %v2639 = vld [vmem:[%s2638] ss:$8 sm:$0x3]
    %v2641 = vlaneseq
    %v2642 = vshrl.u32 %v2641, 7
    %v2643 = vsub.s32 0, %v2642
    %v2644 = vrot.slane %v2639, %v2643
    %v2645 = vlaneseq
    %v2646 = vshrl.u32 %v2645, 7
    %v2647 = vsub.s32 1, %v2646
    %v2648 = vrot.slane %v2639, %v2647
    %v2651 = vmul.f32 %v2636, %v2644
    %v2652 = vmul.f32 %v2637, %v2648
    %v2655 = vrot.slane %v2651, 2
    %v2656 = vrot.slane %v2652, 2
    %v2659 = vadd.f32 %v2624, %v2655
    %v2660 = vadd.f32 %v2625, %v2656
    %v2661 = vld [vmem:[#allocation2 + $0x20] sm:$0x30]
    %v2662 = vld [vmem:[#allocation2 + $0x28] sm:$0x30]
    %v2663 = vmul.f32 %v2661, %v2314
    %v2664 = vmul.f32 %v2662, %v2318
    %v2665 = vadd.f32 %v2663, %v2327
    %v2666 = vadd.f32 %v2664, %v2331
    %vm2667 = vcmp.gt.f32.partialorder %v2665, 0.0
    %vm2668 = vcmp.gt.f32.partialorder %v2666, 0.0
    %v2669 = vmul.f32 %v2665, 0.2
    %v2670 = vmul.f32 %v2666, 0.2
    %v2671 = vsel %vm2667, %v2665, %v2669
    %v2672 = vsel %vm2668, %v2666, %v2670
    %s2673 = scalar_lea.vmem %s4, 18
    %v2674 = vld [vmem:[%s2673] ss:$8 sm:$0x3]
    %v2676 = vlaneseq
    %v2677 = vshrl.u32 %v2676, 7
    %v2678 = vsub.s32 0, %v2677
    %v2679 = vrot.slane %v2674, %v2678
    %v2680 = vlaneseq
    %v2681 = vshrl.u32 %v2680, 7
    %v2682 = vsub.s32 1, %v2681
    %v2683 = vrot.slane %v2674, %v2682
    %v2686 = vmul.f32 %v2671, %v2679
    %v2687 = vmul.f32 %v2672, %v2683
    %v2690 = vrot.slane %v2686, 4
    %v2691 = vrot.slane %v2687, 4
    %v2694 = vadd.f32 %v2659, %v2690
    %v2695 = vadd.f32 %v2660, %v2691
    %v2696 = vld [vmem:[#allocation2 + $0x20] sm:$0xc0]
    %v2697 = vld [vmem:[#allocation2 + $0x28] sm:$0xc0]
    %v2698 = vmul.f32 %v2696, %v2314
    %v2699 = vmul.f32 %v2697, %v2318
    %v2700 = vadd.f32 %v2698, %v2327
    %v2701 = vadd.f32 %v2699, %v2331
    %vm2702 = vcmp.gt.f32.partialorder %v2700, 0.0
    %vm2703 = vcmp.gt.f32.partialorder %v2701, 0.0
    %v2704 = vmul.f32 %v2700, 0.2
    %v2705 = vmul.f32 %v2701, 0.2
    %v2706 = vsel %vm2702, %v2700, %v2704
    %v2707 = vsel %vm2703, %v2701, %v2705
    %s2708 = scalar_lea.vmem %s4, 19
    %v2709 = vld [vmem:[%s2708] ss:$8 sm:$0x3]
    %v2711 = vlaneseq
    %v2712 = vshrl.u32 %v2711, 7
    %v2713 = vsub.s32 0, %v2712
    %v2714 = vrot.slane %v2709, %v2713
    %v2715 = vlaneseq
    %v2716 = vshrl.u32 %v2715, 7
    %v2717 = vsub.s32 1, %v2716
    %v2718 = vrot.slane %v2709, %v2717
    %v2721 = vmul.f32 %v2706, %v2714
    %v2722 = vmul.f32 %v2707, %v2718
    %v2725 = vrot.slane %v2721, 6
    %v2726 = vrot.slane %v2722, 6
    %v2729 = vadd.f32 %v2694, %v2725
    %v2730 = vadd.f32 %v2695, %v2726
    %v2731 = vld [vmem:[#allocation2 + $0x30] sm:$0x3]
    %v2732 = vld [vmem:[#allocation2 + $0x38] sm:$0x3]
    %v2733 = vmul.f32 %v2731, %v2314
    %v2734 = vmul.f32 %v2732, %v2318
    %v2735 = vadd.f32 %v2733, %v2327
    %v2736 = vadd.f32 %v2734, %v2331
    %vm2737 = vcmp.gt.f32.partialorder %v2735, 0.0
    %vm2738 = vcmp.gt.f32.partialorder %v2736, 0.0
    %v2739 = vmul.f32 %v2735, 0.2
    %v2740 = vmul.f32 %v2736, 0.2
    %v2741 = vsel %vm2737, %v2735, %v2739
    %v2742 = vsel %vm2738, %v2736, %v2740
    %s2743 = scalar_lea.vmem %s4, 20
    %v2744 = vld [vmem:[%s2743] ss:$8 sm:$0x3]
    %v2746 = vlaneseq
    %v2747 = vshrl.u32 %v2746, 7
    %v2748 = vsub.s32 0, %v2747
    %v2749 = vrot.slane %v2744, %v2748
    %v2750 = vlaneseq
    %v2751 = vshrl.u32 %v2750, 7
    %v2752 = vsub.s32 1, %v2751
    %v2753 = vrot.slane %v2744, %v2752
    %v2756 = vmul.f32 %v2741, %v2749
    %v2757 = vmul.f32 %v2742, %v2753
    %v2758 = vadd.f32 %v2729, %v2756
    %v2759 = vadd.f32 %v2730, %v2757
    %v2760 = vld [vmem:[#allocation2 + $0x30] sm:$0xc]
    %v2761 = vld [vmem:[#allocation2 + $0x38] sm:$0xc]
    %v2762 = vmul.f32 %v2760, %v2314
    %v2763 = vmul.f32 %v2761, %v2318
    %v2764 = vadd.f32 %v2762, %v2327
    %v2765 = vadd.f32 %v2763, %v2331
    %vm2766 = vcmp.gt.f32.partialorder %v2764, 0.0
    %vm2767 = vcmp.gt.f32.partialorder %v2765, 0.0
    %v2768 = vmul.f32 %v2764, 0.2
    %v2769 = vmul.f32 %v2765, 0.2
    %v2770 = vsel %vm2766, %v2764, %v2768
    %v2771 = vsel %vm2767, %v2765, %v2769
    %s2772 = scalar_lea.vmem %s4, 21
    %v2773 = vld [vmem:[%s2772] ss:$8 sm:$0x3]
    %v2775 = vlaneseq
    %v2776 = vshrl.u32 %v2775, 7
    %v2777 = vsub.s32 0, %v2776
    %v2778 = vrot.slane %v2773, %v2777
    %v2779 = vlaneseq
    %v2780 = vshrl.u32 %v2779, 7
    %v2781 = vsub.s32 1, %v2780
    %v2782 = vrot.slane %v2773, %v2781
    %v2785 = vmul.f32 %v2770, %v2778
    %v2786 = vmul.f32 %v2771, %v2782
    %v2789 = vrot.slane %v2785, 2
    %v2790 = vrot.slane %v2786, 2
    %v2793 = vadd.f32 %v2758, %v2789
    %v2794 = vadd.f32 %v2759, %v2790
    %v2795 = vld [vmem:[#allocation2 + $0x30] sm:$0x30]
    %v2796 = vld [vmem:[#allocation2 + $0x38] sm:$0x30]
    %v2797 = vmul.f32 %v2795, %v2314
    %v2798 = vmul.f32 %v2796, %v2318
    %v2799 = vadd.f32 %v2797, %v2327
    %v2800 = vadd.f32 %v2798, %v2331
    %vm2801 = vcmp.gt.f32.partialorder %v2799, 0.0
    %vm2802 = vcmp.gt.f32.partialorder %v2800, 0.0
    %v2803 = vmul.f32 %v2799, 0.2
    %v2804 = vmul.f32 %v2800, 0.2
    %v2805 = vsel %vm2801, %v2799, %v2803
    %v2806 = vsel %vm2802, %v2800, %v2804
    %s2807 = scalar_lea.vmem %s4, 22
    %v2808 = vld [vmem:[%s2807] ss:$8 sm:$0x3]
    %v2810 = vlaneseq
    %v2811 = vshrl.u32 %v2810, 7
    %v2812 = vsub.s32 0, %v2811
    %v2813 = vrot.slane %v2808, %v2812
    %v2814 = vlaneseq
    %v2815 = vshrl.u32 %v2814, 7
    %v2816 = vsub.s32 1, %v2815
    %v2817 = vrot.slane %v2808, %v2816
    %v2820 = vmul.f32 %v2805, %v2813
    %v2821 = vmul.f32 %v2806, %v2817
    %v2824 = vrot.slane %v2820, 4
    %v2825 = vrot.slane %v2821, 4
    %v2828 = vadd.f32 %v2793, %v2824
    %v2829 = vadd.f32 %v2794, %v2825
    %v2830 = vld [vmem:[#allocation2 + $0x30] sm:$0xc0]
    %v2831 = vld [vmem:[#allocation2 + $0x38] sm:$0xc0]
    %v2832 = vmul.f32 %v2830, %v2314
    %v2833 = vmul.f32 %v2831, %v2318
    %v2834 = vadd.f32 %v2832, %v2327
    %v2835 = vadd.f32 %v2833, %v2331
    %vm2836 = vcmp.gt.f32.partialorder %v2834, 0.0
    %vm2837 = vcmp.gt.f32.partialorder %v2835, 0.0
    %v2838 = vmul.f32 %v2834, 0.2
    %v2839 = vmul.f32 %v2835, 0.2
    %v2840 = vsel %vm2836, %v2834, %v2838
    %v2841 = vsel %vm2837, %v2835, %v2839
    %s2842 = scalar_lea.vmem %s4, 23
    %v2843 = vld [vmem:[%s2842] ss:$8 sm:$0x3]
    %v2845 = vlaneseq
    %v2846 = vshrl.u32 %v2845, 7
    %v2847 = vsub.s32 0, %v2846
    %v2848 = vrot.slane %v2843, %v2847
    %v2849 = vlaneseq
    %v2850 = vshrl.u32 %v2849, 7
    %v2851 = vsub.s32 1, %v2850
    %v2852 = vrot.slane %v2843, %v2851
    %v2855 = vmul.f32 %v2840, %v2848
    %v2856 = vmul.f32 %v2841, %v2852
    %v2859 = vrot.slane %v2855, 6
    %v2860 = vrot.slane %v2856, 6
    %v2863 = vadd.f32 %v2828, %v2859
    %v2864 = vadd.f32 %v2829, %v2860
    %vm2865 = vcmask 1041408
    %v2866 = vsel %vm2865, %v2863, 0.0
    %v2867 = vsel %vm2865, %v2864, 0.0
    %v2868 = vadd.f32 %v2866, %v2867
    %2869 = vadd.xlane.f32.xlu0 %v2868
    %v2870 = vpop.xlane.xlu0 %2869
    %v2871 = vld [vmem:[#allocation5] sm:$0x1]
    %v2873 = vlaneseq
    %v2874 = vshrl.u32 %v2873, 7
    %v2875 = vsub.s32 0, %v2874
    %v2876 = vrot.slane %v2871, %v2875
    %v2878 = vadd.f32 %v2870, %v2876
    %v2879 = vxor.u32 %v2878, 2147483648
    %v2880 = vmul.f32 %v2879, 1.442695
    %v2881 = vpow.pop %v2880
    %v2882 = vadd.f32 %v2881, 1.0
    %v2883 = vrcp.pop %v2882
    %v2884 = vmul.f32 1.0, %v2883
    %vm2885 = vcmask 1024
    %2886 = vst.msk [vmem:[%s6] sm:$0x3] %vm2885, %v2884
  $region33: #{discriminator_sn_forward.5} parent=0 // pred_fallthru
    _
  // Predicated region
  $region34: #{discriminator_sn_forward.5} parent=0 // pred_check
    _
  $region35: #{discriminator_sn_forward.5} parent=0 // pred_check_branch
    %2888 = sbr.rel (0) target = $region37
  $region36: #{discriminator_sn_forward.5} parent=0 // pred_region
    _
  $region37: #{discriminator_sn_forward.5} parent=0 // pred_fallthru
    _
  // Predicated region
  $region38: #{discriminator_sn_forward.5} parent=0 // pred_check
    _
  $region39: #{discriminator_sn_forward.5} parent=0 // pred_check_branch
    %2890 = sbr.rel (0) target = $region41
  $region40: #{discriminator_sn_forward.5} parent=0 // pred_region
    _
  $region41: #{discriminator_sn_forward.5} parent=0 // pred_fallthru
    _

</llo_original>
